<compile_context>
chip_gen: v5e
topology: v5e:2x2
jax: 0.10.0
libtpu: 0.0.40
codegen_flags: <defaults>
</compile_context>

<pallas_src>
import jax
import jax.numpy as jnp
from jax.experimental import pallas as pl
from jax.experimental.pallas import tpu as pltpu

EPS = 1e-5  # PyTorch BatchNorm1d default eps


# ---------------------------------------------------------------------------
# Kernel: three matmuls + bias + ReLU (BN already folded into the weights).
# ---------------------------------------------------------------------------
def mlp_kernel(x_ref, w1_ref, b1_ref, w2_ref, b2_ref, w3_ref, b3_ref, o_ref):
    cdt = w1_ref.dtype  # matmul input dtype (f32 or bf16); accumulation is f32

    x = x_ref[...]
    if x.dtype != cdt:
        x = x.astype(cdt)

    # fc1 (bn0 folded in) -> relu
    h = jnp.dot(x, w1_ref[...], preferred_element_type=jnp.float32) + b1_ref[0:1, :]
    h = jnp.maximum(h, 0.0).astype(cdt)

    # fc2 (bn1 folded in) -> relu        (dropout = identity at inference)
    h = jnp.dot(h, w2_ref[...], preferred_element_type=jnp.float32) + b2_ref[0:1, :]
    h = jnp.maximum(h, 0.0).astype(cdt)

    # fc3 (bn2 folded in), lane-padded output
    out = jnp.dot(h, w3_ref[...], preferred_element_type=jnp.float32) + b3_ref[0:1, :]
    o_ref[...] = out.astype(o_ref.dtype)


# ---------------------------------------------------------------------------
# One-time parameter preparation: fold BNs into Linears, pad fc3 to 128 lanes.
# ---------------------------------------------------------------------------
def prepare_params(raw, *, compute_dtype=jnp.float32):
    """Fold inference-mode BatchNorms into adjacent Linear weights.

    bn(h) = h*scale + shift with scale = gamma*rsqrt(var+eps),
    shift = beta - mean*scale, so  fc(bn(h)) = h @ (diag(scale)@W) + (shift@W + b).
    """
    def bn_scale_shift(bn):
        gamma, beta, mean, var = bn[0], bn[1], bn[2], bn[3]
        scale = gamma * jax.lax.rsqrt(var + EPS)
        shift = beta - mean * scale
        return scale, shift

    s0, t0 = bn_scale_shift(raw["bn0"])
    s1, t1 = bn_scale_shift(raw["bn1"])
    s2, t2 = bn_scale_shift(raw["bn2"])

    w1 = s0[:, None] * raw["w1"]
    b1 = raw["b1"] + t0 @ raw["w1"]
    w2 = s1[:, None] * raw["w2"]
    b2 = raw["b2"] + t1 @ raw["w2"]
    w3 = s2[:, None] * raw["w3"]
    b3 = raw["b3"] + t2 @ raw["w3"]

    # Lane-pad the classifier head so the output store is 128-lane dense.
    n_classes = w3.shape[1]
    c_pad = max(128, ((n_classes + 127) // 128) * 128)
    if c_pad != n_classes:
        w3 = jnp.pad(w3, ((0, 0), (0, c_pad - n_classes)))
        b3 = jnp.pad(b3, ((0, 0), (0, c_pad - n_classes)))

    return {
        "w1": w1.astype(compute_dtype), "b1": b1.astype(jnp.float32),
        "w2": w2.astype(compute_dtype), "b2": b2.astype(jnp.float32),
        "w3": w3.astype(compute_dtype), "b3": b3.astype(jnp.float32),
        "n_classes": n_classes,
    }


# ---------------------------------------------------------------------------
# Wrapper: batch tiling + pallas_call.
# ---------------------------------------------------------------------------
def shape_classifier_mlp(x, p, *, tb=None, vmem_limit_bytes=None):
    """Fused MLP forward. x: (B, n_features) float32. p: prepare_params(...) output."""
    B, F = x.shape
    w1, b1 = p["w1"], p["b1"]
    w2, b2 = p["w2"], p["b2"]
    w3, b3 = p["w3"], p["b3"]
    H1 = w1.shape[1]
    H2 = w2.shape[1]
    Cp = w3.shape[1]
    C = p["n_classes"]

    # Batch tile: fill the MXU M dim (>=128) while keeping >=2 grid steps for
    # v7x megacore when the batch allows it; for small batches use one block.
    if tb is None:
        tb = 128 if B >= 256 else B

    n_blocks = -(-B // tb)
    Bp = n_blocks * tb
    if Bp != B:
        x = jnp.pad(x, ((0, Bp - B), (0, 0)))

    def full(shape):  # whole (small) parameter tensor resident in VMEM
        return pl.BlockSpec(shape, lambda i: (0, 0))

    cparams = dict(dimension_semantics=("parallel",))
    if vmem_limit_bytes is not None:
        cparams["vmem_limit_bytes"] = vmem_limit_bytes

    out = pl.pallas_call(
        mlp_kernel,
        out_shape=jax.ShapeDtypeStruct((Bp, Cp), jnp.float32),
        grid=(n_blocks,),
        in_specs=[
            pl.BlockSpec((tb, F), lambda i: (i, 0)),   # x, tiled over batch
            full((F, H1)), full((1, H1)),              # fc1 (bn0 folded)
            full((H1, H2)), full((1, H2)),             # fc2 (bn1 folded)
            full((H2, Cp)), full((1, Cp)),             # fc3 (bn2 folded, padded)
        ],
        out_specs=pl.BlockSpec((tb, Cp), lambda i: (i, 0)),
        compiler_params=pltpu.CompilerParams(**cparams),
    )(x, w1, b1, w2, b2, w3, b3)

    return out[:B, :C]


# ---------------------------------------------------------------------------
# Raw (PyTorch-layout) parameter init + pure-JAX reference.
# ---------------------------------------------------------------------------
def init_params(key, n_features, hsize1, hsize2, n_classes):
    ks = jax.random.split(key, 18)

    def bn_params(kg, kb, km, kv, n):
        gamma = 1.0 + 0.1 * jax.random.normal(kg, (n,), jnp.float32)
        beta = 0.1 * jax.random.normal(kb, (n,), jnp.float32)
        mean = 0.1 * jax.random.normal(km, (n,), jnp.float32)
        var = jax.random.uniform(kv, (n,), jnp.float32, 0.5, 1.5)
        return jnp.stack([gamma, beta, mean, var], axis=0)  # (4, n)

    def linear_params(kw, kb, n_in, n_out):
        bound = 1.0 / jnp.sqrt(n_in)
        w = jax.random.uniform(kw, (n_in, n_out), jnp.float32, -bound, bound)
        b = jax.random.uniform(kb, (1, n_out), jnp.float32, -bound, bound)
        return w, b

    w1, b1 = linear_params(ks[0], ks[1], n_features, hsize1)
    w2, b2 = linear_params(ks[2], ks[3], hsize1, hsize2)
    w3, b3 = linear_params(ks[4], ks[5], hsize2, n_classes)
    return {
        "bn0": bn_params(ks[6], ks[7], ks[8], ks[9], n_features),
        "w1": w1, "b1": b1,
        "bn1": bn_params(ks[10], ks[11], ks[12], ks[13], hsize1),
        "w2": w2, "b2": b2,
        "bn2": bn_params(ks[14], ks[15], ks[16], ks[17], hsize2),
        "w3": w3, "b3": b3,
    }


def reference_forward(x, p):
    def bn(h, bnp):
        g, b, m, v = bnp[0], bnp[1], bnp[2], bnp[3]
        return (h - m) / jnp.sqrt(v + EPS) * g + b
    h = bn(x, p["bn0"])
    h = bn(jnp.maximum(h @ p["w1"] + p["b1"], 0.0), p["bn1"])
    h = bn(jnp.maximum(h @ p["w2"] + p["b2"], 0.0), p["bn2"])
    return h @ p["w3"] + p["b3"]


if __name__ == "__main__":
    # Module-default-like sizes (BPS ModelNet40 MLP): 512 features, 512/512
    # hidden, 40 classes.  B=256 gives two 128-row grid steps (both v7x TCs busy).
    B, N_FEATURES, HSIZE1, HSIZE2, N_CLASSES = 256, 512, 512, 512, 40

    key = jax.random.PRNGKey(0)
    kx, kp = jax.random.split(key)
    x = jax.random.normal(kx, (B, N_FEATURES), jnp.float32)
    raw = init_params(kp, N_FEATURES, HSIZE1, HSIZE2, N_CLASSES)
    ref = reference_forward(x, raw)

    # f32 weights (exact up to fold rounding).
    p32 = prepare_params(raw, compute_dtype=jnp.float32)
    out32 = jax.block_until_ready(shape_classifier_mlp(x, p32))
    assert out32.shape == (B, N_CLASSES)
    assert jnp.allclose(out32, ref, atol=1e-3, rtol=1e-3)

    # bf16 weights / matmul inputs (v6e/v7x MXU fast path), f32 accumulation.
    pbf = prepare_params(raw, compute_dtype=jnp.bfloat16)
    outbf = jax.block_until_ready(shape_classifier_mlp(x, pbf))
    assert outbf.shape == (B, N_CLASSES)
    assert jnp.allclose(outbf, ref, atol=0.15, rtol=0.05)

    print("KERNEL_OK")
</pallas_src>

<mosaic_0001>
module attributes {stable_mosaic.version = 11 : i64} {
  func.func @mlp_kernel(%arg0: i32, %arg1: memref<128x512xf32, #tpu.memory_space<vmem>>, %arg2: memref<512x512xf32, #tpu.memory_space<vmem>>, %arg3: memref<1x512xf32, #tpu.memory_space<vmem>>, %arg4: memref<512x512xf32, #tpu.memory_space<vmem>>, %arg5: memref<1x512xf32, #tpu.memory_space<vmem>>, %arg6: memref<512x128xf32, #tpu.memory_space<vmem>>, %arg7: memref<1x128xf32, #tpu.memory_space<vmem>>, %arg8: memref<128x128xf32, #tpu.memory_space<vmem>>) attributes {dimension_semantics = [#tpu.dimension_semantics<parallel>], iteration_bounds = array<i64: 2>, scalar_prefetch = 0 : i64, scratch_operands = 0 : i64, tpu.core_type = #tpu.core_type<tc>, window_params = [{transform_indices = @transform_0, window_bounds = array<i64: 128, 512>}, {pipeline_mode = #tpu.pipeline_mode<synchronous>, transform_indices = @transform_1, window_bounds = array<i64: 512, 512>}, {pipeline_mode = #tpu.pipeline_mode<synchronous>, transform_indices = @transform_2, window_bounds = array<i64: 1, 512>}, {pipeline_mode = #tpu.pipeline_mode<synchronous>, transform_indices = @transform_3, window_bounds = array<i64: 512, 512>}, {pipeline_mode = #tpu.pipeline_mode<synchronous>, transform_indices = @transform_4, window_bounds = array<i64: 1, 512>}, {pipeline_mode = #tpu.pipeline_mode<synchronous>, transform_indices = @transform_5, window_bounds = array<i64: 512, 128>}, {pipeline_mode = #tpu.pipeline_mode<synchronous>, transform_indices = @transform_6, window_bounds = array<i64: 1, 128>}, {transform_indices = @transform_7, window_bounds = array<i64: 128, 128>}]} {
    %c0 = arith.constant 0 : index
    %c0_0 = arith.constant 0 : index
    %0 = vector.load %arg1[%c0, %c0_0] : memref<128x512xf32, #tpu.memory_space<vmem>>, vector<128x512xf32>
    %c0_1 = arith.constant 0 : index
    %c0_2 = arith.constant 0 : index
    %1 = vector.load %arg2[%c0_1, %c0_2] : memref<512x512xf32, #tpu.memory_space<vmem>>, vector<512x512xf32>
    %cst = arith.constant dense<0.000000e+00> : vector<128x512xf32>
    %2 = tpu.matmul %0, %1, %cst {dimension_numbers = #tpu.dot_dimension_numbers<[1], [0], [0], [1], [0, 0, 1, 1], [], []>} : vector<128x512xf32>, vector<512x512xf32>, vector<128x512xf32> -> vector<128x512xf32>
    %c0_3 = arith.constant 0 : index
    %c0_4 = arith.constant 0 : index
    %3 = vector.load %arg3[%c0_3, %c0_4] : memref<1x512xf32, #tpu.memory_space<vmem>>, vector<1x512xf32>
    %4 = vector.broadcast %3 : vector<1x512xf32> to vector<128x512xf32>
    %5 = arith.addf %2, %4 : vector<128x512xf32>
    %cst_5 = arith.constant 0.000000e+00 : f32
    %6 = vector.broadcast %cst_5 : f32 to vector<128x512xf32>
    %7 = arith.maximumf %5, %6 : vector<128x512xf32>
    %c0_6 = arith.constant 0 : index
    %c0_7 = arith.constant 0 : index
    %8 = vector.load %arg4[%c0_6, %c0_7] : memref<512x512xf32, #tpu.memory_space<vmem>>, vector<512x512xf32>
    %cst_8 = arith.constant dense<0.000000e+00> : vector<128x512xf32>
    %9 = tpu.matmul %7, %8, %cst_8 {dimension_numbers = #tpu.dot_dimension_numbers<[1], [0], [0], [1], [0, 0, 1, 1], [], []>} : vector<128x512xf32>, vector<512x512xf32>, vector<128x512xf32> -> vector<128x512xf32>
    %c0_9 = arith.constant 0 : index
    %c0_10 = arith.constant 0 : index
    %10 = vector.load %arg5[%c0_9, %c0_10] : memref<1x512xf32, #tpu.memory_space<vmem>>, vector<1x512xf32>
    %11 = vector.broadcast %10 : vector<1x512xf32> to vector<128x512xf32>
    %12 = arith.addf %9, %11 : vector<128x512xf32>
    %cst_11 = arith.constant 0.000000e+00 : f32
    %13 = vector.broadcast %cst_11 : f32 to vector<128x512xf32>
    %14 = arith.maximumf %12, %13 : vector<128x512xf32>
    %c0_12 = arith.constant 0 : index
    %c0_13 = arith.constant 0 : index
    %15 = vector.load %arg6[%c0_12, %c0_13] : memref<512x128xf32, #tpu.memory_space<vmem>>, vector<512x128xf32>
    %cst_14 = arith.constant dense<0.000000e+00> : vector<128x128xf32>
    %16 = tpu.matmul %14, %15, %cst_14 {dimension_numbers = #tpu.dot_dimension_numbers<[1], [0], [0], [1], [0, 0, 1, 1], [], []>} : vector<128x512xf32>, vector<512x128xf32>, vector<128x128xf32> -> vector<128x128xf32>
    %c0_15 = arith.constant 0 : index
    %c0_16 = arith.constant 0 : index
    %17 = vector.load %arg7[%c0_15, %c0_16] : memref<1x128xf32, #tpu.memory_space<vmem>>, vector<1x128xf32>
    %18 = vector.broadcast %17 : vector<1x128xf32> to vector<128x128xf32>
    %19 = arith.addf %16, %18 : vector<128x128xf32>
    %c0_17 = arith.constant 0 : index
    %c0_18 = arith.constant 0 : index
    %20 = vector.load %arg8[%c0_17, %c0_18] : memref<128x128xf32, #tpu.memory_space<vmem>>, vector<128x128xf32>
    tpu.vector_store %arg8[%c0_17, %c0_18], %19 {strides = array<i32>} : memref<128x128xf32, #tpu.memory_space<vmem>>, vector<128x128xf32>,
    return
  }
  func.func @transform_0(%arg0: i32) -> (i32, i32) {
    %c0_i32 = arith.constant 0 : i32
    %c0_i32_0 = arith.constant 0 : i32
    return %arg0, %c0_i32 : i32, i32
  }
  func.func @transform_1(%arg0: i32) -> (i32, i32) {
    %c0_i32 = arith.constant 0 : i32
    %c0_i32_0 = arith.constant 0 : i32
    %c0_i32_1 = arith.constant 0 : i32
    return %c0_i32, %c0_i32_0 : i32, i32
  }
  func.func @transform_2(%arg0: i32) -> (i32, i32) {
    %c0_i32 = arith.constant 0 : i32
    %c0_i32_0 = arith.constant 0 : i32
    %c0_i32_1 = arith.constant 0 : i32
    return %c0_i32, %c0_i32_0 : i32, i32
  }
  func.func @transform_3(%arg0: i32) -> (i32, i32) {
    %c0_i32 = arith.constant 0 : i32
    %c0_i32_0 = arith.constant 0 : i32
    %c0_i32_1 = arith.constant 0 : i32
    return %c0_i32, %c0_i32_0 : i32, i32
  }
  func.func @transform_4(%arg0: i32) -> (i32, i32) {
    %c0_i32 = arith.constant 0 : i32
    %c0_i32_0 = arith.constant 0 : i32
    %c0_i32_1 = arith.constant 0 : i32
    return %c0_i32, %c0_i32_0 : i32, i32
  }
  func.func @transform_5(%arg0: i32) -> (i32, i32) {
    %c0_i32 = arith.constant 0 : i32
    %c0_i32_0 = arith.constant 0 : i32
    %c0_i32_1 = arith.constant 0 : i32
    return %c0_i32, %c0_i32_0 : i32, i32
  }
  func.func @transform_6(%arg0: i32) -> (i32, i32) {
    %c0_i32 = arith.constant 0 : i32
    %c0_i32_0 = arith.constant 0 : i32
    %c0_i32_1 = arith.constant 0 : i32
    return %c0_i32, %c0_i32_0 : i32, i32
  }
  func.func @transform_7(%arg0: i32) -> (i32, i32) {
    %c0_i32 = arith.constant 0 : i32
    %c0_i32_0 = arith.constant 0 : i32
    return %arg0, %c0_i32 : i32, i32
  }
}

</mosaic_0001>

<llo_original>
// kernel: tpu_custom_call.1
$region0: #{tpu_custom_call.1}
  #allocation0 [shape = 'u32[]', space=smem, size = 0x4, offset = 0x4, fixed_abs, tag = 'smem constant byte address 0x4 - core index']
  #allocation1 [shape = 'u32[72,128]{1,0:T(1,128)}', space=vmem, size = 0x9000, scoped, tag = 'internal scratch']
  %s0 = inlined_call_operand.hbm [shape: f32[256,512], index: 0, kind: input, shape index: {}]
  %s1 = inlined_call_operand.hbm [shape: f32[512,512], index: 1, kind: input, shape index: {}]
  %s2 = inlined_call_operand.hbm [shape: f32[1,512], index: 2, kind: input, shape index: {}]
  %s3 = inlined_call_operand.hbm [shape: f32[512,512], index: 3, kind: input, shape index: {}]
  %s4 = inlined_call_operand.hbm [shape: f32[1,512], index: 4, kind: input, shape index: {}]
  %s5 = inlined_call_operand.hbm [shape: f32[512,128], index: 5, kind: input, shape index: {}]
  %s6 = inlined_call_operand.vmem [shape: f32[1,128], index: 6, kind: input, shape index: {}]
  %s7 = inlined_call_operand.hbm [shape: f32[256,128], index: 7, kind: output, shape index: {}]
  %s8 = sld [smem:[#allocation0]]
  $region85: #{tpu_custom_call.1} parent=0
    _
  %s10 = ssub.s32 1, %s8
  %s11 = scalar_select 0, %s10, %s8
  $region1: #{tpu_custom_call.1} parent=0
    #allocation2 [shape = 'u8[524288]{0}', space=vmem, size = 0x80000, scoped, tag = 'input window, operand 0']
    #allocation3 [shape = 's32[2]{0}', space=sflag, size = 0x8, scoped, tag = 'scoped memory for tpu_custom_call.1']
    #allocation4 [shape = 's32[2]{0}', space=sflag, size = 0x8, scoped, tag = 'scoped memory for tpu_custom_call.1']
    #allocation5 [shape = 'u8[1048576]{0}', space=vmem, size = 0x100000, scoped, tag = 'input window, operand 1, single buffered']
    #allocation6 [shape = 's32[1]{0}', space=sflag, size = 0x4, scoped, tag = 'scoped memory for tpu_custom_call.1']
    #allocation7 [shape = 'u8[2048]{0}', space=vmem, size = 0x800, scoped, tag = 'input window, operand 2, single buffered']
    #allocation8 [shape = 'u8[1048576]{0}', space=vmem, size = 0x100000, scoped, tag = 'input window, operand 3, single buffered']
    #allocation9 [shape = 's32[1]{0}', space=sflag, size = 0x4, scoped, tag = 'scoped memory for tpu_custom_call.1']
    #allocation10 [shape = 'u8[2048]{0}', space=vmem, size = 0x800, scoped, tag = 'input window, operand 4, single buffered']
    #allocation11 [shape = 'u8[262144]{0}', space=vmem, size = 0x40000, scoped, tag = 'input window, operand 5, single buffered']
    #allocation12 [shape = 's32[1]{0}', space=sflag, size = 0x4, scoped, tag = 'scoped memory for tpu_custom_call.1']
    #allocation13 [shape = 'u8[131072]{0}', space=vmem, size = 0x20000, scoped, tag = 'output window, operand 0']
    %12 = vsyncpa [#allocation3], 0
    %s13 = scalar_lea.sflag [#allocation3], 1
    %14 = vsyncpa %s13, 0
    %15 = vsyncpa [#allocation6], 0
    %16 = vsyncpa [#allocation9], 0
    %17 = vsyncpa [#allocation12], 0
    %18 = vsyncpa [#allocation4], 0
    %s19 = scalar_lea.sflag [#allocation4], 1
    %20 = vsyncpa %s19, 0
    loop: start=0, step=1, limit=4
    $region2: #{tpu_custom_call.1} parent=1 // loop_pre_header
      _
    $region3: #{tpu_custom_call.1} parent=1 // loop_header
      %s22 = sphi 0, %s26
      %p23 = scmp.ge.s32.totalorder %s22, 4
      %s32 = sphi 0, %s34
      %s35 = sphi 0, %s32
      %s36 = sphi 0, %s35
      %s52 = sphi 0, %s36
      %s56 = sphi 0, %s56
      %s58 = sphi 0, %s56
      %s59 = sphi 0, %s58
      %s73 = sphi 0, %s59
      %s77 = sphi 0, %s77
      %s79 = sphi 0, %s77
      %s80 = sphi 0, %s79
      %s94 = sphi 0, %s80
      %s98 = sphi 0, %s98
      %s100 = sphi 0, %s98
      %s101 = sphi 0, %s100
      %s115 = sphi 0, %s101
      %s119 = sphi 0, %s119
      %s121 = sphi 0, %s119
      %s122 = sphi 0, %s121
      %s136 = sphi 0, %s122
      %s140 = sphi 0, %s140
      %s142 = sphi 0, %s140
      %s143 = sphi 0, %s142
      %s157 = sphi 0, %s143
      %s161 = sphi 0, %s161
      %s163 = sphi 0, %s161
      %s164 = sphi 0, %s163
      %s178 = sphi 0, %s164
      %s184 = sphi 0, %s186
      %s187 = sphi 0, %s184
      %s188 = sphi 0, %s187
      %s204 = sphi 0, %s188
    $region4: #{tpu_custom_call.1} parent=1 // loop_header_branch
      %25 = sbr.rel (%p23) target = $region8
    $region5: #{tpu_custom_call.1} parent=1 // loop_body
      %s27 = ssub.s32 %s22, 1
      %s28 = ssub.s32 %s22, 2
      %s29 = sadd.s32 %s22, 1
      %s30 = ssub.s32 %s22, %s29
      %p31 = scmp.eq.s32.totalorder %s30, 0
      %s33 = sadd.s32 %s32, 1
      %s34 = scalar_select %p31, %s32, %s33
      %p37 = pneg %p31
      %p38 = scmp.eq.s32.totalorder %s22, 1
      %p39 = por %p37, %p38
      %p40 = scmp.ne.s32.totalorder %s32, %s35
      %p41 = scmp.eq.s32.totalorder %s22, 0
      %p42 = por %p40, %p41
      %p43 = scmp.ne.s32.totalorder %s32, %s35
      %p44 = scmp.eq.s32.totalorder %s27, 1
      %p45 = por %p43, %p44
      %p46 = scmp.ne.s32.totalorder %s35, %s36
      %p47 = scmp.eq.s32.totalorder %s27, 0
      %p48 = por %p46, %p47
      %p49 = scmp.ne.s32.totalorder %s35, %s36
      %p50 = scmp.eq.s32.totalorder %s28, 1
      %p51 = por %p49, %p50
      %p53 = scmp.ne.s32.totalorder %s36, %s52
      %p54 = scmp.eq.s32.totalorder %s28, 0
      %p55 = por %p53, %p54
      %s57 = sadd.s32 %s56, 1
      %p60 = scmp.eq.s32.totalorder %s22, 1
      %p61 = scmp.ne.s32.totalorder %s56, %s58
      %p62 = scmp.eq.s32.totalorder %s22, 0
      %p63 = por %p61, %p62
      %p64 = scmp.ne.s32.totalorder %s56, %s58
      %p65 = scmp.eq.s32.totalorder %s27, 1
      %p66 = por %p64, %p65
      %p67 = scmp.ne.s32.totalorder %s58, %s59
      %p68 = scmp.eq.s32.totalorder %s27, 0
      %p69 = por %p67, %p68
      %p70 = scmp.ne.s32.totalorder %s58, %s59
      %p71 = scmp.eq.s32.totalorder %s28, 1
      %p72 = por %p70, %p71
      %p74 = scmp.ne.s32.totalorder %s59, %s73
      %p75 = scmp.eq.s32.totalorder %s28, 0
      %p76 = por %p74, %p75
      %s78 = sadd.s32 %s77, 1
      %p81 = scmp.eq.s32.totalorder %s22, 1
      %p82 = scmp.ne.s32.totalorder %s77, %s79
      %p83 = scmp.eq.s32.totalorder %s22, 0
      %p84 = por %p82, %p83
      %p85 = scmp.ne.s32.totalorder %s77, %s79
      %p86 = scmp.eq.s32.totalorder %s27, 1
      %p87 = por %p85, %p86
      %p88 = scmp.ne.s32.totalorder %s79, %s80
      %p89 = scmp.eq.s32.totalorder %s27, 0
      %p90 = por %p88, %p89
      %p91 = scmp.ne.s32.totalorder %s79, %s80
      %p92 = scmp.eq.s32.totalorder %s28, 1
      %p93 = por %p91, %p92
      %p95 = scmp.ne.s32.totalorder %s80, %s94
      %p96 = scmp.eq.s32.totalorder %s28, 0
      %p97 = por %p95, %p96
      %s99 = sadd.s32 %s98, 1
      %p102 = scmp.eq.s32.totalorder %s22, 1
      %p103 = scmp.ne.s32.totalorder %s98, %s100
      %p104 = scmp.eq.s32.totalorder %s22, 0
      %p105 = por %p103, %p104
      %p106 = scmp.ne.s32.totalorder %s98, %s100
      %p107 = scmp.eq.s32.totalorder %s27, 1
      %p108 = por %p106, %p107
      %p109 = scmp.ne.s32.totalorder %s100, %s101
      %p110 = scmp.eq.s32.totalorder %s27, 0
      %p111 = por %p109, %p110
      %p112 = scmp.ne.s32.totalorder %s100, %s101
      %p113 = scmp.eq.s32.totalorder %s28, 1
      %p114 = por %p112, %p113
      %p116 = scmp.ne.s32.totalorder %s101, %s115
      %p117 = scmp.eq.s32.totalorder %s28, 0
      %p118 = por %p116, %p117
      %s120 = sadd.s32 %s119, 1
      %p123 = scmp.eq.s32.totalorder %s22, 1
      %p124 = scmp.ne.s32.totalorder %s119, %s121
      %p125 = scmp.eq.s32.totalorder %s22, 0
      %p126 = por %p124, %p125
      %p127 = scmp.ne.s32.totalorder %s119, %s121
      %p128 = scmp.eq.s32.totalorder %s27, 1
      %p129 = por %p127, %p128
      %p130 = scmp.ne.s32.totalorder %s121, %s122
      %p131 = scmp.eq.s32.totalorder %s27, 0
      %p132 = por %p130, %p131
      %p133 = scmp.ne.s32.totalorder %s121, %s122
      %p134 = scmp.eq.s32.totalorder %s28, 1
      %p135 = por %p133, %p134
      %p137 = scmp.ne.s32.totalorder %s122, %s136
      %p138 = scmp.eq.s32.totalorder %s28, 0
      %p139 = por %p137, %p138
      %s141 = sadd.s32 %s140, 1
      %p144 = scmp.eq.s32.totalorder %s22, 1
      %p145 = scmp.ne.s32.totalorder %s140, %s142
      %p146 = scmp.eq.s32.totalorder %s22, 0
      %p147 = por %p145, %p146
      %p148 = scmp.ne.s32.totalorder %s140, %s142
      %p149 = scmp.eq.s32.totalorder %s27, 1
      %p150 = por %p148, %p149
      %p151 = scmp.ne.s32.totalorder %s142, %s143
      %p152 = scmp.eq.s32.totalorder %s27, 0
      %p153 = por %p151, %p152
      %p154 = scmp.ne.s32.totalorder %s142, %s143
      %p155 = scmp.eq.s32.totalorder %s28, 1
      %p156 = por %p154, %p155
      %p158 = scmp.ne.s32.totalorder %s143, %s157
      %p159 = scmp.eq.s32.totalorder %s28, 0
      %p160 = por %p158, %p159
      %s162 = sadd.s32 %s161, 1
      %p165 = scmp.eq.s32.totalorder %s22, 1
      %p166 = scmp.ne.s32.totalorder %s161, %s163
      %p167 = scmp.eq.s32.totalorder %s22, 0
      %p168 = por %p166, %p167
      %p169 = scmp.ne.s32.totalorder %s161, %s163
      %p170 = scmp.eq.s32.totalorder %s27, 1
      %p171 = por %p169, %p170
      %p172 = scmp.ne.s32.totalorder %s163, %s164
      %p173 = scmp.eq.s32.totalorder %s27, 0
      %p174 = por %p172, %p173
      %p175 = scmp.ne.s32.totalorder %s163, %s164
      %p176 = scmp.eq.s32.totalorder %s28, 1
      %p177 = por %p175, %p176
      %p179 = scmp.ne.s32.totalorder %s164, %s178
      %p180 = scmp.eq.s32.totalorder %s28, 0
      %p181 = por %p179, %p180
      %s182 = ssub.s32 %s22, %s29
      %p183 = scmp.eq.s32.totalorder %s182, 0
      %s185 = sadd.s32 %s184, 1
      %s186 = scalar_select %p183, %s184, %s185
      %p189 = pneg %p183
      %p190 = scmp.eq.s32.totalorder %s22, 1
      %p191 = por %p189, %p190
      %p192 = scmp.ne.s32.totalorder %s184, %s187
      %p193 = scmp.eq.s32.totalorder %s22, 0
      %p194 = por %p192, %p193
      %p195 = scmp.ne.s32.totalorder %s184, %s187
      %p196 = scmp.eq.s32.totalorder %s27, 1
      %p197 = por %p195, %p196
      %p198 = scmp.ne.s32.totalorder %s187, %s188
      %p199 = scmp.eq.s32.totalorder %s27, 0
      %p200 = por %p198, %p199
      %p201 = scmp.ne.s32.totalorder %s187, %s188
      %p202 = scmp.eq.s32.totalorder %s28, 1
      %p203 = por %p201, %p202
      %p205 = scmp.ne.s32.totalorder %s188, %s204
      %p206 = scmp.eq.s32.totalorder %s28, 0
      %p207 = por %p205, %p206
      %p208 = scmp.le.s32.totalorder 1, %s22
      %p209 = scmp.lt.s32.totalorder %s22, 3
      %p210 = pnand %p208, %p209
      %p211 = pneg %p210
      // Predicated region
      $region9: #{tpu_custom_call.1} parent=5 // pred_check
        _
      $region10: #{tpu_custom_call.1} parent=5 // pred_check_branch
        %213 = sbr.rel (%p210) target = $region12
      $region11: #{tpu_custom_call.1} parent=5 // pred_region
        %s214 = ssub.s32 %s22, 1
        // Predicated region
        $region13: #{tpu_custom_call.1} parent=11 // pred_check
          %p215 = pneg %p69
        $region14: #{tpu_custom_call.1} parent=11 // pred_check_branch
          %217 = sbr.rel (%p215) target = $region16
        $region15: #{tpu_custom_call.1} parent=11 // pred_region
          %219 = vsyncadd [#allocation6], 0
          %s220 = sshll.u32 %s1, 4
          %s221 = int_to_ptr.hbm [resolvable:$true] %s220
          %s222 = sshll.u32 [#allocation5], 4
          %s223 = int_to_ptr.vmem [resolvable:$true] %s222
          %228 = dma.hbm_to_vmem [thread:$0]  %s221, 32768, %s223, [#allocation6], 512, 512, 32
        $region16: #{tpu_custom_call.1} parent=11 // pred_fallthru
          _
        // Predicated region
        $region17: #{tpu_custom_call.1} parent=11 // pred_check
          %p229 = pneg %p90
        $region18: #{tpu_custom_call.1} parent=11 // pred_check_branch
          %231 = sbr.rel (%p229) target = $region20
        $region19: #{tpu_custom_call.1} parent=11 // pred_region
          %233 = vsyncadd [#allocation6], 0
          %s235 = sshll.u32 %s2, 4
          %s236 = int_to_ptr.hbm [resolvable:$true] %s235
          %s237 = sshll.u32 [#allocation7], 4
          %s238 = int_to_ptr.vmem [resolvable:$true] %s237
          %240 = dma.hbm_to_vmem [thread:$0]  %s236, 64, %s238, [#allocation6]
        $region20: #{tpu_custom_call.1} parent=11 // pred_fallthru
          _
        // Predicated region
        $region21: #{tpu_custom_call.1} parent=11 // pred_check
          %p241 = pneg %p111
        $region22: #{tpu_custom_call.1} parent=11 // pred_check_branch
          %243 = sbr.rel (%p241) target = $region24
        $region23: #{tpu_custom_call.1} parent=11 // pred_region
          %245 = vsyncadd [#allocation9], 0
          %s246 = sshll.u32 %s3, 4
          %s247 = int_to_ptr.hbm [resolvable:$true] %s246
          %s248 = sshll.u32 [#allocation8], 4
          %s249 = int_to_ptr.vmem [resolvable:$true] %s248
          %254 = dma.hbm_to_vmem [thread:$0]  %s247, 32768, %s249, [#allocation9], 512, 512, 32
        $region24: #{tpu_custom_call.1} parent=11 // pred_fallthru
          _
        // Predicated region
        $region25: #{tpu_custom_call.1} parent=11 // pred_check
          %p255 = pneg %p132
        $region26: #{tpu_custom_call.1} parent=11 // pred_check_branch
          %257 = sbr.rel (%p255) target = $region28
        $region27: #{tpu_custom_call.1} parent=11 // pred_region
          %259 = vsyncadd [#allocation9], 0
          %s261 = sshll.u32 %s4, 4
          %s262 = int_to_ptr.hbm [resolvable:$true] %s261
          %s263 = sshll.u32 [#allocation10], 4
          %s264 = int_to_ptr.vmem [resolvable:$true] %s263
          %266 = dma.hbm_to_vmem [thread:$0]  %s262, 64, %s264, [#allocation9]
        $region28: #{tpu_custom_call.1} parent=11 // pred_fallthru
          _
        // Predicated region
        $region29: #{tpu_custom_call.1} parent=11 // pred_check
          %p267 = pneg %p153
        $region30: #{tpu_custom_call.1} parent=11 // pred_check_branch
          %269 = sbr.rel (%p267) target = $region32
        $region31: #{tpu_custom_call.1} parent=11 // pred_region
          %271 = vsyncadd [#allocation12], 0
          %s272 = sshll.u32 %s5, 4
          %s273 = int_to_ptr.hbm [resolvable:$true] %s272
          %s274 = sshll.u32 [#allocation11], 4
          %s275 = int_to_ptr.vmem [resolvable:$true] %s274
          %280 = dma.hbm_to_vmem [thread:$0]  %s273, 8192, %s275, [#allocation12], 128, 128, 8
        $region32: #{tpu_custom_call.1} parent=11 // pred_fallthru
          _
        // Predicated region
        $region33: #{tpu_custom_call.1} parent=11 // pred_check
          %p281 = pneg %p174
        $region34: #{tpu_custom_call.1} parent=11 // pred_check_branch
          %283 = sbr.rel (%p281) target = $region36
        $region35: #{tpu_custom_call.1} parent=11 // pred_region
          _
        $region36: #{tpu_custom_call.1} parent=11 // pred_fallthru
          _
      $region12: #{tpu_custom_call.1} parent=5 // pred_fallthru
        _
      %p284 = scmp.lt.s32.totalorder %s22, 2
      // Predicated region
      $region37: #{tpu_custom_call.1} parent=5 // pred_check
        %p285 = pneg %p284
      $region38: #{tpu_custom_call.1} parent=5 // pred_check_branch
        %287 = sbr.rel (%p285) target = $region40
      $region39: #{tpu_custom_call.1} parent=5 // pred_region
        // Predicated region
        $region41: #{tpu_custom_call.1} parent=39 // pred_check
          %p288 = pneg %p42
        $region42: #{tpu_custom_call.1} parent=39 // pred_check_branch
          %290 = sbr.rel (%p288) target = $region44
        $region43: #{tpu_custom_call.1} parent=39 // pred_region
          %s291 = sand.u32 %s32, 1
          %s292 = scalar_lea.sflag [#allocation3], %s291
          %s293 = sand.u32 %s32, 1
          %s294 = smul.addr %s293, 512
          %s295 = scalar_lea.vmem [#allocation2], %s294
          %s296 = smul.u32 16, %s22
          %298 = vsyncadd %s292, 0
          %s299 = smul.addr %s296, 4
          %s300 = smul.addr %s299, 8
          %s301 = scalar_lea.hbm %s0, %s300
          %s302 = sshll.u32 %s301, 4
          %s303 = int_to_ptr.hbm [resolvable:$true] %s302
          %s304 = sshll.u32 %s295, 4
          %s305 = int_to_ptr.vmem [resolvable:$true] %s304
          %310 = dma.hbm_to_vmem [thread:$0]  %s303, 8192, %s305, %s292, 512, 512, 32
        $region44: #{tpu_custom_call.1} parent=39 // pred_fallthru
          _
      $region40: #{tpu_custom_call.1} parent=5 // pred_fallthru
        _
      %p311 = scmp.le.s32.totalorder 1, %s22
      %p312 = scmp.lt.s32.totalorder %s22, 3
      %p313 = pnand %p311, %p312
      %p314 = pneg %p313
      // Predicated region
      $region45: #{tpu_custom_call.1} parent=5 // pred_check
        _
      $region46: #{tpu_custom_call.1} parent=5 // pred_check_branch
        %316 = sbr.rel (%p313) target = $region48
      $region47: #{tpu_custom_call.1} parent=5 // pred_region
        %s317 = ssub.s32 %s22, 1
        %s318 = sand.u32 %s35, 1
        %s319 = scalar_lea.sflag [#allocation3], %s318
        %s320 = sand.u32 %s35, 1
        %s321 = smul.addr %s320, 512
        %s322 = scalar_lea.vmem [#allocation2], %s321
        // Predicated region
        $region49: #{tpu_custom_call.1} parent=47 // pred_check
          %p323 = pneg %p48
        $region50: #{tpu_custom_call.1} parent=47 // pred_check_branch
          %325 = sbr.rel (%p323) target = $region52
        $region51: #{tpu_custom_call.1} parent=47 // pred_region
          %327 = dma.done %s319, 8192
        $region52: #{tpu_custom_call.1} parent=47 // pred_fallthru
          _
        // Predicated region
        $region53: #{tpu_custom_call.1} parent=47 // pred_check
          %p328 = pneg %p69
        $region54: #{tpu_custom_call.1} parent=47 // pred_check_branch
          %330 = sbr.rel (%p328) target = $region56
        $region55: #{tpu_custom_call.1} parent=47 // pred_region
          %332 = dma.done [#allocation6], 32768
        $region56: #{tpu_custom_call.1} parent=47 // pred_fallthru
          _
        // Predicated region
        $region57: #{tpu_custom_call.1} parent=47 // pred_check
          %p333 = pneg %p90
        $region58: #{tpu_custom_call.1} parent=47 // pred_check_branch
          %335 = sbr.rel (%p333) target = $region60
        $region59: #{tpu_custom_call.1} parent=47 // pred_region
          %337 = dma.done [#allocation6], 64
        $region60: #{tpu_custom_call.1} parent=47 // pred_fallthru
          _
        // Predicated region
        $region61: #{tpu_custom_call.1} parent=47 // pred_check
          %p338 = pneg %p111
        $region62: #{tpu_custom_call.1} parent=47 // pred_check_branch
          %340 = sbr.rel (%p338) target = $region64
        $region63: #{tpu_custom_call.1} parent=47 // pred_region
          %342 = dma.done [#allocation9], 32768
        $region64: #{tpu_custom_call.1} parent=47 // pred_fallthru
          _
        // Predicated region
        $region65: #{tpu_custom_call.1} parent=47 // pred_check
          %p343 = pneg %p132
        $region66: #{tpu_custom_call.1} parent=47 // pred_check_branch
          %345 = sbr.rel (%p343) target = $region68
        $region67: #{tpu_custom_call.1} parent=47 // pred_region
          %347 = dma.done [#allocation9], 64
        $region68: #{tpu_custom_call.1} parent=47 // pred_fallthru
          _
        // Predicated region
        $region69: #{tpu_custom_call.1} parent=47 // pred_check
          %p348 = pneg %p153
        $region70: #{tpu_custom_call.1} parent=47 // pred_check_branch
          %350 = sbr.rel (%p348) target = $region72
        $region71: #{tpu_custom_call.1} parent=47 // pred_region
          %352 = dma.done [#allocation12], 8192
        $region72: #{tpu_custom_call.1} parent=47 // pred_fallthru
          _
        %s353 = sand.u32 %s35, 1
        %s354 = scalar_lea.sflag [#allocation3], %s353
        %s355 = sand.u32 %s35, 1
        %s356 = smul.addr %s355, 512
        %s357 = scalar_lea.vmem [#allocation2], %s356
        %p358 = pneg %p48
        %p359 = pneg %p45
        %p360 = pneg %p69
        %p361 = pneg %p66
        %p362 = pneg %p90
        %p363 = pneg %p87
        %p364 = pneg %p111
        %p365 = pneg %p108
        %p366 = pneg %p132
        %p367 = pneg %p129
        %p368 = pneg %p153
        %p369 = pneg %p150
        %p370 = pneg %p174
        %p371 = pneg %p171
        %p372 = pneg %p200
        %p373 = pneg %p197
        %s374 = sand.u32 %s187, 1
        %s375 = scalar_lea.sflag [#allocation4], %s374
        %s376 = sand.u32 %s187, 1
        %s377 = smul.addr %s376, 128
        %s378 = scalar_lea.vmem [#allocation13], %s377
        %s379 = smul.u32 16, %s27
        %s380 = smul.u32 16, %s27
        %v381 = vld [vmem:[%s322] sm:$0xff]
        %v382 = vld [vmem:[%s322 + $0x8] sm:$0xff]
        %v383 = vld [vmem:[%s322 + $0x10] sm:$0xff]
        %v384 = vld [vmem:[%s322 + $0x18] sm:$0xff]
        %v385 = vld [vmem:[%s322 + $0x20] sm:$0xff]
        %v386 = vld [vmem:[%s322 + $0x28] sm:$0xff]
        %v387 = vld [vmem:[%s322 + $0x30] sm:$0xff]
        %v388 = vld [vmem:[%s322 + $0x38] sm:$0xff]
        %v389 = vld [vmem:[%s322 + $0x40] sm:$0xff]
        %v390 = vld [vmem:[%s322 + $0x48] sm:$0xff]
        %v391 = vld [vmem:[%s322 + $0x50] sm:$0xff]
        %v392 = vld [vmem:[%s322 + $0x58] sm:$0xff]
        %v393 = vld [vmem:[%s322 + $0x60] sm:$0xff]
        %v394 = vld [vmem:[%s322 + $0x68] sm:$0xff]
        %v395 = vld [vmem:[%s322 + $0x70] sm:$0xff]
        %v396 = vld [vmem:[%s322 + $0x78] sm:$0xff]
        %v397 = vld [vmem:[%s322 + $0x80] sm:$0xff]
        %v398 = vld [vmem:[%s322 + $0x88] sm:$0xff]
        %v399 = vld [vmem:[%s322 + $0x90] sm:$0xff]
        %v400 = vld [vmem:[%s322 + $0x98] sm:$0xff]
        %v401 = vld [vmem:[%s322 + $0xa0] sm:$0xff]
        %v402 = vld [vmem:[%s322 + $0xa8] sm:$0xff]
        %v403 = vld [vmem:[%s322 + $0xb0] sm:$0xff]
        %v404 = vld [vmem:[%s322 + $0xb8] sm:$0xff]
        %v405 = vld [vmem:[%s322 + $0xc0] sm:$0xff]
        %v406 = vld [vmem:[%s322 + $0xc8] sm:$0xff]
        %v407 = vld [vmem:[%s322 + $0xd0] sm:$0xff]
        %v408 = vld [vmem:[%s322 + $0xd8] sm:$0xff]
        %v409 = vld [vmem:[%s322 + $0xe0] sm:$0xff]
        %v410 = vld [vmem:[%s322 + $0xe8] sm:$0xff]
        %v411 = vld [vmem:[%s322 + $0xf0] sm:$0xff]
        %v412 = vld [vmem:[%s322 + $0xf8] sm:$0xff]
        %v413 = vld [vmem:[%s322 + $0x100] sm:$0xff]
        %v414 = vld [vmem:[%s322 + $0x108] sm:$0xff]
        %v415 = vld [vmem:[%s322 + $0x110] sm:$0xff]
        %v416 = vld [vmem:[%s322 + $0x118] sm:$0xff]
        %v417 = vld [vmem:[%s322 + $0x120] sm:$0xff]
        %v418 = vld [vmem:[%s322 + $0x128] sm:$0xff]
        %v419 = vld [vmem:[%s322 + $0x130] sm:$0xff]
        %v420 = vld [vmem:[%s322 + $0x138] sm:$0xff]
        %v421 = vld [vmem:[%s322 + $0x140] sm:$0xff]
        %v422 = vld [vmem:[%s322 + $0x148] sm:$0xff]
        %v423 = vld [vmem:[%s322 + $0x150] sm:$0xff]
        %v424 = vld [vmem:[%s322 + $0x158] sm:$0xff]
        %v425 = vld [vmem:[%s322 + $0x160] sm:$0xff]
        %v426 = vld [vmem:[%s322 + $0x168] sm:$0xff]
        %v427 = vld [vmem:[%s322 + $0x170] sm:$0xff]
        %v428 = vld [vmem:[%s322 + $0x178] sm:$0xff]
        %v429 = vld [vmem:[%s322 + $0x180] sm:$0xff]
        %v430 = vld [vmem:[%s322 + $0x188] sm:$0xff]
        %v431 = vld [vmem:[%s322 + $0x190] sm:$0xff]
        %v432 = vld [vmem:[%s322 + $0x198] sm:$0xff]
        %v433 = vld [vmem:[%s322 + $0x1a0] sm:$0xff]
        %v434 = vld [vmem:[%s322 + $0x1a8] sm:$0xff]
        %v435 = vld [vmem:[%s322 + $0x1b0] sm:$0xff]
        %v436 = vld [vmem:[%s322 + $0x1b8] sm:$0xff]
        %v437 = vld [vmem:[%s322 + $0x1c0] sm:$0xff]
        %v438 = vld [vmem:[%s322 + $0x1c8] sm:$0xff]
        %v439 = vld [vmem:[%s322 + $0x1d0] sm:$0xff]
        %v440 = vld [vmem:[%s322 + $0x1d8] sm:$0xff]
        %v441 = vld [vmem:[%s322 + $0x1e0] sm:$0xff]
        %v442 = vld [vmem:[%s322 + $0x1e8] sm:$0xff]
        %v443 = vld [vmem:[%s322 + $0x1f0] sm:$0xff]
        %v444 = vld [vmem:[%s322 + $0x1f8] sm:$0xff]
        %v445 = vld [vmem:[#allocation5] sm:$0xff]
        %v446 = vld [vmem:[#allocation5 + $0x8] sm:$0xff]
        %v447 = vld [vmem:[#allocation5 + $0x10] sm:$0xff]
        %v448 = vld [vmem:[#allocation5 + $0x18] sm:$0xff]
        %v449 = vld [vmem:[#allocation5 + $0x20] sm:$0xff]
        %v450 = vld [vmem:[#allocation5 + $0x28] sm:$0xff]
        %v451 = vld [vmem:[#allocation5 + $0x30] sm:$0xff]
        %v452 = vld [vmem:[#allocation5 + $0x38] sm:$0xff]
        %v453 = vld [vmem:[#allocation5 + $0x40] sm:$0xff]
        %v454 = vld [vmem:[#allocation5 + $0x48] sm:$0xff]
        %v455 = vld [vmem:[#allocation5 + $0x50] sm:$0xff]
        %v456 = vld [vmem:[#allocation5 + $0x58] sm:$0xff]
        %v457 = vld [vmem:[#allocation5 + $0x60] sm:$0xff]
        %v458 = vld [vmem:[#allocation5 + $0x68] sm:$0xff]
        %v459 = vld [vmem:[#allocation5 + $0x70] sm:$0xff]
        %v460 = vld [vmem:[#allocation5 + $0x78] sm:$0xff]
        %v461 = vld [vmem:[#allocation5 + $0x80] sm:$0xff]
        %v462 = vld [vmem:[#allocation5 + $0x88] sm:$0xff]
        %v463 = vld [vmem:[#allocation5 + $0x90] sm:$0xff]
        %v464 = vld [vmem:[#allocation5 + $0x98] sm:$0xff]
        %v465 = vld [vmem:[#allocation5 + $0xa0] sm:$0xff]
        %v466 = vld [vmem:[#allocation5 + $0xa8] sm:$0xff]
        %v467 = vld [vmem:[#allocation5 + $0xb0] sm:$0xff]
        %v468 = vld [vmem:[#allocation5 + $0xb8] sm:$0xff]
        %v469 = vld [vmem:[#allocation5 + $0xc0] sm:$0xff]
        %v470 = vld [vmem:[#allocation5 + $0xc8] sm:$0xff]
        %v471 = vld [vmem:[#allocation5 + $0xd0] sm:$0xff]
        %v472 = vld [vmem:[#allocation5 + $0xd8] sm:$0xff]
        %v473 = vld [vmem:[#allocation5 + $0xe0] sm:$0xff]
        %v474 = vld [vmem:[#allocation5 + $0xe8] sm:$0xff]
        %v475 = vld [vmem:[#allocation5 + $0xf0] sm:$0xff]
        %v476 = vld [vmem:[#allocation5 + $0xf8] sm:$0xff]
        %v477 = vld [vmem:[#allocation5 + $0x100] sm:$0xff]
        %v478 = vld [vmem:[#allocation5 + $0x108] sm:$0xff]
        %v479 = vld [vmem:[#allocation5 + $0x110] sm:$0xff]
        %v480 = vld [vmem:[#allocation5 + $0x118] sm:$0xff]
        %v481 = vld [vmem:[#allocation5 + $0x120] sm:$0xff]
        %v482 = vld [vmem:[#allocation5 + $0x128] sm:$0xff]
        %v483 = vld [vmem:[#allocation5 + $0x130] sm:$0xff]
        %v484 = vld [vmem:[#allocation5 + $0x138] sm:$0xff]
        %v485 = vld [vmem:[#allocation5 + $0x140] sm:$0xff]
        %v486 = vld [vmem:[#allocation5 + $0x148] sm:$0xff]
        %v487 = vld [vmem:[#allocation5 + $0x150] sm:$0xff]
        %v488 = vld [vmem:[#allocation5 + $0x158] sm:$0xff]
        %v489 = vld [vmem:[#allocation5 + $0x160] sm:$0xff]
        %v490 = vld [vmem:[#allocation5 + $0x168] sm:$0xff]
        %v491 = vld [vmem:[#allocation5 + $0x170] sm:$0xff]
        %v492 = vld [vmem:[#allocation5 + $0x178] sm:$0xff]
        %v493 = vld [vmem:[#allocation5 + $0x180] sm:$0xff]
        %v494 = vld [vmem:[#allocation5 + $0x188] sm:$0xff]
        %v495 = vld [vmem:[#allocation5 + $0x190] sm:$0xff]
        %v496 = vld [vmem:[#allocation5 + $0x198] sm:$0xff]
        %v497 = vld [vmem:[#allocation5 + $0x1a0] sm:$0xff]
        %v498 = vld [vmem:[#allocation5 + $0x1a8] sm:$0xff]
        %v499 = vld [vmem:[#allocation5 + $0x1b0] sm:$0xff]
        %v500 = vld [vmem:[#allocation5 + $0x1b8] sm:$0xff]
        %v501 = vld [vmem:[#allocation5 + $0x1c0] sm:$0xff]
        %v502 = vld [vmem:[#allocation5 + $0x1c8] sm:$0xff]
        %v503 = vld [vmem:[#allocation5 + $0x1d0] sm:$0xff]
        %v504 = vld [vmem:[#allocation5 + $0x1d8] sm:$0xff]
        %v505 = vld [vmem:[#allocation5 + $0x1e0] sm:$0xff]
        %v506 = vld [vmem:[#allocation5 + $0x1e8] sm:$0xff]
        %v507 = vld [vmem:[#allocation5 + $0x1f0] sm:$0xff]
        %v508 = vld [vmem:[#allocation5 + $0x1f8] sm:$0xff]
        %v509 = vld [vmem:[#allocation5 + $0x200] sm:$0xff]
        %v510 = vld [vmem:[#allocation5 + $0x208] sm:$0xff]
        %v511 = vld [vmem:[#allocation5 + $0x210] sm:$0xff]
        %v512 = vld [vmem:[#allocation5 + $0x218] sm:$0xff]
        %v513 = vld [vmem:[#allocation5 + $0x220] sm:$0xff]
        %v514 = vld [vmem:[#allocation5 + $0x228] sm:$0xff]
        %v515 = vld [vmem:[#allocation5 + $0x230] sm:$0xff]
        %v516 = vld [vmem:[#allocation5 + $0x238] sm:$0xff]
        %v517 = vld [vmem:[#allocation5 + $0x240] sm:$0xff]
        %v518 = vld [vmem:[#allocation5 + $0x248] sm:$0xff]
        %v519 = vld [vmem:[#allocation5 + $0x250] sm:$0xff]
        %v520 = vld [vmem:[#allocation5 + $0x258] sm:$0xff]
        %v521 = vld [vmem:[#allocation5 + $0x260] sm:$0xff]
        %v522 = vld [vmem:[#allocation5 + $0x268] sm:$0xff]
        %v523 = vld [vmem:[#allocation5 + $0x270] sm:$0xff]
        %v524 = vld [vmem:[#allocation5 + $0x278] sm:$0xff]
        %v525 = vld [vmem:[#allocation5 + $0x280] sm:$0xff]
        %v526 = vld [vmem:[#allocation5 + $0x288] sm:$0xff]
        %v527 = vld [vmem:[#allocation5 + $0x290] sm:$0xff]
        %v528 = vld [vmem:[#allocation5 + $0x298] sm:$0xff]
        %v529 = vld [vmem:[#allocation5 + $0x2a0] sm:$0xff]
        %v530 = vld [vmem:[#allocation5 + $0x2a8] sm:$0xff]
        %v531 = vld [vmem:[#allocation5 + $0x2b0] sm:$0xff]
        %v532 = vld [vmem:[#allocation5 + $0x2b8] sm:$0xff]
        %v533 = vld [vmem:[#allocation5 + $0x2c0] sm:$0xff]
        %v534 = vld [vmem:[#allocation5 + $0x2c8] sm:$0xff]
        %v535 = vld [vmem:[#allocation5 + $0x2d0] sm:$0xff]
        %v536 = vld [vmem:[#allocation5 + $0x2d8] sm:$0xff]
        %v537 = vld [vmem:[#allocation5 + $0x2e0] sm:$0xff]
        %v538 = vld [vmem:[#allocation5 + $0x2e8] sm:$0xff]
        %v539 = vld [vmem:[#allocation5 + $0x2f0] sm:$0xff]
        %v540 = vld [vmem:[#allocation5 + $0x2f8] sm:$0xff]
        %v541 = vld [vmem:[#allocation5 + $0x300] sm:$0xff]
        %v542 = vld [vmem:[#allocation5 + $0x308] sm:$0xff]
        %v543 = vld [vmem:[#allocation5 + $0x310] sm:$0xff]
        %v544 = vld [vmem:[#allocation5 + $0x318] sm:$0xff]
        %v545 = vld [vmem:[#allocation5 + $0x320] sm:$0xff]
        %v546 = vld [vmem:[#allocation5 + $0x328] sm:$0xff]
        %v547 = vld [vmem:[#allocation5 + $0x330] sm:$0xff]
        %v548 = vld [vmem:[#allocation5 + $0x338] sm:$0xff]
        %v549 = vld [vmem:[#allocation5 + $0x340] sm:$0xff]
        %v550 = vld [vmem:[#allocation5 + $0x348] sm:$0xff]
        %v551 = vld [vmem:[#allocation5 + $0x350] sm:$0xff]
        %v552 = vld [vmem:[#allocation5 + $0x358] sm:$0xff]
        %v553 = vld [vmem:[#allocation5 + $0x360] sm:$0xff]
        %v554 = vld [vmem:[#allocation5 + $0x368] sm:$0xff]
        %v555 = vld [vmem:[#allocation5 + $0x370] sm:$0xff]
        %v556 = vld [vmem:[#allocation5 + $0x378] sm:$0xff]
        %v557 = vld [vmem:[#allocation5 + $0x380] sm:$0xff]
        %v558 = vld [vmem:[#allocation5 + $0x388] sm:$0xff]
        %v559 = vld [vmem:[#allocation5 + $0x390] sm:$0xff]
        %v560 = vld [vmem:[#allocation5 + $0x398] sm:$0xff]
        %v561 = vld [vmem:[#allocation5 + $0x3a0] sm:$0xff]
        %v562 = vld [vmem:[#allocation5 + $0x3a8] sm:$0xff]
        %v563 = vld [vmem:[#allocation5 + $0x3b0] sm:$0xff]
        %v564 = vld [vmem:[#allocation5 + $0x3b8] sm:$0xff]
        %v565 = vld [vmem:[#allocation5 + $0x3c0] sm:$0xff]
        %v566 = vld [vmem:[#allocation5 + $0x3c8] sm:$0xff]
        %v567 = vld [vmem:[#allocation5 + $0x3d0] sm:$0xff]
        %v568 = vld [vmem:[#allocation5 + $0x3d8] sm:$0xff]
        %v569 = vld [vmem:[#allocation5 + $0x3e0] sm:$0xff]
        %v570 = vld [vmem:[#allocation5 + $0x3e8] sm:$0xff]
        %v571 = vld [vmem:[#allocation5 + $0x3f0] sm:$0xff]
        %v572 = vld [vmem:[#allocation5 + $0x3f8] sm:$0xff]
        %v573 = vld [vmem:[#allocation5 + $0x400] sm:$0xff]
        %v574 = vld [vmem:[#allocation5 + $0x408] sm:$0xff]
        %v575 = vld [vmem:[#allocation5 + $0x410] sm:$0xff]
        %v576 = vld [vmem:[#allocation5 + $0x418] sm:$0xff]
        %v577 = vld [vmem:[#allocation5 + $0x420] sm:$0xff]
        %v578 = vld [vmem:[#allocation5 + $0x428] sm:$0xff]
        %v579 = vld [vmem:[#allocation5 + $0x430] sm:$0xff]
        %v580 = vld [vmem:[#allocation5 + $0x438] sm:$0xff]
        %v581 = vld [vmem:[#allocation5 + $0x440] sm:$0xff]
        %v582 = vld [vmem:[#allocation5 + $0x448] sm:$0xff]
        %v583 = vld [vmem:[#allocation5 + $0x450] sm:$0xff]
        %v584 = vld [vmem:[#allocation5 + $0x458] sm:$0xff]
        %v585 = vld [vmem:[#allocation5 + $0x460] sm:$0xff]
        %v586 = vld [vmem:[#allocation5 + $0x468] sm:$0xff]
        %v587 = vld [vmem:[#allocation5 + $0x470] sm:$0xff]
        %v588 = vld [vmem:[#allocation5 + $0x478] sm:$0xff]
        %v589 = vld [vmem:[#allocation5 + $0x480] sm:$0xff]
        %v590 = vld [vmem:[#allocation5 + $0x488] sm:$0xff]
        %v591 = vld [vmem:[#allocation5 + $0x490] sm:$0xff]
        %v592 = vld [vmem:[#allocation5 + $0x498] sm:$0xff]
        %v593 = vld [vmem:[#allocation5 + $0x4a0] sm:$0xff]
        %v594 = vld [vmem:[#allocation5 + $0x4a8] sm:$0xff]
        %v595 = vld [vmem:[#allocation5 + $0x4b0] sm:$0xff]
        %v596 = vld [vmem:[#allocation5 + $0x4b8] sm:$0xff]
        %v597 = vld [vmem:[#allocation5 + $0x4c0] sm:$0xff]
        %v598 = vld [vmem:[#allocation5 + $0x4c8] sm:$0xff]
        %v599 = vld [vmem:[#allocation5 + $0x4d0] sm:$0xff]
        %v600 = vld [vmem:[#allocation5 + $0x4d8] sm:$0xff]
        %v601 = vld [vmem:[#allocation5 + $0x4e0] sm:$0xff]
        %v602 = vld [vmem:[#allocation5 + $0x4e8] sm:$0xff]
        %v603 = vld [vmem:[#allocation5 + $0x4f0] sm:$0xff]
        %v604 = vld [vmem:[#allocation5 + $0x4f8] sm:$0xff]
        %v605 = vld [vmem:[#allocation5 + $0x500] sm:$0xff]
        %v606 = vld [vmem:[#allocation5 + $0x508] sm:$0xff]
        %v607 = vld [vmem:[#allocation5 + $0x510] sm:$0xff]
        %v608 = vld [vmem:[#allocation5 + $0x518] sm:$0xff]
        %v609 = vld [vmem:[#allocation5 + $0x520] sm:$0xff]
        %v610 = vld [vmem:[#allocation5 + $0x528] sm:$0xff]
        %v611 = vld [vmem:[#allocation5 + $0x530] sm:$0xff]
        %v612 = vld [vmem:[#allocation5 + $0x538] sm:$0xff]
        %v613 = vld [vmem:[#allocation5 + $0x540] sm:$0xff]
        %v614 = vld [vmem:[#allocation5 + $0x548] sm:$0xff]
        %v615 = vld [vmem:[#allocation5 + $0x550] sm:$0xff]
        %v616 = vld [vmem:[#allocation5 + $0x558] sm:$0xff]
        %v617 = vld [vmem:[#allocation5 + $0x560] sm:$0xff]
        %v618 = vld [vmem:[#allocation5 + $0x568] sm:$0xff]
        %v619 = vld [vmem:[#allocation5 + $0x570] sm:$0xff]
        %v620 = vld [vmem:[#allocation5 + $0x578] sm:$0xff]
        %v621 = vld [vmem:[#allocation5 + $0x580] sm:$0xff]
        %v622 = vld [vmem:[#allocation5 + $0x588] sm:$0xff]
        %v623 = vld [vmem:[#allocation5 + $0x590] sm:$0xff]
        %v624 = vld [vmem:[#allocation5 + $0x598] sm:$0xff]
        %v625 = vld [vmem:[#allocation5 + $0x5a0] sm:$0xff]
        %v626 = vld [vmem:[#allocation5 + $0x5a8] sm:$0xff]
        %v627 = vld [vmem:[#allocation5 + $0x5b0] sm:$0xff]
        %v628 = vld [vmem:[#allocation5 + $0x5b8] sm:$0xff]
        %v629 = vld [vmem:[#allocation5 + $0x5c0] sm:$0xff]
        %v630 = vld [vmem:[#allocation5 + $0x5c8] sm:$0xff]
        %v631 = vld [vmem:[#allocation5 + $0x5d0] sm:$0xff]
        %v632 = vld [vmem:[#allocation5 + $0x5d8] sm:$0xff]
        %v633 = vld [vmem:[#allocation5 + $0x5e0] sm:$0xff]
        %v634 = vld [vmem:[#allocation5 + $0x5e8] sm:$0xff]
        %v635 = vld [vmem:[#allocation5 + $0x5f0] sm:$0xff]
        %v636 = vld [vmem:[#allocation5 + $0x5f8] sm:$0xff]
        %v637 = vld [vmem:[#allocation5 + $0x600] sm:$0xff]
        %v638 = vld [vmem:[#allocation5 + $0x608] sm:$0xff]
        %v639 = vld [vmem:[#allocation5 + $0x610] sm:$0xff]
        %v640 = vld [vmem:[#allocation5 + $0x618] sm:$0xff]
        %v641 = vld [vmem:[#allocation5 + $0x620] sm:$0xff]
        %v642 = vld [vmem:[#allocation5 + $0x628] sm:$0xff]
        %v643 = vld [vmem:[#allocation5 + $0x630] sm:$0xff]
        %v644 = vld [vmem:[#allocation5 + $0x638] sm:$0xff]
        %v645 = vld [vmem:[#allocation5 + $0x640] sm:$0xff]
        %v646 = vld [vmem:[#allocation5 + $0x648] sm:$0xff]
        %v647 = vld [vmem:[#allocation5 + $0x650] sm:$0xff]
        %v648 = vld [vmem:[#allocation5 + $0x658] sm:$0xff]
        %v649 = vld [vmem:[#allocation5 + $0x660] sm:$0xff]
        %v650 = vld [vmem:[#allocation5 + $0x668] sm:$0xff]
        %v651 = vld [vmem:[#allocation5 + $0x670] sm:$0xff]
        %v652 = vld [vmem:[#allocation5 + $0x678] sm:$0xff]
        %v653 = vld [vmem:[#allocation5 + $0x680] sm:$0xff]
        %v654 = vld [vmem:[#allocation5 + $0x688] sm:$0xff]
        %v655 = vld [vmem:[#allocation5 + $0x690] sm:$0xff]
        %v656 = vld [vmem:[#allocation5 + $0x698] sm:$0xff]
        %v657 = vld [vmem:[#allocation5 + $0x6a0] sm:$0xff]
        %v658 = vld [vmem:[#allocation5 + $0x6a8] sm:$0xff]
        %v659 = vld [vmem:[#allocation5 + $0x6b0] sm:$0xff]
        %v660 = vld [vmem:[#allocation5 + $0x6b8] sm:$0xff]
        %v661 = vld [vmem:[#allocation5 + $0x6c0] sm:$0xff]
        %v662 = vld [vmem:[#allocation5 + $0x6c8] sm:$0xff]
        %v663 = vld [vmem:[#allocation5 + $0x6d0] sm:$0xff]
        %v664 = vld [vmem:[#allocation5 + $0x6d8] sm:$0xff]
        %v665 = vld [vmem:[#allocation5 + $0x6e0] sm:$0xff]
        %v666 = vld [vmem:[#allocation5 + $0x6e8] sm:$0xff]
        %v667 = vld [vmem:[#allocation5 + $0x6f0] sm:$0xff]
        %v668 = vld [vmem:[#allocation5 + $0x6f8] sm:$0xff]
        %v669 = vld [vmem:[#allocation5 + $0x700] sm:$0xff]
        %v670 = vld [vmem:[#allocation5 + $0x708] sm:$0xff]
        %v671 = vld [vmem:[#allocation5 + $0x710] sm:$0xff]
        %v672 = vld [vmem:[#allocation5 + $0x718] sm:$0xff]
        %v673 = vld [vmem:[#allocation5 + $0x720] sm:$0xff]
        %v674 = vld [vmem:[#allocation5 + $0x728] sm:$0xff]
        %v675 = vld [vmem:[#allocation5 + $0x730] sm:$0xff]
        %v676 = vld [vmem:[#allocation5 + $0x738] sm:$0xff]
        %v677 = vld [vmem:[#allocation5 + $0x740] sm:$0xff]
        %v678 = vld [vmem:[#allocation5 + $0x748] sm:$0xff]
        %v679 = vld [vmem:[#allocation5 + $0x750] sm:$0xff]
        %v680 = vld [vmem:[#allocation5 + $0x758] sm:$0xff]
        %v681 = vld [vmem:[#allocation5 + $0x760] sm:$0xff]
        %v682 = vld [vmem:[#allocation5 + $0x768] sm:$0xff]
        %v683 = vld [vmem:[#allocation5 + $0x770] sm:$0xff]
        %v684 = vld [vmem:[#allocation5 + $0x778] sm:$0xff]
        %v685 = vld [vmem:[#allocation5 + $0x780] sm:$0xff]
        %v686 = vld [vmem:[#allocation5 + $0x788] sm:$0xff]
        %v687 = vld [vmem:[#allocation5 + $0x790] sm:$0xff]
        %v688 = vld [vmem:[#allocation5 + $0x798] sm:$0xff]
        %v689 = vld [vmem:[#allocation5 + $0x7a0] sm:$0xff]
        %v690 = vld [vmem:[#allocation5 + $0x7a8] sm:$0xff]
        %v691 = vld [vmem:[#allocation5 + $0x7b0] sm:$0xff]
        %v692 = vld [vmem:[#allocation5 + $0x7b8] sm:$0xff]
        %v693 = vld [vmem:[#allocation5 + $0x7c0] sm:$0xff]
        %v694 = vld [vmem:[#allocation5 + $0x7c8] sm:$0xff]
        %v695 = vld [vmem:[#allocation5 + $0x7d0] sm:$0xff]
        %v696 = vld [vmem:[#allocation5 + $0x7d8] sm:$0xff]
        %v697 = vld [vmem:[#allocation5 + $0x7e0] sm:$0xff]
        %v698 = vld [vmem:[#allocation5 + $0x7e8] sm:$0xff]
        %v699 = vld [vmem:[#allocation5 + $0x7f0] sm:$0xff]
        %v700 = vld [vmem:[#allocation5 + $0x7f8] sm:$0xff]
        %v701 = vld [vmem:[#allocation7] sm:$0xf]
        %v703 = vperm.slane %v701, 0
        %v704 = vperm.slane %v701, 1
        %v705 = vperm.slane %v701, 2
        %v706 = vperm.slane %v701, 3
        %711 = vmatpush.msra.mxu0 %v505
        %712 = vmatpush.msra.mxu0 %v501
        %713 = vmatpush.msra.mxu0 %v497
        %714 = vmatpush.msra.mxu0 %v493
        %715 = vmatpush.msra.mxu0 %v489
        %716 = vmatpush.msra.mxu0 %v485
        %717 = vmatpush.msra.mxu0 %v481
        %718 = vmatpush.msra.mxu0 %v477
        %719 = vmatpush.msra.mxu0 %v473
        %720 = vmatpush.msra.mxu0 %v469
        %721 = vmatpush.msra.mxu0 %v465
        %722 = vmatpush.msra.mxu0 %v461
        %723 = vmatpush.msra.mxu0 %v457
        %724 = vmatpush.msra.mxu0 %v453
        %725 = vmatpush.msra.mxu0 %v449
        %726 = vmatpush.msra.mxu0 %v445
        %727 = vmatmul.f32.gmra.mxu0 %v381
        %v728 = vpop.f32.mrf.mxu0
        %v729 = vadd.f32 %v703, %v728
        %730 = vmatmul.f32.gmra.mxu0 %v385
        %v731 = vpop.f32.mrf.mxu0
        %v732 = vadd.f32 %v703, %v731
        %733 = vmatmul.f32.gmra.mxu0 %v389
        %v734 = vpop.f32.mrf.mxu0
        %v735 = vadd.f32 %v703, %v734
        %736 = vmatmul.f32.gmra.mxu0 %v393
        %v737 = vpop.f32.mrf.mxu0
        %v738 = vadd.f32 %v703, %v737
        %739 = vmatmul.f32.gmra.mxu0 %v397
        %v740 = vpop.f32.mrf.mxu0
        %v741 = vadd.f32 %v703, %v740
        %742 = vmatmul.f32.gmra.mxu0 %v401
        %v743 = vpop.f32.mrf.mxu0
        %v744 = vadd.f32 %v703, %v743
        %745 = vmatmul.f32.gmra.mxu0 %v405
        %v746 = vpop.f32.mrf.mxu0
        %v747 = vadd.f32 %v703, %v746
        %748 = vmatmul.f32.gmra.mxu0 %v409
        %v749 = vpop.f32.mrf.mxu0
        %v750 = vadd.f32 %v703, %v749
        %751 = vmatmul.f32.gmra.mxu0 %v413
        %v752 = vpop.f32.mrf.mxu0
        %v753 = vadd.f32 %v703, %v752
        %754 = vmatmul.f32.gmra.mxu0 %v417
        %v755 = vpop.f32.mrf.mxu0
        %v756 = vadd.f32 %v703, %v755
        %757 = vmatmul.f32.gmra.mxu0 %v421
        %v758 = vpop.f32.mrf.mxu0
        %v759 = vadd.f32 %v703, %v758
        %760 = vmatmul.f32.gmra.mxu0 %v425
        %v761 = vpop.f32.mrf.mxu0
        %v762 = vadd.f32 %v703, %v761
        %763 = vmatmul.f32.gmra.mxu0 %v429
        %v764 = vpop.f32.mrf.mxu0
        %v765 = vadd.f32 %v703, %v764
        %766 = vmatmul.f32.gmra.mxu0 %v433
        %v767 = vpop.f32.mrf.mxu0
        %v768 = vadd.f32 %v703, %v767
        %769 = vmatmul.f32.gmra.mxu0 %v437
        %v770 = vpop.f32.mrf.mxu0
        %v771 = vadd.f32 %v703, %v770
        %772 = vmatmul.f32.gmra.mxu0 %v441
        %v773 = vpop.f32.mrf.mxu0
        %v774 = vadd.f32 %v703, %v773
        %775 = vdwg.mxu0
        %776 = vmatpush.msra.mxu0 %v569
        %777 = vmatpush.msra.mxu0 %v565
        %778 = vmatpush.msra.mxu0 %v561
        %779 = vmatpush.msra.mxu0 %v557
        %780 = vmatpush.msra.mxu0 %v553
        %781 = vmatpush.msra.mxu0 %v549
        %782 = vmatpush.msra.mxu0 %v545
        %783 = vmatpush.msra.mxu0 %v541
        %784 = vmatpush.msra.mxu0 %v537
        %785 = vmatpush.msra.mxu0 %v533
        %786 = vmatpush.msra.mxu0 %v529
        %787 = vmatpush.msra.mxu0 %v525
        %788 = vmatpush.msra.mxu0 %v521
        %789 = vmatpush.msra.mxu0 %v517
        %790 = vmatpush.msra.mxu0 %v513
        %791 = vmatpush.msra.mxu0 %v509
        %792 = vmatmul.f32.gmra.mxu0 %v382
        %v793 = vpop.f32.mrf.mxu0
        %v794 = vadd.f32 %v729, %v793
        %795 = vmatmul.f32.gmra.mxu0 %v386
        %v796 = vpop.f32.mrf.mxu0
        %v797 = vadd.f32 %v732, %v796
        %798 = vmatmul.f32.gmra.mxu0 %v390
        %v799 = vpop.f32.mrf.mxu0
        %v800 = vadd.f32 %v735, %v799
        %801 = vmatmul.f32.gmra.mxu0 %v394
        %v802 = vpop.f32.mrf.mxu0
        %v803 = vadd.f32 %v738, %v802
        %804 = vmatmul.f32.gmra.mxu0 %v398
        %v805 = vpop.f32.mrf.mxu0
        %v806 = vadd.f32 %v741, %v805
        %807 = vmatmul.f32.gmra.mxu0 %v402
        %v808 = vpop.f32.mrf.mxu0
        %v809 = vadd.f32 %v744, %v808
        %810 = vmatmul.f32.gmra.mxu0 %v406
        %v811 = vpop.f32.mrf.mxu0
        %v812 = vadd.f32 %v747, %v811
        %813 = vmatmul.f32.gmra.mxu0 %v410
        %v814 = vpop.f32.mrf.mxu0
        %v815 = vadd.f32 %v750, %v814
        %816 = vmatmul.f32.gmra.mxu0 %v414
        %v817 = vpop.f32.mrf.mxu0
        %v818 = vadd.f32 %v753, %v817
        %819 = vmatmul.f32.gmra.mxu0 %v418
        %v820 = vpop.f32.mrf.mxu0
        %v821 = vadd.f32 %v756, %v820
        %822 = vmatmul.f32.gmra.mxu0 %v422
        %v823 = vpop.f32.mrf.mxu0
        %v824 = vadd.f32 %v759, %v823
        %825 = vmatmul.f32.gmra.mxu0 %v426
        %v826 = vpop.f32.mrf.mxu0
        %v827 = vadd.f32 %v762, %v826
        %828 = vmatmul.f32.gmra.mxu0 %v430
        %v829 = vpop.f32.mrf.mxu0
        %v830 = vadd.f32 %v765, %v829
        %831 = vmatmul.f32.gmra.mxu0 %v434
        %v832 = vpop.f32.mrf.mxu0
        %v833 = vadd.f32 %v768, %v832
        %834 = vmatmul.f32.gmra.mxu0 %v438
        %v835 = vpop.f32.mrf.mxu0
        %v836 = vadd.f32 %v771, %v835
        %837 = vmatmul.f32.gmra.mxu0 %v442
        %v838 = vpop.f32.mrf.mxu0
        %v839 = vadd.f32 %v774, %v838
        %840 = vdwg.mxu0
        %841 = vmatpush.msra.mxu0 %v633
        %842 = vmatpush.msra.mxu0 %v629
        %843 = vmatpush.msra.mxu0 %v625
        %844 = vmatpush.msra.mxu0 %v621
        %845 = vmatpush.msra.mxu0 %v617
        %846 = vmatpush.msra.mxu0 %v613
        %847 = vmatpush.msra.mxu0 %v609
        %848 = vmatpush.msra.mxu0 %v605
        %849 = vmatpush.msra.mxu0 %v601
        %850 = vmatpush.msra.mxu0 %v597
        %851 = vmatpush.msra.mxu0 %v593
        %852 = vmatpush.msra.mxu0 %v589
        %853 = vmatpush.msra.mxu0 %v585
        %854 = vmatpush.msra.mxu0 %v581
        %855 = vmatpush.msra.mxu0 %v577
        %856 = vmatpush.msra.mxu0 %v573
        %857 = vmatmul.f32.gmra.mxu0 %v383
        %v858 = vpop.f32.mrf.mxu0
        %v859 = vadd.f32 %v794, %v858
        %860 = vmatmul.f32.gmra.mxu0 %v387
        %v861 = vpop.f32.mrf.mxu0
        %v862 = vadd.f32 %v797, %v861
        %863 = vmatmul.f32.gmra.mxu0 %v391
        %v864 = vpop.f32.mrf.mxu0
        %v865 = vadd.f32 %v800, %v864
        %866 = vmatmul.f32.gmra.mxu0 %v395
        %v867 = vpop.f32.mrf.mxu0
        %v868 = vadd.f32 %v803, %v867
        %869 = vmatmul.f32.gmra.mxu0 %v399
        %v870 = vpop.f32.mrf.mxu0
        %v871 = vadd.f32 %v806, %v870
        %872 = vmatmul.f32.gmra.mxu0 %v403
        %v873 = vpop.f32.mrf.mxu0
        %v874 = vadd.f32 %v809, %v873
        %875 = vmatmul.f32.gmra.mxu0 %v407
        %v876 = vpop.f32.mrf.mxu0
        %v877 = vadd.f32 %v812, %v876
        %878 = vmatmul.f32.gmra.mxu0 %v411
        %v879 = vpop.f32.mrf.mxu0
        %v880 = vadd.f32 %v815, %v879
        %881 = vmatmul.f32.gmra.mxu0 %v415
        %v882 = vpop.f32.mrf.mxu0
        %v883 = vadd.f32 %v818, %v882
        %884 = vmatmul.f32.gmra.mxu0 %v419
        %v885 = vpop.f32.mrf.mxu0
        %v886 = vadd.f32 %v821, %v885
        %887 = vmatmul.f32.gmra.mxu0 %v423
        %v888 = vpop.f32.mrf.mxu0
        %v889 = vadd.f32 %v824, %v888
        %890 = vmatmul.f32.gmra.mxu0 %v427
        %v891 = vpop.f32.mrf.mxu0
        %v892 = vadd.f32 %v827, %v891
        %893 = vmatmul.f32.gmra.mxu0 %v431
        %v894 = vpop.f32.mrf.mxu0
        %v895 = vadd.f32 %v830, %v894
        %896 = vmatmul.f32.gmra.mxu0 %v435
        %v897 = vpop.f32.mrf.mxu0
        %v898 = vadd.f32 %v833, %v897
        %899 = vmatmul.f32.gmra.mxu0 %v439
        %v900 = vpop.f32.mrf.mxu0
        %v901 = vadd.f32 %v836, %v900
        %902 = vmatmul.f32.gmra.mxu0 %v443
        %v903 = vpop.f32.mrf.mxu0
        %v904 = vadd.f32 %v839, %v903
        %905 = vdwg.mxu0
        %906 = vmatpush.msra.mxu0 %v697
        %907 = vmatpush.msra.mxu0 %v693
        %908 = vmatpush.msra.mxu0 %v689
        %909 = vmatpush.msra.mxu0 %v685
        %910 = vmatpush.msra.mxu0 %v681
        %911 = vmatpush.msra.mxu0 %v677
        %912 = vmatpush.msra.mxu0 %v673
        %913 = vmatpush.msra.mxu0 %v669
        %914 = vmatpush.msra.mxu0 %v665
        %915 = vmatpush.msra.mxu0 %v661
        %916 = vmatpush.msra.mxu0 %v657
        %917 = vmatpush.msra.mxu0 %v653
        %918 = vmatpush.msra.mxu0 %v649
        %919 = vmatpush.msra.mxu0 %v645
        %920 = vmatpush.msra.mxu0 %v641
        %921 = vmatpush.msra.mxu0 %v637
        %922 = vmatmul.f32.gmra.mxu0 %v384
        %v923 = vpop.f32.mrf.mxu0
        %v924 = vadd.f32 %v859, %v923
        %925 = vmatmul.f32.gmra.mxu0 %v388
        %v926 = vpop.f32.mrf.mxu0
        %v927 = vadd.f32 %v862, %v926
        %928 = vmatmul.f32.gmra.mxu0 %v392
        %v929 = vpop.f32.mrf.mxu0
        %v930 = vadd.f32 %v865, %v929
        %931 = vmatmul.f32.gmra.mxu0 %v396
        %v932 = vpop.f32.mrf.mxu0
        %v933 = vadd.f32 %v868, %v932
        %934 = vmatmul.f32.gmra.mxu0 %v400
        %v935 = vpop.f32.mrf.mxu0
        %v936 = vadd.f32 %v871, %v935
        %937 = vmatmul.f32.gmra.mxu0 %v404
        %v938 = vpop.f32.mrf.mxu0
        %v939 = vadd.f32 %v874, %v938
        %940 = vmatmul.f32.gmra.mxu0 %v408
        %v941 = vpop.f32.mrf.mxu0
        %v942 = vadd.f32 %v877, %v941
        %943 = vmatmul.f32.gmra.mxu0 %v412
        %v944 = vpop.f32.mrf.mxu0
        %v945 = vadd.f32 %v880, %v944
        %946 = vmatmul.f32.gmra.mxu0 %v416
        %v947 = vpop.f32.mrf.mxu0
        %v948 = vadd.f32 %v883, %v947
        %949 = vmatmul.f32.gmra.mxu0 %v420
        %v950 = vpop.f32.mrf.mxu0
        %v951 = vadd.f32 %v886, %v950
        %952 = vmatmul.f32.gmra.mxu0 %v424
        %v953 = vpop.f32.mrf.mxu0
        %v954 = vadd.f32 %v889, %v953
        %955 = vmatmul.f32.gmra.mxu0 %v428
        %v956 = vpop.f32.mrf.mxu0
        %v957 = vadd.f32 %v892, %v956
        %958 = vmatmul.f32.gmra.mxu0 %v432
        %v959 = vpop.f32.mrf.mxu0
        %v960 = vadd.f32 %v895, %v959
        %961 = vmatmul.f32.gmra.mxu0 %v436
        %v962 = vpop.f32.mrf.mxu0
        %v963 = vadd.f32 %v898, %v962
        %964 = vmatmul.f32.gmra.mxu0 %v440
        %v965 = vpop.f32.mrf.mxu0
        %v966 = vadd.f32 %v901, %v965
        %967 = vmatmul.f32.gmra.mxu0 %v444
        %v968 = vpop.f32.mrf.mxu0
        %v969 = vadd.f32 %v904, %v968
        %970 = vdwg.mxu0
        %971 = vmatpush.msra.mxu0 %v506
        %972 = vmatpush.msra.mxu0 %v502
        %973 = vmatpush.msra.mxu0 %v498
        %974 = vmatpush.msra.mxu0 %v494
        %975 = vmatpush.msra.mxu0 %v490
        %976 = vmatpush.msra.mxu0 %v486
        %977 = vmatpush.msra.mxu0 %v482
        %978 = vmatpush.msra.mxu0 %v478
        %979 = vmatpush.msra.mxu0 %v474
        %980 = vmatpush.msra.mxu0 %v470
        %981 = vmatpush.msra.mxu0 %v466
        %982 = vmatpush.msra.mxu0 %v462
        %983 = vmatpush.msra.mxu0 %v458
        %984 = vmatpush.msra.mxu0 %v454
        %985 = vmatpush.msra.mxu0 %v450
        %986 = vmatpush.msra.mxu0 %v446
        %987 = vmatmul.f32.gmra.mxu0 %v381
        %v988 = vpop.f32.mrf.mxu0
        %v989 = vadd.f32 %v704, %v988
        %990 = vmatmul.f32.gmra.mxu0 %v385
        %v991 = vpop.f32.mrf.mxu0
        %v992 = vadd.f32 %v704, %v991
        %993 = vmatmul.f32.gmra.mxu0 %v389
        %v994 = vpop.f32.mrf.mxu0
        %v995 = vadd.f32 %v704, %v994
        %996 = vmatmul.f32.gmra.mxu0 %v393
        %v997 = vpop.f32.mrf.mxu0
        %v998 = vadd.f32 %v704, %v997
        %999 = vmatmul.f32.gmra.mxu0 %v397
        %v1000 = vpop.f32.mrf.mxu0
        %v1001 = vadd.f32 %v704, %v1000
        %1002 = vmatmul.f32.gmra.mxu0 %v401
        %v1003 = vpop.f32.mrf.mxu0
        %v1004 = vadd.f32 %v704, %v1003
        %1005 = vmatmul.f32.gmra.mxu0 %v405
        %v1006 = vpop.f32.mrf.mxu0
        %v1007 = vadd.f32 %v704, %v1006
        %1008 = vmatmul.f32.gmra.mxu0 %v409
        %v1009 = vpop.f32.mrf.mxu0
        %v1010 = vadd.f32 %v704, %v1009
        %1011 = vmatmul.f32.gmra.mxu0 %v413
        %v1012 = vpop.f32.mrf.mxu0
        %v1013 = vadd.f32 %v704, %v1012
        %1014 = vmatmul.f32.gmra.mxu0 %v417
        %v1015 = vpop.f32.mrf.mxu0
        %v1016 = vadd.f32 %v704, %v1015
        %1017 = vmatmul.f32.gmra.mxu0 %v421
        %v1018 = vpop.f32.mrf.mxu0
        %v1019 = vadd.f32 %v704, %v1018
        %1020 = vmatmul.f32.gmra.mxu0 %v425
        %v1021 = vpop.f32.mrf.mxu0
        %v1022 = vadd.f32 %v704, %v1021
        %1023 = vmatmul.f32.gmra.mxu0 %v429
        %v1024 = vpop.f32.mrf.mxu0
        %v1025 = vadd.f32 %v704, %v1024
        %1026 = vmatmul.f32.gmra.mxu0 %v433
        %v1027 = vpop.f32.mrf.mxu0
        %v1028 = vadd.f32 %v704, %v1027
        %1029 = vmatmul.f32.gmra.mxu0 %v437
        %v1030 = vpop.f32.mrf.mxu0
        %v1031 = vadd.f32 %v704, %v1030
        %1032 = vmatmul.f32.gmra.mxu0 %v441
        %v1033 = vpop.f32.mrf.mxu0
        %v1034 = vadd.f32 %v704, %v1033
        %1035 = vdwg.mxu0
        %1036 = vmatpush.msra.mxu0 %v570
        %1037 = vmatpush.msra.mxu0 %v566
        %1038 = vmatpush.msra.mxu0 %v562
        %1039 = vmatpush.msra.mxu0 %v558
        %1040 = vmatpush.msra.mxu0 %v554
        %1041 = vmatpush.msra.mxu0 %v550
        %1042 = vmatpush.msra.mxu0 %v546
        %1043 = vmatpush.msra.mxu0 %v542
        %1044 = vmatpush.msra.mxu0 %v538
        %1045 = vmatpush.msra.mxu0 %v534
        %1046 = vmatpush.msra.mxu0 %v530
        %1047 = vmatpush.msra.mxu0 %v526
        %1048 = vmatpush.msra.mxu0 %v522
        %1049 = vmatpush.msra.mxu0 %v518
        %1050 = vmatpush.msra.mxu0 %v514
        %1051 = vmatpush.msra.mxu0 %v510
        %1052 = vmatmul.f32.gmra.mxu0 %v382
        %v1053 = vpop.f32.mrf.mxu0
        %v1054 = vadd.f32 %v989, %v1053
        %1055 = vmatmul.f32.gmra.mxu0 %v386
        %v1056 = vpop.f32.mrf.mxu0
        %v1057 = vadd.f32 %v992, %v1056
        %1058 = vmatmul.f32.gmra.mxu0 %v390
        %v1059 = vpop.f32.mrf.mxu0
        %v1060 = vadd.f32 %v995, %v1059
        %1061 = vmatmul.f32.gmra.mxu0 %v394
        %v1062 = vpop.f32.mrf.mxu0
        %v1063 = vadd.f32 %v998, %v1062
        %1064 = vmatmul.f32.gmra.mxu0 %v398
        %v1065 = vpop.f32.mrf.mxu0
        %v1066 = vadd.f32 %v1001, %v1065
        %1067 = vmatmul.f32.gmra.mxu0 %v402
        %v1068 = vpop.f32.mrf.mxu0
        %v1069 = vadd.f32 %v1004, %v1068
        %1070 = vmatmul.f32.gmra.mxu0 %v406
        %v1071 = vpop.f32.mrf.mxu0
        %v1072 = vadd.f32 %v1007, %v1071
        %1073 = vmatmul.f32.gmra.mxu0 %v410
        %v1074 = vpop.f32.mrf.mxu0
        %v1075 = vadd.f32 %v1010, %v1074
        %1076 = vmatmul.f32.gmra.mxu0 %v414
        %v1077 = vpop.f32.mrf.mxu0
        %v1078 = vadd.f32 %v1013, %v1077
        %1079 = vmatmul.f32.gmra.mxu0 %v418
        %v1080 = vpop.f32.mrf.mxu0
        %v1081 = vadd.f32 %v1016, %v1080
        %1082 = vmatmul.f32.gmra.mxu0 %v422
        %v1083 = vpop.f32.mrf.mxu0
        %v1084 = vadd.f32 %v1019, %v1083
        %1085 = vmatmul.f32.gmra.mxu0 %v426
        %v1086 = vpop.f32.mrf.mxu0
        %v1087 = vadd.f32 %v1022, %v1086
        %1088 = vmatmul.f32.gmra.mxu0 %v430
        %v1089 = vpop.f32.mrf.mxu0
        %v1090 = vadd.f32 %v1025, %v1089
        %1091 = vmatmul.f32.gmra.mxu0 %v434
        %v1092 = vpop.f32.mrf.mxu0
        %v1093 = vadd.f32 %v1028, %v1092
        %1094 = vmatmul.f32.gmra.mxu0 %v438
        %v1095 = vpop.f32.mrf.mxu0
        %v1096 = vadd.f32 %v1031, %v1095
        %1097 = vmatmul.f32.gmra.mxu0 %v442
        %v1098 = vpop.f32.mrf.mxu0
        %v1099 = vadd.f32 %v1034, %v1098
        %1100 = vdwg.mxu0
        %1101 = vmatpush.msra.mxu0 %v634
        %1102 = vmatpush.msra.mxu0 %v630
        %1103 = vmatpush.msra.mxu0 %v626
        %1104 = vmatpush.msra.mxu0 %v622
        %1105 = vmatpush.msra.mxu0 %v618
        %1106 = vmatpush.msra.mxu0 %v614
        %1107 = vmatpush.msra.mxu0 %v610
        %1108 = vmatpush.msra.mxu0 %v606
        %1109 = vmatpush.msra.mxu0 %v602
        %1110 = vmatpush.msra.mxu0 %v598
        %1111 = vmatpush.msra.mxu0 %v594
        %1112 = vmatpush.msra.mxu0 %v590
        %1113 = vmatpush.msra.mxu0 %v586
        %1114 = vmatpush.msra.mxu0 %v582
        %1115 = vmatpush.msra.mxu0 %v578
        %1116 = vmatpush.msra.mxu0 %v574
        %1117 = vmatmul.f32.gmra.mxu0 %v383
        %v1118 = vpop.f32.mrf.mxu0
        %v1119 = vadd.f32 %v1054, %v1118
        %1120 = vmatmul.f32.gmra.mxu0 %v387
        %v1121 = vpop.f32.mrf.mxu0
        %v1122 = vadd.f32 %v1057, %v1121
        %1123 = vmatmul.f32.gmra.mxu0 %v391
        %v1124 = vpop.f32.mrf.mxu0
        %v1125 = vadd.f32 %v1060, %v1124
        %1126 = vmatmul.f32.gmra.mxu0 %v395
        %v1127 = vpop.f32.mrf.mxu0
        %v1128 = vadd.f32 %v1063, %v1127
        %1129 = vmatmul.f32.gmra.mxu0 %v399
        %v1130 = vpop.f32.mrf.mxu0
        %v1131 = vadd.f32 %v1066, %v1130
        %1132 = vmatmul.f32.gmra.mxu0 %v403
        %v1133 = vpop.f32.mrf.mxu0
        %v1134 = vadd.f32 %v1069, %v1133
        %1135 = vmatmul.f32.gmra.mxu0 %v407
        %v1136 = vpop.f32.mrf.mxu0
        %v1137 = vadd.f32 %v1072, %v1136
        %1138 = vmatmul.f32.gmra.mxu0 %v411
        %v1139 = vpop.f32.mrf.mxu0
        %v1140 = vadd.f32 %v1075, %v1139
        %1141 = vmatmul.f32.gmra.mxu0 %v415
        %v1142 = vpop.f32.mrf.mxu0
        %v1143 = vadd.f32 %v1078, %v1142
        %1144 = vmatmul.f32.gmra.mxu0 %v419
        %v1145 = vpop.f32.mrf.mxu0
        %v1146 = vadd.f32 %v1081, %v1145
        %1147 = vmatmul.f32.gmra.mxu0 %v423
        %v1148 = vpop.f32.mrf.mxu0
        %v1149 = vadd.f32 %v1084, %v1148
        %1150 = vmatmul.f32.gmra.mxu0 %v427
        %v1151 = vpop.f32.mrf.mxu0
        %v1152 = vadd.f32 %v1087, %v1151
        %1153 = vmatmul.f32.gmra.mxu0 %v431
        %v1154 = vpop.f32.mrf.mxu0
        %v1155 = vadd.f32 %v1090, %v1154
        %1156 = vmatmul.f32.gmra.mxu0 %v435
        %v1157 = vpop.f32.mrf.mxu0
        %v1158 = vadd.f32 %v1093, %v1157
        %1159 = vmatmul.f32.gmra.mxu0 %v439
        %v1160 = vpop.f32.mrf.mxu0
        %v1161 = vadd.f32 %v1096, %v1160
        %1162 = vmatmul.f32.gmra.mxu0 %v443
        %v1163 = vpop.f32.mrf.mxu0
        %v1164 = vadd.f32 %v1099, %v1163
        %1165 = vdwg.mxu0
        %1166 = vmatpush.msra.mxu0 %v698
        %1167 = vmatpush.msra.mxu0 %v694
        %1168 = vmatpush.msra.mxu0 %v690
        %1169 = vmatpush.msra.mxu0 %v686
        %1170 = vmatpush.msra.mxu0 %v682
        %1171 = vmatpush.msra.mxu0 %v678
        %1172 = vmatpush.msra.mxu0 %v674
        %1173 = vmatpush.msra.mxu0 %v670
        %1174 = vmatpush.msra.mxu0 %v666
        %1175 = vmatpush.msra.mxu0 %v662
        %1176 = vmatpush.msra.mxu0 %v658
        %1177 = vmatpush.msra.mxu0 %v654
        %1178 = vmatpush.msra.mxu0 %v650
        %1179 = vmatpush.msra.mxu0 %v646
        %1180 = vmatpush.msra.mxu0 %v642
        %1181 = vmatpush.msra.mxu0 %v638
        %1182 = vmatmul.f32.gmra.mxu0 %v384
        %v1183 = vpop.f32.mrf.mxu0
        %v1184 = vadd.f32 %v1119, %v1183
        %1185 = vmatmul.f32.gmra.mxu0 %v388
        %v1186 = vpop.f32.mrf.mxu0
        %v1187 = vadd.f32 %v1122, %v1186
        %1188 = vmatmul.f32.gmra.mxu0 %v392
        %v1189 = vpop.f32.mrf.mxu0
        %v1190 = vadd.f32 %v1125, %v1189
        %1191 = vmatmul.f32.gmra.mxu0 %v396
        %v1192 = vpop.f32.mrf.mxu0
        %v1193 = vadd.f32 %v1128, %v1192
        %1194 = vmatmul.f32.gmra.mxu0 %v400
        %v1195 = vpop.f32.mrf.mxu0
        %v1196 = vadd.f32 %v1131, %v1195
        %1197 = vmatmul.f32.gmra.mxu0 %v404
        %v1198 = vpop.f32.mrf.mxu0
        %v1199 = vadd.f32 %v1134, %v1198
        %1200 = vmatmul.f32.gmra.mxu0 %v408
        %v1201 = vpop.f32.mrf.mxu0
        %v1202 = vadd.f32 %v1137, %v1201
        %1203 = vmatmul.f32.gmra.mxu0 %v412
        %v1204 = vpop.f32.mrf.mxu0
        %v1205 = vadd.f32 %v1140, %v1204
        %1206 = vmatmul.f32.gmra.mxu0 %v416
        %v1207 = vpop.f32.mrf.mxu0
        %v1208 = vadd.f32 %v1143, %v1207
        %1209 = vmatmul.f32.gmra.mxu0 %v420
        %v1210 = vpop.f32.mrf.mxu0
        %v1211 = vadd.f32 %v1146, %v1210
        %1212 = vmatmul.f32.gmra.mxu0 %v424
        %v1213 = vpop.f32.mrf.mxu0
        %v1214 = vadd.f32 %v1149, %v1213
        %1215 = vmatmul.f32.gmra.mxu0 %v428
        %v1216 = vpop.f32.mrf.mxu0
        %v1217 = vadd.f32 %v1152, %v1216
        %1218 = vmatmul.f32.gmra.mxu0 %v432
        %v1219 = vpop.f32.mrf.mxu0
        %v1220 = vadd.f32 %v1155, %v1219
        %1221 = vmatmul.f32.gmra.mxu0 %v436
        %v1222 = vpop.f32.mrf.mxu0
        %v1223 = vadd.f32 %v1158, %v1222
        %1224 = vmatmul.f32.gmra.mxu0 %v440
        %v1225 = vpop.f32.mrf.mxu0
        %v1226 = vadd.f32 %v1161, %v1225
        %1227 = vmatmul.f32.gmra.mxu0 %v444
        %v1228 = vpop.f32.mrf.mxu0
        %v1229 = vadd.f32 %v1164, %v1228
        %1230 = vdwg.mxu0
        %1231 = vmatpush.msra.mxu0 %v507
        %1232 = vmatpush.msra.mxu0 %v503
        %1233 = vmatpush.msra.mxu0 %v499
        %1234 = vmatpush.msra.mxu0 %v495
        %1235 = vmatpush.msra.mxu0 %v491
        %1236 = vmatpush.msra.mxu0 %v487
        %1237 = vmatpush.msra.mxu0 %v483
        %1238 = vmatpush.msra.mxu0 %v479
        %1239 = vmatpush.msra.mxu0 %v475
        %1240 = vmatpush.msra.mxu0 %v471
        %1241 = vmatpush.msra.mxu0 %v467
        %1242 = vmatpush.msra.mxu0 %v463
        %1243 = vmatpush.msra.mxu0 %v459
        %1244 = vmatpush.msra.mxu0 %v455
        %1245 = vmatpush.msra.mxu0 %v451
        %1246 = vmatpush.msra.mxu0 %v447
        %1247 = vmatmul.f32.gmra.mxu0 %v381
        %v1248 = vpop.f32.mrf.mxu0
        %v1249 = vadd.f32 %v705, %v1248
        %1250 = vmatmul.f32.gmra.mxu0 %v385
        %v1251 = vpop.f32.mrf.mxu0
        %v1252 = vadd.f32 %v705, %v1251
        %1253 = vmatmul.f32.gmra.mxu0 %v389
        %v1254 = vpop.f32.mrf.mxu0
        %v1255 = vadd.f32 %v705, %v1254
        %1256 = vmatmul.f32.gmra.mxu0 %v393
        %v1257 = vpop.f32.mrf.mxu0
        %v1258 = vadd.f32 %v705, %v1257
        %1259 = vmatmul.f32.gmra.mxu0 %v397
        %v1260 = vpop.f32.mrf.mxu0
        %v1261 = vadd.f32 %v705, %v1260
        %1262 = vmatmul.f32.gmra.mxu0 %v401
        %v1263 = vpop.f32.mrf.mxu0
        %v1264 = vadd.f32 %v705, %v1263
        %1265 = vmatmul.f32.gmra.mxu0 %v405
        %v1266 = vpop.f32.mrf.mxu0
        %v1267 = vadd.f32 %v705, %v1266
        %1268 = vmatmul.f32.gmra.mxu0 %v409
        %v1269 = vpop.f32.mrf.mxu0
        %v1270 = vadd.f32 %v705, %v1269
        %1271 = vmatmul.f32.gmra.mxu0 %v413
        %v1272 = vpop.f32.mrf.mxu0
        %v1273 = vadd.f32 %v705, %v1272
        %1274 = vmatmul.f32.gmra.mxu0 %v417
        %v1275 = vpop.f32.mrf.mxu0
        %v1276 = vadd.f32 %v705, %v1275
        %1277 = vmatmul.f32.gmra.mxu0 %v421
        %v1278 = vpop.f32.mrf.mxu0
        %v1279 = vadd.f32 %v705, %v1278
        %1280 = vmatmul.f32.gmra.mxu0 %v425
        %v1281 = vpop.f32.mrf.mxu0
        %v1282 = vadd.f32 %v705, %v1281
        %1283 = vmatmul.f32.gmra.mxu0 %v429
        %v1284 = vpop.f32.mrf.mxu0
        %v1285 = vadd.f32 %v705, %v1284
        %1286 = vmatmul.f32.gmra.mxu0 %v433
        %v1287 = vpop.f32.mrf.mxu0
        %v1288 = vadd.f32 %v705, %v1287
        %1289 = vmatmul.f32.gmra.mxu0 %v437
        %v1290 = vpop.f32.mrf.mxu0
        %v1291 = vadd.f32 %v705, %v1290
        %1292 = vmatmul.f32.gmra.mxu0 %v441
        %v1293 = vpop.f32.mrf.mxu0
        %v1294 = vadd.f32 %v705, %v1293
        %1295 = vdwg.mxu0
        %1296 = vmatpush.msra.mxu0 %v571
        %1297 = vmatpush.msra.mxu0 %v567
        %1298 = vmatpush.msra.mxu0 %v563
        %1299 = vmatpush.msra.mxu0 %v559
        %1300 = vmatpush.msra.mxu0 %v555
        %1301 = vmatpush.msra.mxu0 %v551
        %1302 = vmatpush.msra.mxu0 %v547
        %1303 = vmatpush.msra.mxu0 %v543
        %1304 = vmatpush.msra.mxu0 %v539
        %1305 = vmatpush.msra.mxu0 %v535
        %1306 = vmatpush.msra.mxu0 %v531
        %1307 = vmatpush.msra.mxu0 %v527
        %1308 = vmatpush.msra.mxu0 %v523
        %1309 = vmatpush.msra.mxu0 %v519
        %1310 = vmatpush.msra.mxu0 %v515
        %1311 = vmatpush.msra.mxu0 %v511
        %1312 = vmatmul.f32.gmra.mxu0 %v382
        %v1313 = vpop.f32.mrf.mxu0
        %v1314 = vadd.f32 %v1249, %v1313
        %1315 = vmatmul.f32.gmra.mxu0 %v386
        %v1316 = vpop.f32.mrf.mxu0
        %v1317 = vadd.f32 %v1252, %v1316
        %1318 = vmatmul.f32.gmra.mxu0 %v390
        %v1319 = vpop.f32.mrf.mxu0
        %v1320 = vadd.f32 %v1255, %v1319
        %1321 = vmatmul.f32.gmra.mxu0 %v394
        %v1322 = vpop.f32.mrf.mxu0
        %v1323 = vadd.f32 %v1258, %v1322
        %1324 = vmatmul.f32.gmra.mxu0 %v398
        %v1325 = vpop.f32.mrf.mxu0
        %v1326 = vadd.f32 %v1261, %v1325
        %1327 = vmatmul.f32.gmra.mxu0 %v402
        %v1328 = vpop.f32.mrf.mxu0
        %v1329 = vadd.f32 %v1264, %v1328
        %1330 = vmatmul.f32.gmra.mxu0 %v406
        %v1331 = vpop.f32.mrf.mxu0
        %v1332 = vadd.f32 %v1267, %v1331
        %1333 = vmatmul.f32.gmra.mxu0 %v410
        %v1334 = vpop.f32.mrf.mxu0
        %v1335 = vadd.f32 %v1270, %v1334
        %1336 = vmatmul.f32.gmra.mxu0 %v414
        %v1337 = vpop.f32.mrf.mxu0
        %v1338 = vadd.f32 %v1273, %v1337
        %1339 = vmatmul.f32.gmra.mxu0 %v418
        %v1340 = vpop.f32.mrf.mxu0
        %v1341 = vadd.f32 %v1276, %v1340
        %1342 = vmatmul.f32.gmra.mxu0 %v422
        %v1343 = vpop.f32.mrf.mxu0
        %v1344 = vadd.f32 %v1279, %v1343
        %1345 = vmatmul.f32.gmra.mxu0 %v426
        %v1346 = vpop.f32.mrf.mxu0
        %v1347 = vadd.f32 %v1282, %v1346
        %1348 = vmatmul.f32.gmra.mxu0 %v430
        %v1349 = vpop.f32.mrf.mxu0
        %v1350 = vadd.f32 %v1285, %v1349
        %1351 = vmatmul.f32.gmra.mxu0 %v434
        %v1352 = vpop.f32.mrf.mxu0
        %v1353 = vadd.f32 %v1288, %v1352
        %1354 = vmatmul.f32.gmra.mxu0 %v438
        %v1355 = vpop.f32.mrf.mxu0
        %v1356 = vadd.f32 %v1291, %v1355
        %1357 = vmatmul.f32.gmra.mxu0 %v442
        %v1358 = vpop.f32.mrf.mxu0
        %v1359 = vadd.f32 %v1294, %v1358
        %1360 = vdwg.mxu0
        %1361 = vmatpush.msra.mxu0 %v635
        %1362 = vmatpush.msra.mxu0 %v631
        %1363 = vmatpush.msra.mxu0 %v627
        %1364 = vmatpush.msra.mxu0 %v623
        %1365 = vmatpush.msra.mxu0 %v619
        %1366 = vmatpush.msra.mxu0 %v615
        %1367 = vmatpush.msra.mxu0 %v611
        %1368 = vmatpush.msra.mxu0 %v607
        %1369 = vmatpush.msra.mxu0 %v603
        %1370 = vmatpush.msra.mxu0 %v599
        %1371 = vmatpush.msra.mxu0 %v595
        %1372 = vmatpush.msra.mxu0 %v591
        %1373 = vmatpush.msra.mxu0 %v587
        %1374 = vmatpush.msra.mxu0 %v583
        %1375 = vmatpush.msra.mxu0 %v579
        %1376 = vmatpush.msra.mxu0 %v575
        %1377 = vmatmul.f32.gmra.mxu0 %v383
        %v1378 = vpop.f32.mrf.mxu0
        %v1379 = vadd.f32 %v1314, %v1378
        %1380 = vmatmul.f32.gmra.mxu0 %v387
        %v1381 = vpop.f32.mrf.mxu0
        %v1382 = vadd.f32 %v1317, %v1381
        %1383 = vmatmul.f32.gmra.mxu0 %v391
        %v1384 = vpop.f32.mrf.mxu0
        %v1385 = vadd.f32 %v1320, %v1384
        %1386 = vmatmul.f32.gmra.mxu0 %v395
        %v1387 = vpop.f32.mrf.mxu0
        %v1388 = vadd.f32 %v1323, %v1387
        %1389 = vmatmul.f32.gmra.mxu0 %v399
        %v1390 = vpop.f32.mrf.mxu0
        %v1391 = vadd.f32 %v1326, %v1390
        %1392 = vmatmul.f32.gmra.mxu0 %v403
        %v1393 = vpop.f32.mrf.mxu0
        %v1394 = vadd.f32 %v1329, %v1393
        %1395 = vmatmul.f32.gmra.mxu0 %v407
        %v1396 = vpop.f32.mrf.mxu0
        %v1397 = vadd.f32 %v1332, %v1396
        %1398 = vmatmul.f32.gmra.mxu0 %v411
        %v1399 = vpop.f32.mrf.mxu0
        %v1400 = vadd.f32 %v1335, %v1399
        %1401 = vmatmul.f32.gmra.mxu0 %v415
        %v1402 = vpop.f32.mrf.mxu0
        %v1403 = vadd.f32 %v1338, %v1402
        %1404 = vmatmul.f32.gmra.mxu0 %v419
        %v1405 = vpop.f32.mrf.mxu0
        %v1406 = vadd.f32 %v1341, %v1405
        %1407 = vmatmul.f32.gmra.mxu0 %v423
        %v1408 = vpop.f32.mrf.mxu0
        %v1409 = vadd.f32 %v1344, %v1408
        %1410 = vmatmul.f32.gmra.mxu0 %v427
        %v1411 = vpop.f32.mrf.mxu0
        %v1412 = vadd.f32 %v1347, %v1411
        %1413 = vmatmul.f32.gmra.mxu0 %v431
        %v1414 = vpop.f32.mrf.mxu0
        %v1415 = vadd.f32 %v1350, %v1414
        %1416 = vmatmul.f32.gmra.mxu0 %v435
        %v1417 = vpop.f32.mrf.mxu0
        %v1418 = vadd.f32 %v1353, %v1417
        %1419 = vmatmul.f32.gmra.mxu0 %v439
        %v1420 = vpop.f32.mrf.mxu0
        %v1421 = vadd.f32 %v1356, %v1420
        %1422 = vmatmul.f32.gmra.mxu0 %v443
        %v1423 = vpop.f32.mrf.mxu0
        %v1424 = vadd.f32 %v1359, %v1423
        %1425 = vdwg.mxu0
        %1426 = vmatpush.msra.mxu0 %v699
        %1427 = vmatpush.msra.mxu0 %v695
        %1428 = vmatpush.msra.mxu0 %v691
        %1429 = vmatpush.msra.mxu0 %v687
        %1430 = vmatpush.msra.mxu0 %v683
        %1431 = vmatpush.msra.mxu0 %v679
        %1432 = vmatpush.msra.mxu0 %v675
        %1433 = vmatpush.msra.mxu0 %v671
        %1434 = vmatpush.msra.mxu0 %v667
        %1435 = vmatpush.msra.mxu0 %v663
        %1436 = vmatpush.msra.mxu0 %v659
        %1437 = vmatpush.msra.mxu0 %v655
        %1438 = vmatpush.msra.mxu0 %v651
        %1439 = vmatpush.msra.mxu0 %v647
        %1440 = vmatpush.msra.mxu0 %v643
        %1441 = vmatpush.msra.mxu0 %v639
        %1442 = vmatmul.f32.gmra.mxu0 %v384
        %v1443 = vpop.f32.mrf.mxu0
        %v1444 = vadd.f32 %v1379, %v1443
        %1445 = vmatmul.f32.gmra.mxu0 %v388
        %v1446 = vpop.f32.mrf.mxu0
        %v1447 = vadd.f32 %v1382, %v1446
        %1448 = vmatmul.f32.gmra.mxu0 %v392
        %v1449 = vpop.f32.mrf.mxu0
        %v1450 = vadd.f32 %v1385, %v1449
        %1451 = vmatmul.f32.gmra.mxu0 %v396
        %v1452 = vpop.f32.mrf.mxu0
        %v1453 = vadd.f32 %v1388, %v1452
        %1454 = vmatmul.f32.gmra.mxu0 %v400
        %v1455 = vpop.f32.mrf.mxu0
        %v1456 = vadd.f32 %v1391, %v1455
        %1457 = vmatmul.f32.gmra.mxu0 %v404
        %v1458 = vpop.f32.mrf.mxu0
        %v1459 = vadd.f32 %v1394, %v1458
        %1460 = vmatmul.f32.gmra.mxu0 %v408
        %v1461 = vpop.f32.mrf.mxu0
        %v1462 = vadd.f32 %v1397, %v1461
        %1463 = vmatmul.f32.gmra.mxu0 %v412
        %v1464 = vpop.f32.mrf.mxu0
        %v1465 = vadd.f32 %v1400, %v1464
        %1466 = vmatmul.f32.gmra.mxu0 %v416
        %v1467 = vpop.f32.mrf.mxu0
        %v1468 = vadd.f32 %v1403, %v1467
        %1469 = vmatmul.f32.gmra.mxu0 %v420
        %v1470 = vpop.f32.mrf.mxu0
        %v1471 = vadd.f32 %v1406, %v1470
        %1472 = vmatmul.f32.gmra.mxu0 %v424
        %v1473 = vpop.f32.mrf.mxu0
        %v1474 = vadd.f32 %v1409, %v1473
        %1475 = vmatmul.f32.gmra.mxu0 %v428
        %v1476 = vpop.f32.mrf.mxu0
        %v1477 = vadd.f32 %v1412, %v1476
        %1478 = vmatmul.f32.gmra.mxu0 %v432
        %v1479 = vpop.f32.mrf.mxu0
        %v1480 = vadd.f32 %v1415, %v1479
        %1481 = vmatmul.f32.gmra.mxu0 %v436
        %v1482 = vpop.f32.mrf.mxu0
        %v1483 = vadd.f32 %v1418, %v1482
        %1484 = vmatmul.f32.gmra.mxu0 %v440
        %v1485 = vpop.f32.mrf.mxu0
        %v1486 = vadd.f32 %v1421, %v1485
        %1487 = vmatmul.f32.gmra.mxu0 %v444
        %v1488 = vpop.f32.mrf.mxu0
        %v1489 = vadd.f32 %v1424, %v1488
        %1490 = vdwg.mxu0
        %1491 = vmatpush.msra.mxu0 %v508
        %1492 = vmatpush.msra.mxu0 %v504
        %1493 = vmatpush.msra.mxu0 %v500
        %1494 = vmatpush.msra.mxu0 %v496
        %1495 = vmatpush.msra.mxu0 %v492
        %1496 = vmatpush.msra.mxu0 %v488
        %1497 = vmatpush.msra.mxu0 %v484
        %1498 = vmatpush.msra.mxu0 %v480
        %1499 = vmatpush.msra.mxu0 %v476
        %1500 = vmatpush.msra.mxu0 %v472
        %1501 = vmatpush.msra.mxu0 %v468
        %1502 = vmatpush.msra.mxu0 %v464
        %1503 = vmatpush.msra.mxu0 %v460
        %1504 = vmatpush.msra.mxu0 %v456
        %1505 = vmatpush.msra.mxu0 %v452
        %1506 = vmatpush.msra.mxu0 %v448
        %1507 = vmatmul.f32.gmra.mxu0 %v381
        %v1508 = vpop.f32.mrf.mxu0
        %v1509 = vadd.f32 %v706, %v1508
        %1510 = vmatmul.f32.gmra.mxu0 %v385
        %v1511 = vpop.f32.mrf.mxu0
        %v1512 = vadd.f32 %v706, %v1511
        %1513 = vmatmul.f32.gmra.mxu0 %v389
        %v1514 = vpop.f32.mrf.mxu0
        %v1515 = vadd.f32 %v706, %v1514
        %1516 = vmatmul.f32.gmra.mxu0 %v393
        %v1517 = vpop.f32.mrf.mxu0
        %v1518 = vadd.f32 %v706, %v1517
        %1519 = vmatmul.f32.gmra.mxu0 %v397
        %v1520 = vpop.f32.mrf.mxu0
        %v1521 = vadd.f32 %v706, %v1520
        %1522 = vmatmul.f32.gmra.mxu0 %v401
        %v1523 = vpop.f32.mrf.mxu0
        %v1524 = vadd.f32 %v706, %v1523
        %1525 = vmatmul.f32.gmra.mxu0 %v405
        %v1526 = vpop.f32.mrf.mxu0
        %v1527 = vadd.f32 %v706, %v1526
        %1528 = vmatmul.f32.gmra.mxu0 %v409
        %v1529 = vpop.f32.mrf.mxu0
        %v1530 = vadd.f32 %v706, %v1529
        %1531 = vmatmul.f32.gmra.mxu0 %v413
        %v1532 = vpop.f32.mrf.mxu0
        %v1533 = vadd.f32 %v706, %v1532
        %1534 = vmatmul.f32.gmra.mxu0 %v417
        %v1535 = vpop.f32.mrf.mxu0
        %v1536 = vadd.f32 %v706, %v1535
        %1537 = vmatmul.f32.gmra.mxu0 %v421
        %v1538 = vpop.f32.mrf.mxu0
        %v1539 = vadd.f32 %v706, %v1538
        %1540 = vmatmul.f32.gmra.mxu0 %v425
        %v1541 = vpop.f32.mrf.mxu0
        %v1542 = vadd.f32 %v706, %v1541
        %1543 = vmatmul.f32.gmra.mxu0 %v429
        %v1544 = vpop.f32.mrf.mxu0
        %v1545 = vadd.f32 %v706, %v1544
        %1546 = vmatmul.f32.gmra.mxu0 %v433
        %v1547 = vpop.f32.mrf.mxu0
        %v1548 = vadd.f32 %v706, %v1547
        %1549 = vmatmul.f32.gmra.mxu0 %v437
        %v1550 = vpop.f32.mrf.mxu0
        %v1551 = vadd.f32 %v706, %v1550
        %1552 = vmatmul.f32.gmra.mxu0 %v441
        %v1553 = vpop.f32.mrf.mxu0
        %v1554 = vadd.f32 %v706, %v1553
        %1555 = vdwg.mxu0
        %1556 = vmatpush.msra.mxu0 %v572
        %1557 = vmatpush.msra.mxu0 %v568
        %1558 = vmatpush.msra.mxu0 %v564
        %1559 = vmatpush.msra.mxu0 %v560
        %1560 = vmatpush.msra.mxu0 %v556
        %1561 = vmatpush.msra.mxu0 %v552
        %1562 = vmatpush.msra.mxu0 %v548
        %1563 = vmatpush.msra.mxu0 %v544
        %1564 = vmatpush.msra.mxu0 %v540
        %1565 = vmatpush.msra.mxu0 %v536
        %1566 = vmatpush.msra.mxu0 %v532
        %1567 = vmatpush.msra.mxu0 %v528
        %1568 = vmatpush.msra.mxu0 %v524
        %1569 = vmatpush.msra.mxu0 %v520
        %1570 = vmatpush.msra.mxu0 %v516
        %1571 = vmatpush.msra.mxu0 %v512
        %1572 = vmatmul.f32.gmra.mxu0 %v382
        %v1573 = vpop.f32.mrf.mxu0
        %v1574 = vadd.f32 %v1509, %v1573
        %1575 = vmatmul.f32.gmra.mxu0 %v386
        %v1576 = vpop.f32.mrf.mxu0
        %v1577 = vadd.f32 %v1512, %v1576
        %1578 = vmatmul.f32.gmra.mxu0 %v390
        %v1579 = vpop.f32.mrf.mxu0
        %v1580 = vadd.f32 %v1515, %v1579
        %1581 = vmatmul.f32.gmra.mxu0 %v394
        %v1582 = vpop.f32.mrf.mxu0
        %v1583 = vadd.f32 %v1518, %v1582
        %1584 = vmatmul.f32.gmra.mxu0 %v398
        %v1585 = vpop.f32.mrf.mxu0
        %v1586 = vadd.f32 %v1521, %v1585
        %1587 = vmatmul.f32.gmra.mxu0 %v402
        %v1588 = vpop.f32.mrf.mxu0
        %v1589 = vadd.f32 %v1524, %v1588
        %1590 = vmatmul.f32.gmra.mxu0 %v406
        %v1591 = vpop.f32.mrf.mxu0
        %v1592 = vadd.f32 %v1527, %v1591
        %1593 = vmatmul.f32.gmra.mxu0 %v410
        %v1594 = vpop.f32.mrf.mxu0
        %v1595 = vadd.f32 %v1530, %v1594
        %1596 = vmatmul.f32.gmra.mxu0 %v414
        %v1597 = vpop.f32.mrf.mxu0
        %v1598 = vadd.f32 %v1533, %v1597
        %1599 = vmatmul.f32.gmra.mxu0 %v418
        %v1600 = vpop.f32.mrf.mxu0
        %v1601 = vadd.f32 %v1536, %v1600
        %1602 = vmatmul.f32.gmra.mxu0 %v422
        %v1603 = vpop.f32.mrf.mxu0
        %v1604 = vadd.f32 %v1539, %v1603
        %1605 = vmatmul.f32.gmra.mxu0 %v426
        %v1606 = vpop.f32.mrf.mxu0
        %v1607 = vadd.f32 %v1542, %v1606
        %1608 = vmatmul.f32.gmra.mxu0 %v430
        %v1609 = vpop.f32.mrf.mxu0
        %v1610 = vadd.f32 %v1545, %v1609
        %1611 = vmatmul.f32.gmra.mxu0 %v434
        %v1612 = vpop.f32.mrf.mxu0
        %v1613 = vadd.f32 %v1548, %v1612
        %1614 = vmatmul.f32.gmra.mxu0 %v438
        %v1615 = vpop.f32.mrf.mxu0
        %v1616 = vadd.f32 %v1551, %v1615
        %1617 = vmatmul.f32.gmra.mxu0 %v442
        %v1618 = vpop.f32.mrf.mxu0
        %v1619 = vadd.f32 %v1554, %v1618
        %1620 = vdwg.mxu0
        %1621 = vmatpush.msra.mxu0 %v636
        %1622 = vmatpush.msra.mxu0 %v632
        %1623 = vmatpush.msra.mxu0 %v628
        %1624 = vmatpush.msra.mxu0 %v624
        %1625 = vmatpush.msra.mxu0 %v620
        %1626 = vmatpush.msra.mxu0 %v616
        %1627 = vmatpush.msra.mxu0 %v612
        %1628 = vmatpush.msra.mxu0 %v608
        %1629 = vmatpush.msra.mxu0 %v604
        %1630 = vmatpush.msra.mxu0 %v600
        %1631 = vmatpush.msra.mxu0 %v596
        %1632 = vmatpush.msra.mxu0 %v592
        %1633 = vmatpush.msra.mxu0 %v588
        %1634 = vmatpush.msra.mxu0 %v584
        %1635 = vmatpush.msra.mxu0 %v580
        %1636 = vmatpush.msra.mxu0 %v576
        %1637 = vmatmul.f32.gmra.mxu0 %v383
        %v1638 = vpop.f32.mrf.mxu0
        %v1639 = vadd.f32 %v1574, %v1638
        %1640 = vmatmul.f32.gmra.mxu0 %v387
        %v1641 = vpop.f32.mrf.mxu0
        %v1642 = vadd.f32 %v1577, %v1641
        %1643 = vmatmul.f32.gmra.mxu0 %v391
        %v1644 = vpop.f32.mrf.mxu0
        %v1645 = vadd.f32 %v1580, %v1644
        %1646 = vmatmul.f32.gmra.mxu0 %v395
        %v1647 = vpop.f32.mrf.mxu0
        %v1648 = vadd.f32 %v1583, %v1647
        %1649 = vmatmul.f32.gmra.mxu0 %v399
        %v1650 = vpop.f32.mrf.mxu0
        %v1651 = vadd.f32 %v1586, %v1650
        %1652 = vmatmul.f32.gmra.mxu0 %v403
        %v1653 = vpop.f32.mrf.mxu0
        %v1654 = vadd.f32 %v1589, %v1653
        %1655 = vmatmul.f32.gmra.mxu0 %v407
        %v1656 = vpop.f32.mrf.mxu0
        %v1657 = vadd.f32 %v1592, %v1656
        %1658 = vmatmul.f32.gmra.mxu0 %v411
        %v1659 = vpop.f32.mrf.mxu0
        %v1660 = vadd.f32 %v1595, %v1659
        %1661 = vmatmul.f32.gmra.mxu0 %v415
        %v1662 = vpop.f32.mrf.mxu0
        %v1663 = vadd.f32 %v1598, %v1662
        %1664 = vmatmul.f32.gmra.mxu0 %v419
        %v1665 = vpop.f32.mrf.mxu0
        %v1666 = vadd.f32 %v1601, %v1665
        %1667 = vmatmul.f32.gmra.mxu0 %v423
        %v1668 = vpop.f32.mrf.mxu0
        %v1669 = vadd.f32 %v1604, %v1668
        %1670 = vmatmul.f32.gmra.mxu0 %v427
        %v1671 = vpop.f32.mrf.mxu0
        %v1672 = vadd.f32 %v1607, %v1671
        %1673 = vmatmul.f32.gmra.mxu0 %v431
        %v1674 = vpop.f32.mrf.mxu0
        %v1675 = vadd.f32 %v1610, %v1674
        %1676 = vmatmul.f32.gmra.mxu0 %v435
        %v1677 = vpop.f32.mrf.mxu0
        %v1678 = vadd.f32 %v1613, %v1677
        %1679 = vmatmul.f32.gmra.mxu0 %v439
        %v1680 = vpop.f32.mrf.mxu0
        %v1681 = vadd.f32 %v1616, %v1680
        %1682 = vmatmul.f32.gmra.mxu0 %v443
        %v1683 = vpop.f32.mrf.mxu0
        %v1684 = vadd.f32 %v1619, %v1683
        %1685 = vdwg.mxu0
        %1686 = vmatpush.msra.mxu0 %v700
        %1687 = vmatpush.msra.mxu0 %v696
        %1688 = vmatpush.msra.mxu0 %v692
        %1689 = vmatpush.msra.mxu0 %v688
        %1690 = vmatpush.msra.mxu0 %v684
        %1691 = vmatpush.msra.mxu0 %v680
        %1692 = vmatpush.msra.mxu0 %v676
        %1693 = vmatpush.msra.mxu0 %v672
        %1694 = vmatpush.msra.mxu0 %v668
        %1695 = vmatpush.msra.mxu0 %v664
        %1696 = vmatpush.msra.mxu0 %v660
        %1697 = vmatpush.msra.mxu0 %v656
        %1698 = vmatpush.msra.mxu0 %v652
        %1699 = vmatpush.msra.mxu0 %v648
        %1700 = vmatpush.msra.mxu0 %v644
        %1701 = vmatpush.msra.mxu0 %v640
        %1702 = vmatmul.f32.gmra.mxu0 %v384
        %v1703 = vpop.f32.mrf.mxu0
        %v1704 = vadd.f32 %v1639, %v1703
        %1705 = vmatmul.f32.gmra.mxu0 %v388
        %v1706 = vpop.f32.mrf.mxu0
        %v1707 = vadd.f32 %v1642, %v1706
        %1708 = vmatmul.f32.gmra.mxu0 %v392
        %v1709 = vpop.f32.mrf.mxu0
        %v1710 = vadd.f32 %v1645, %v1709
        %1711 = vmatmul.f32.gmra.mxu0 %v396
        %v1712 = vpop.f32.mrf.mxu0
        %v1713 = vadd.f32 %v1648, %v1712
        %1714 = vmatmul.f32.gmra.mxu0 %v400
        %v1715 = vpop.f32.mrf.mxu0
        %v1716 = vadd.f32 %v1651, %v1715
        %1717 = vmatmul.f32.gmra.mxu0 %v404
        %v1718 = vpop.f32.mrf.mxu0
        %v1719 = vadd.f32 %v1654, %v1718
        %1720 = vmatmul.f32.gmra.mxu0 %v408
        %v1721 = vpop.f32.mrf.mxu0
        %v1722 = vadd.f32 %v1657, %v1721
        %1723 = vmatmul.f32.gmra.mxu0 %v412
        %v1724 = vpop.f32.mrf.mxu0
        %v1725 = vadd.f32 %v1660, %v1724
        %1726 = vmatmul.f32.gmra.mxu0 %v416
        %v1727 = vpop.f32.mrf.mxu0
        %v1728 = vadd.f32 %v1663, %v1727
        %1729 = vmatmul.f32.gmra.mxu0 %v420
        %v1730 = vpop.f32.mrf.mxu0
        %v1731 = vadd.f32 %v1666, %v1730
        %1732 = vmatmul.f32.gmra.mxu0 %v424
        %v1733 = vpop.f32.mrf.mxu0
        %v1734 = vadd.f32 %v1669, %v1733
        %1735 = vmatmul.f32.gmra.mxu0 %v428
        %v1736 = vpop.f32.mrf.mxu0
        %v1737 = vadd.f32 %v1672, %v1736
        %1738 = vmatmul.f32.gmra.mxu0 %v432
        %v1739 = vpop.f32.mrf.mxu0
        %v1740 = vadd.f32 %v1675, %v1739
        %1741 = vmatmul.f32.gmra.mxu0 %v436
        %v1742 = vpop.f32.mrf.mxu0
        %v1743 = vadd.f32 %v1678, %v1742
        %1744 = vmatmul.f32.gmra.mxu0 %v440
        %v1745 = vpop.f32.mrf.mxu0
        %v1746 = vadd.f32 %v1681, %v1745
        %1747 = vmatmul.f32.gmra.mxu0 %v444
        %v1748 = vpop.f32.mrf.mxu0
        %v1749 = vadd.f32 %v1684, %v1748
        %1750 = vdwg.mxu0
        %v1751 = vmax.f32 %v924, 0.0
        %v1752 = vmax.f32 %v1184, 0.0
        %v1753 = vmax.f32 %v1444, 0.0
        %v1754 = vmax.f32 %v1704, 0.0
        %v1755 = vmax.f32 %v927, 0.0
        %v1756 = vmax.f32 %v1187, 0.0
        %v1757 = vmax.f32 %v1447, 0.0
        %v1758 = vmax.f32 %v1707, 0.0
        %v1759 = vmax.f32 %v930, 0.0
        %v1760 = vmax.f32 %v1190, 0.0
        %v1761 = vmax.f32 %v1450, 0.0
        %v1762 = vmax.f32 %v1710, 0.0
        %v1763 = vmax.f32 %v933, 0.0
        %v1764 = vmax.f32 %v1193, 0.0
        %v1765 = vmax.f32 %v1453, 0.0
        %v1766 = vmax.f32 %v1713, 0.0
        %v1767 = vmax.f32 %v936, 0.0
        %v1768 = vmax.f32 %v1196, 0.0
        %v1769 = vmax.f32 %v1456, 0.0
        %v1770 = vmax.f32 %v1716, 0.0
        %v1771 = vmax.f32 %v939, 0.0
        %v1772 = vmax.f32 %v1199, 0.0
        %v1773 = vmax.f32 %v1459, 0.0
        %v1774 = vmax.f32 %v1719, 0.0
        %v1775 = vmax.f32 %v942, 0.0
        %v1776 = vmax.f32 %v1202, 0.0
        %v1777 = vmax.f32 %v1462, 0.0
        %v1778 = vmax.f32 %v1722, 0.0
        %v1779 = vmax.f32 %v945, 0.0
        %v1780 = vmax.f32 %v1205, 0.0
        %v1781 = vmax.f32 %v1465, 0.0
        %v1782 = vmax.f32 %v1725, 0.0
        %v1783 = vmax.f32 %v948, 0.0
        %v1784 = vmax.f32 %v1208, 0.0
        %v1785 = vmax.f32 %v1468, 0.0
        %v1786 = vmax.f32 %v1728, 0.0
        %v1787 = vmax.f32 %v951, 0.0
        %v1788 = vmax.f32 %v1211, 0.0
        %v1789 = vmax.f32 %v1471, 0.0
        %v1790 = vmax.f32 %v1731, 0.0
        %v1791 = vmax.f32 %v954, 0.0
        %v1792 = vmax.f32 %v1214, 0.0
        %v1793 = vmax.f32 %v1474, 0.0
        %v1794 = vmax.f32 %v1734, 0.0
        %v1795 = vmax.f32 %v957, 0.0
        %v1796 = vmax.f32 %v1217, 0.0
        %v1797 = vmax.f32 %v1477, 0.0
        %v1798 = vmax.f32 %v1737, 0.0
        %v1799 = vmax.f32 %v960, 0.0
        %v1800 = vmax.f32 %v1220, 0.0
        %v1801 = vmax.f32 %v1480, 0.0
        %v1802 = vmax.f32 %v1740, 0.0
        %v1803 = vmax.f32 %v963, 0.0
        %v1804 = vmax.f32 %v1223, 0.0
        %v1805 = vmax.f32 %v1483, 0.0
        %v1806 = vmax.f32 %v1743, 0.0
        %v1807 = vmax.f32 %v966, 0.0
        %v1808 = vmax.f32 %v1226, 0.0
        %v1809 = vmax.f32 %v1486, 0.0
        %v1810 = vmax.f32 %v1746, 0.0
        %v1811 = vmax.f32 %v969, 0.0
        %v1812 = vmax.f32 %v1229, 0.0
        %v1813 = vmax.f32 %v1489, 0.0
        %v1814 = vmax.f32 %v1749, 0.0
        %v1815 = vld [vmem:[#allocation8] sm:$0xff]
        %v1816 = vld [vmem:[#allocation8 + $0x8] sm:$0xff]
        %v1817 = vld [vmem:[#allocation8 + $0x10] sm:$0xff]
        %v1818 = vld [vmem:[#allocation8 + $0x18] sm:$0xff]
        %v1819 = vld [vmem:[#allocation8 + $0x20] sm:$0xff]
        %v1820 = vld [vmem:[#allocation8 + $0x28] sm:$0xff]
        %v1821 = vld [vmem:[#allocation8 + $0x30] sm:$0xff]
        %v1822 = vld [vmem:[#allocation8 + $0x38] sm:$0xff]
        %v1823 = vld [vmem:[#allocation8 + $0x40] sm:$0xff]
        %v1824 = vld [vmem:[#allocation8 + $0x48] sm:$0xff]
        %v1825 = vld [vmem:[#allocation8 + $0x50] sm:$0xff]
        %v1826 = vld [vmem:[#allocation8 + $0x58] sm:$0xff]
        %v1827 = vld [vmem:[#allocation8 + $0x60] sm:$0xff]
        %v1828 = vld [vmem:[#allocation8 + $0x68] sm:$0xff]
        %v1829 = vld [vmem:[#allocation8 + $0x70] sm:$0xff]
        %v1830 = vld [vmem:[#allocation8 + $0x78] sm:$0xff]
        %v1831 = vld [vmem:[#allocation8 + $0x80] sm:$0xff]
        %v1832 = vld [vmem:[#allocation8 + $0x88] sm:$0xff]
        %v1833 = vld [vmem:[#allocation8 + $0x90] sm:$0xff]
        %v1834 = vld [vmem:[#allocation8 + $0x98] sm:$0xff]
        %v1835 = vld [vmem:[#allocation8 + $0xa0] sm:$0xff]
        %v1836 = vld [vmem:[#allocation8 + $0xa8] sm:$0xff]
        %v1837 = vld [vmem:[#allocation8 + $0xb0] sm:$0xff]
        %v1838 = vld [vmem:[#allocation8 + $0xb8] sm:$0xff]
        %v1839 = vld [vmem:[#allocation8 + $0xc0] sm:$0xff]
        %v1840 = vld [vmem:[#allocation8 + $0xc8] sm:$0xff]
        %v1841 = vld [vmem:[#allocation8 + $0xd0] sm:$0xff]
        %v1842 = vld [vmem:[#allocation8 + $0xd8] sm:$0xff]
        %v1843 = vld [vmem:[#allocation8 + $0xe0] sm:$0xff]
        %v1844 = vld [vmem:[#allocation8 + $0xe8] sm:$0xff]
        %v1845 = vld [vmem:[#allocation8 + $0xf0] sm:$0xff]
        %v1846 = vld [vmem:[#allocation8 + $0xf8] sm:$0xff]
        %v1847 = vld [vmem:[#allocation8 + $0x100] sm:$0xff]
        %v1848 = vld [vmem:[#allocation8 + $0x108] sm:$0xff]
        %v1849 = vld [vmem:[#allocation8 + $0x110] sm:$0xff]
        %v1850 = vld [vmem:[#allocation8 + $0x118] sm:$0xff]
        %v1851 = vld [vmem:[#allocation8 + $0x120] sm:$0xff]
        %v1852 = vld [vmem:[#allocation8 + $0x128] sm:$0xff]
        %v1853 = vld [vmem:[#allocation8 + $0x130] sm:$0xff]
        %v1854 = vld [vmem:[#allocation8 + $0x138] sm:$0xff]
        %v1855 = vld [vmem:[#allocation8 + $0x140] sm:$0xff]
        %v1856 = vld [vmem:[#allocation8 + $0x148] sm:$0xff]
        %v1857 = vld [vmem:[#allocation8 + $0x150] sm:$0xff]
        %v1858 = vld [vmem:[#allocation8 + $0x158] sm:$0xff]
        %v1859 = vld [vmem:[#allocation8 + $0x160] sm:$0xff]
        %v1860 = vld [vmem:[#allocation8 + $0x168] sm:$0xff]
        %v1861 = vld [vmem:[#allocation8 + $0x170] sm:$0xff]
        %v1862 = vld [vmem:[#allocation8 + $0x178] sm:$0xff]
        %v1863 = vld [vmem:[#allocation8 + $0x180] sm:$0xff]
        %v1864 = vld [vmem:[#allocation8 + $0x188] sm:$0xff]
        %v1865 = vld [vmem:[#allocation8 + $0x190] sm:$0xff]
        %v1866 = vld [vmem:[#allocation8 + $0x198] sm:$0xff]
        %v1867 = vld [vmem:[#allocation8 + $0x1a0] sm:$0xff]
        %v1868 = vld [vmem:[#allocation8 + $0x1a8] sm:$0xff]
        %v1869 = vld [vmem:[#allocation8 + $0x1b0] sm:$0xff]
        %v1870 = vld [vmem:[#allocation8 + $0x1b8] sm:$0xff]
        %v1871 = vld [vmem:[#allocation8 + $0x1c0] sm:$0xff]
        %v1872 = vld [vmem:[#allocation8 + $0x1c8] sm:$0xff]
        %v1873 = vld [vmem:[#allocation8 + $0x1d0] sm:$0xff]
        %v1874 = vld [vmem:[#allocation8 + $0x1d8] sm:$0xff]
        %v1875 = vld [vmem:[#allocation8 + $0x1e0] sm:$0xff]
        %v1876 = vld [vmem:[#allocation8 + $0x1e8] sm:$0xff]
        %v1877 = vld [vmem:[#allocation8 + $0x1f0] sm:$0xff]
        %v1878 = vld [vmem:[#allocation8 + $0x1f8] sm:$0xff]
        %v1879 = vld [vmem:[#allocation8 + $0x200] sm:$0xff]
        %v1880 = vld [vmem:[#allocation8 + $0x208] sm:$0xff]
        %v1881 = vld [vmem:[#allocation8 + $0x210] sm:$0xff]
        %v1882 = vld [vmem:[#allocation8 + $0x218] sm:$0xff]
        %v1883 = vld [vmem:[#allocation8 + $0x220] sm:$0xff]
        %v1884 = vld [vmem:[#allocation8 + $0x228] sm:$0xff]
        %v1885 = vld [vmem:[#allocation8 + $0x230] sm:$0xff]
        %v1886 = vld [vmem:[#allocation8 + $0x238] sm:$0xff]
        %v1887 = vld [vmem:[#allocation8 + $0x240] sm:$0xff]
        %v1888 = vld [vmem:[#allocation8 + $0x248] sm:$0xff]
        %v1889 = vld [vmem:[#allocation8 + $0x250] sm:$0xff]
        %v1890 = vld [vmem:[#allocation8 + $0x258] sm:$0xff]
        %v1891 = vld [vmem:[#allocation8 + $0x260] sm:$0xff]
        %v1892 = vld [vmem:[#allocation8 + $0x268] sm:$0xff]
        %v1893 = vld [vmem:[#allocation8 + $0x270] sm:$0xff]
        %v1894 = vld [vmem:[#allocation8 + $0x278] sm:$0xff]
        %v1895 = vld [vmem:[#allocation8 + $0x280] sm:$0xff]
        %v1896 = vld [vmem:[#allocation8 + $0x288] sm:$0xff]
        %v1897 = vld [vmem:[#allocation8 + $0x290] sm:$0xff]
        %v1898 = vld [vmem:[#allocation8 + $0x298] sm:$0xff]
        %v1899 = vld [vmem:[#allocation8 + $0x2a0] sm:$0xff]
        %v1900 = vld [vmem:[#allocation8 + $0x2a8] sm:$0xff]
        %v1901 = vld [vmem:[#allocation8 + $0x2b0] sm:$0xff]
        %v1902 = vld [vmem:[#allocation8 + $0x2b8] sm:$0xff]
        %v1903 = vld [vmem:[#allocation8 + $0x2c0] sm:$0xff]
        %v1904 = vld [vmem:[#allocation8 + $0x2c8] sm:$0xff]
        %v1905 = vld [vmem:[#allocation8 + $0x2d0] sm:$0xff]
        %v1906 = vld [vmem:[#allocation8 + $0x2d8] sm:$0xff]
        %v1907 = vld [vmem:[#allocation8 + $0x2e0] sm:$0xff]
        %v1908 = vld [vmem:[#allocation8 + $0x2e8] sm:$0xff]
        %v1909 = vld [vmem:[#allocation8 + $0x2f0] sm:$0xff]
        %v1910 = vld [vmem:[#allocation8 + $0x2f8] sm:$0xff]
        %v1911 = vld [vmem:[#allocation8 + $0x300] sm:$0xff]
        %v1912 = vld [vmem:[#allocation8 + $0x308] sm:$0xff]
        %v1913 = vld [vmem:[#allocation8 + $0x310] sm:$0xff]
        %v1914 = vld [vmem:[#allocation8 + $0x318] sm:$0xff]
        %v1915 = vld [vmem:[#allocation8 + $0x320] sm:$0xff]
        %v1916 = vld [vmem:[#allocation8 + $0x328] sm:$0xff]
        %v1917 = vld [vmem:[#allocation8 + $0x330] sm:$0xff]
        %v1918 = vld [vmem:[#allocation8 + $0x338] sm:$0xff]
        %v1919 = vld [vmem:[#allocation8 + $0x340] sm:$0xff]
        %v1920 = vld [vmem:[#allocation8 + $0x348] sm:$0xff]
        %v1921 = vld [vmem:[#allocation8 + $0x350] sm:$0xff]
        %v1922 = vld [vmem:[#allocation8 + $0x358] sm:$0xff]
        %v1923 = vld [vmem:[#allocation8 + $0x360] sm:$0xff]
        %v1924 = vld [vmem:[#allocation8 + $0x368] sm:$0xff]
        %v1925 = vld [vmem:[#allocation8 + $0x370] sm:$0xff]
        %v1926 = vld [vmem:[#allocation8 + $0x378] sm:$0xff]
        %v1927 = vld [vmem:[#allocation8 + $0x380] sm:$0xff]
        %v1928 = vld [vmem:[#allocation8 + $0x388] sm:$0xff]
        %v1929 = vld [vmem:[#allocation8 + $0x390] sm:$0xff]
        %v1930 = vld [vmem:[#allocation8 + $0x398] sm:$0xff]
        %v1931 = vld [vmem:[#allocation8 + $0x3a0] sm:$0xff]
        %v1932 = vld [vmem:[#allocation8 + $0x3a8] sm:$0xff]
        %v1933 = vld [vmem:[#allocation8 + $0x3b0] sm:$0xff]
        %v1934 = vld [vmem:[#allocation8 + $0x3b8] sm:$0xff]
        %v1935 = vld [vmem:[#allocation8 + $0x3c0] sm:$0xff]
        %v1936 = vld [vmem:[#allocation8 + $0x3c8] sm:$0xff]
        %v1937 = vld [vmem:[#allocation8 + $0x3d0] sm:$0xff]
        %v1938 = vld [vmem:[#allocation8 + $0x3d8] sm:$0xff]
        %v1939 = vld [vmem:[#allocation8 + $0x3e0] sm:$0xff]
        %v1940 = vld [vmem:[#allocation8 + $0x3e8] sm:$0xff]
        %v1941 = vld [vmem:[#allocation8 + $0x3f0] sm:$0xff]
        %v1942 = vld [vmem:[#allocation8 + $0x3f8] sm:$0xff]
        %v1943 = vld [vmem:[#allocation8 + $0x400] sm:$0xff]
        %v1944 = vld [vmem:[#allocation8 + $0x408] sm:$0xff]
        %v1945 = vld [vmem:[#allocation8 + $0x410] sm:$0xff]
        %v1946 = vld [vmem:[#allocation8 + $0x418] sm:$0xff]
        %v1947 = vld [vmem:[#allocation8 + $0x420] sm:$0xff]
        %v1948 = vld [vmem:[#allocation8 + $0x428] sm:$0xff]
        %v1949 = vld [vmem:[#allocation8 + $0x430] sm:$0xff]
        %v1950 = vld [vmem:[#allocation8 + $0x438] sm:$0xff]
        %v1951 = vld [vmem:[#allocation8 + $0x440] sm:$0xff]
        %v1952 = vld [vmem:[#allocation8 + $0x448] sm:$0xff]
        %v1953 = vld [vmem:[#allocation8 + $0x450] sm:$0xff]
        %v1954 = vld [vmem:[#allocation8 + $0x458] sm:$0xff]
        %v1955 = vld [vmem:[#allocation8 + $0x460] sm:$0xff]
        %v1956 = vld [vmem:[#allocation8 + $0x468] sm:$0xff]
        %v1957 = vld [vmem:[#allocation8 + $0x470] sm:$0xff]
        %v1958 = vld [vmem:[#allocation8 + $0x478] sm:$0xff]
        %v1959 = vld [vmem:[#allocation8 + $0x480] sm:$0xff]
        %v1960 = vld [vmem:[#allocation8 + $0x488] sm:$0xff]
        %v1961 = vld [vmem:[#allocation8 + $0x490] sm:$0xff]
        %v1962 = vld [vmem:[#allocation8 + $0x498] sm:$0xff]
        %v1963 = vld [vmem:[#allocation8 + $0x4a0] sm:$0xff]
        %v1964 = vld [vmem:[#allocation8 + $0x4a8] sm:$0xff]
        %v1965 = vld [vmem:[#allocation8 + $0x4b0] sm:$0xff]
        %v1966 = vld [vmem:[#allocation8 + $0x4b8] sm:$0xff]
        %v1967 = vld [vmem:[#allocation8 + $0x4c0] sm:$0xff]
        %v1968 = vld [vmem:[#allocation8 + $0x4c8] sm:$0xff]
        %v1969 = vld [vmem:[#allocation8 + $0x4d0] sm:$0xff]
        %v1970 = vld [vmem:[#allocation8 + $0x4d8] sm:$0xff]
        %v1971 = vld [vmem:[#allocation8 + $0x4e0] sm:$0xff]
        %v1972 = vld [vmem:[#allocation8 + $0x4e8] sm:$0xff]
        %v1973 = vld [vmem:[#allocation8 + $0x4f0] sm:$0xff]
        %v1974 = vld [vmem:[#allocation8 + $0x4f8] sm:$0xff]
        %v1975 = vld [vmem:[#allocation8 + $0x500] sm:$0xff]
        %v1976 = vld [vmem:[#allocation8 + $0x508] sm:$0xff]
        %v1977 = vld [vmem:[#allocation8 + $0x510] sm:$0xff]
        %v1978 = vld [vmem:[#allocation8 + $0x518] sm:$0xff]
        %v1979 = vld [vmem:[#allocation8 + $0x520] sm:$0xff]
        %v1980 = vld [vmem:[#allocation8 + $0x528] sm:$0xff]
        %v1981 = vld [vmem:[#allocation8 + $0x530] sm:$0xff]
        %v1982 = vld [vmem:[#allocation8 + $0x538] sm:$0xff]
        %v1983 = vld [vmem:[#allocation8 + $0x540] sm:$0xff]
        %v1984 = vld [vmem:[#allocation8 + $0x548] sm:$0xff]
        %v1985 = vld [vmem:[#allocation8 + $0x550] sm:$0xff]
        %v1986 = vld [vmem:[#allocation8 + $0x558] sm:$0xff]
        %v1987 = vld [vmem:[#allocation8 + $0x560] sm:$0xff]
        %v1988 = vld [vmem:[#allocation8 + $0x568] sm:$0xff]
        %v1989 = vld [vmem:[#allocation8 + $0x570] sm:$0xff]
        %v1990 = vld [vmem:[#allocation8 + $0x578] sm:$0xff]
        %v1991 = vld [vmem:[#allocation8 + $0x580] sm:$0xff]
        %v1992 = vld [vmem:[#allocation8 + $0x588] sm:$0xff]
        %v1993 = vld [vmem:[#allocation8 + $0x590] sm:$0xff]
        %v1994 = vld [vmem:[#allocation8 + $0x598] sm:$0xff]
        %v1995 = vld [vmem:[#allocation8 + $0x5a0] sm:$0xff]
        %v1996 = vld [vmem:[#allocation8 + $0x5a8] sm:$0xff]
        %v1997 = vld [vmem:[#allocation8 + $0x5b0] sm:$0xff]
        %v1998 = vld [vmem:[#allocation8 + $0x5b8] sm:$0xff]
        %v1999 = vld [vmem:[#allocation8 + $0x5c0] sm:$0xff]
        %v2000 = vld [vmem:[#allocation8 + $0x5c8] sm:$0xff]
        %v2001 = vld [vmem:[#allocation8 + $0x5d0] sm:$0xff]
        %v2002 = vld [vmem:[#allocation8 + $0x5d8] sm:$0xff]
        %v2003 = vld [vmem:[#allocation8 + $0x5e0] sm:$0xff]
        %v2004 = vld [vmem:[#allocation8 + $0x5e8] sm:$0xff]
        %v2005 = vld [vmem:[#allocation8 + $0x5f0] sm:$0xff]
        %v2006 = vld [vmem:[#allocation8 + $0x5f8] sm:$0xff]
        %v2007 = vld [vmem:[#allocation8 + $0x600] sm:$0xff]
        %v2008 = vld [vmem:[#allocation8 + $0x608] sm:$0xff]
        %v2009 = vld [vmem:[#allocation8 + $0x610] sm:$0xff]
        %v2010 = vld [vmem:[#allocation8 + $0x618] sm:$0xff]
        %v2011 = vld [vmem:[#allocation8 + $0x620] sm:$0xff]
        %v2012 = vld [vmem:[#allocation8 + $0x628] sm:$0xff]
        %v2013 = vld [vmem:[#allocation8 + $0x630] sm:$0xff]
        %v2014 = vld [vmem:[#allocation8 + $0x638] sm:$0xff]
        %v2015 = vld [vmem:[#allocation8 + $0x640] sm:$0xff]
        %v2016 = vld [vmem:[#allocation8 + $0x648] sm:$0xff]
        %v2017 = vld [vmem:[#allocation8 + $0x650] sm:$0xff]
        %v2018 = vld [vmem:[#allocation8 + $0x658] sm:$0xff]
        %v2019 = vld [vmem:[#allocation8 + $0x660] sm:$0xff]
        %v2020 = vld [vmem:[#allocation8 + $0x668] sm:$0xff]
        %v2021 = vld [vmem:[#allocation8 + $0x670] sm:$0xff]
        %v2022 = vld [vmem:[#allocation8 + $0x678] sm:$0xff]
        %v2023 = vld [vmem:[#allocation8 + $0x680] sm:$0xff]
        %v2024 = vld [vmem:[#allocation8 + $0x688] sm:$0xff]
        %v2025 = vld [vmem:[#allocation8 + $0x690] sm:$0xff]
        %v2026 = vld [vmem:[#allocation8 + $0x698] sm:$0xff]
        %v2027 = vld [vmem:[#allocation8 + $0x6a0] sm:$0xff]
        %v2028 = vld [vmem:[#allocation8 + $0x6a8] sm:$0xff]
        %v2029 = vld [vmem:[#allocation8 + $0x6b0] sm:$0xff]
        %v2030 = vld [vmem:[#allocation8 + $0x6b8] sm:$0xff]
        %v2031 = vld [vmem:[#allocation8 + $0x6c0] sm:$0xff]
        %v2032 = vld [vmem:[#allocation8 + $0x6c8] sm:$0xff]
        %v2033 = vld [vmem:[#allocation8 + $0x6d0] sm:$0xff]
        %v2034 = vld [vmem:[#allocation8 + $0x6d8] sm:$0xff]
        %v2035 = vld [vmem:[#allocation8 + $0x6e0] sm:$0xff]
        %v2036 = vld [vmem:[#allocation8 + $0x6e8] sm:$0xff]
        %v2037 = vld [vmem:[#allocation8 + $0x6f0] sm:$0xff]
        %v2038 = vld [vmem:[#allocation8 + $0x6f8] sm:$0xff]
        %v2039 = vld [vmem:[#allocation8 + $0x700] sm:$0xff]
        %v2040 = vld [vmem:[#allocation8 + $0x708] sm:$0xff]
        %v2041 = vld [vmem:[#allocation8 + $0x710] sm:$0xff]
        %v2042 = vld [vmem:[#allocation8 + $0x718] sm:$0xff]
        %v2043 = vld [vmem:[#allocation8 + $0x720] sm:$0xff]
        %v2044 = vld [vmem:[#allocation8 + $0x728] sm:$0xff]
        %v2045 = vld [vmem:[#allocation8 + $0x730] sm:$0xff]
        %v2046 = vld [vmem:[#allocation8 + $0x738] sm:$0xff]
        %v2047 = vld [vmem:[#allocation8 + $0x740] sm:$0xff]
        %v2048 = vld [vmem:[#allocation8 + $0x748] sm:$0xff]
        %v2049 = vld [vmem:[#allocation8 + $0x750] sm:$0xff]
        %v2050 = vld [vmem:[#allocation8 + $0x758] sm:$0xff]
        %v2051 = vld [vmem:[#allocation8 + $0x760] sm:$0xff]
        %v2052 = vld [vmem:[#allocation8 + $0x768] sm:$0xff]
        %v2053 = vld [vmem:[#allocation8 + $0x770] sm:$0xff]
        %v2054 = vld [vmem:[#allocation8 + $0x778] sm:$0xff]
        %v2055 = vld [vmem:[#allocation8 + $0x780] sm:$0xff]
        %v2056 = vld [vmem:[#allocation8 + $0x788] sm:$0xff]
        %v2057 = vld [vmem:[#allocation8 + $0x790] sm:$0xff]
        %v2058 = vld [vmem:[#allocation8 + $0x798] sm:$0xff]
        %v2059 = vld [vmem:[#allocation8 + $0x7a0] sm:$0xff]
        %v2060 = vld [vmem:[#allocation8 + $0x7a8] sm:$0xff]
        %v2061 = vld [vmem:[#allocation8 + $0x7b0] sm:$0xff]
        %v2062 = vld [vmem:[#allocation8 + $0x7b8] sm:$0xff]
        %v2063 = vld [vmem:[#allocation8 + $0x7c0] sm:$0xff]
        %v2064 = vld [vmem:[#allocation8 + $0x7c8] sm:$0xff]
        %v2065 = vld [vmem:[#allocation8 + $0x7d0] sm:$0xff]
        %v2066 = vld [vmem:[#allocation8 + $0x7d8] sm:$0xff]
        %v2067 = vld [vmem:[#allocation8 + $0x7e0] sm:$0xff]
        %v2068 = vld [vmem:[#allocation8 + $0x7e8] sm:$0xff]
        %v2069 = vld [vmem:[#allocation8 + $0x7f0] sm:$0xff]
        %v2070 = vld [vmem:[#allocation8 + $0x7f8] sm:$0xff]
        %v2071 = vld [vmem:[#allocation10] sm:$0xf]
        %v2073 = vperm.slane %v2071, 0
        %v2074 = vperm.slane %v2071, 1
        %v2075 = vperm.slane %v2071, 2
        %v2076 = vperm.slane %v2071, 3
        %2081 = vmatpush.msra.mxu0 %v1875
        %2082 = vmatpush.msra.mxu0 %v1871
        %2083 = vmatpush.msra.mxu0 %v1867
        %2084 = vmatpush.msra.mxu0 %v1863
        %2085 = vmatpush.msra.mxu0 %v1859
        %2086 = vmatpush.msra.mxu0 %v1855
        %2087 = vmatpush.msra.mxu0 %v1851
        %2088 = vmatpush.msra.mxu0 %v1847
        %2089 = vmatpush.msra.mxu0 %v1843
        %2090 = vmatpush.msra.mxu0 %v1839
        %2091 = vmatpush.msra.mxu0 %v1835
        %2092 = vmatpush.msra.mxu0 %v1831
        %2093 = vmatpush.msra.mxu0 %v1827
        %2094 = vmatpush.msra.mxu0 %v1823
        %2095 = vmatpush.msra.mxu0 %v1819
        %2096 = vmatpush.msra.mxu0 %v1815
        %2097 = vmatmul.f32.gmra.mxu0 %v1751
        %v2098 = vpop.f32.mrf.mxu0
        %v2099 = vadd.f32 %v2073, %v2098
        %2100 = vmatmul.f32.gmra.mxu0 %v1755
        %v2101 = vpop.f32.mrf.mxu0
        %v2102 = vadd.f32 %v2073, %v2101
        %2103 = vmatmul.f32.gmra.mxu0 %v1759
        %v2104 = vpop.f32.mrf.mxu0
        %v2105 = vadd.f32 %v2073, %v2104
        %2106 = vmatmul.f32.gmra.mxu0 %v1763
        %v2107 = vpop.f32.mrf.mxu0
        %v2108 = vadd.f32 %v2073, %v2107
        %2109 = vmatmul.f32.gmra.mxu0 %v1767
        %v2110 = vpop.f32.mrf.mxu0
        %v2111 = vadd.f32 %v2073, %v2110
        %2112 = vmatmul.f32.gmra.mxu0 %v1771
        %v2113 = vpop.f32.mrf.mxu0
        %v2114 = vadd.f32 %v2073, %v2113
        %2115 = vmatmul.f32.gmra.mxu0 %v1775
        %v2116 = vpop.f32.mrf.mxu0
        %v2117 = vadd.f32 %v2073, %v2116
        %2118 = vmatmul.f32.gmra.mxu0 %v1779
        %v2119 = vpop.f32.mrf.mxu0
        %v2120 = vadd.f32 %v2073, %v2119
        %2121 = vmatmul.f32.gmra.mxu0 %v1783
        %v2122 = vpop.f32.mrf.mxu0
        %v2123 = vadd.f32 %v2073, %v2122
        %2124 = vmatmul.f32.gmra.mxu0 %v1787
        %v2125 = vpop.f32.mrf.mxu0
        %v2126 = vadd.f32 %v2073, %v2125
        %2127 = vmatmul.f32.gmra.mxu0 %v1791
        %v2128 = vpop.f32.mrf.mxu0
        %v2129 = vadd.f32 %v2073, %v2128
        %2130 = vmatmul.f32.gmra.mxu0 %v1795
        %v2131 = vpop.f32.mrf.mxu0
        %v2132 = vadd.f32 %v2073, %v2131
        %2133 = vmatmul.f32.gmra.mxu0 %v1799
        %v2134 = vpop.f32.mrf.mxu0
        %v2135 = vadd.f32 %v2073, %v2134
        %2136 = vmatmul.f32.gmra.mxu0 %v1803
        %v2137 = vpop.f32.mrf.mxu0
        %v2138 = vadd.f32 %v2073, %v2137
        %2139 = vmatmul.f32.gmra.mxu0 %v1807
        %v2140 = vpop.f32.mrf.mxu0
        %v2141 = vadd.f32 %v2073, %v2140
        %2142 = vmatmul.f32.gmra.mxu0 %v1811
        %v2143 = vpop.f32.mrf.mxu0
        %v2144 = vadd.f32 %v2073, %v2143
        %2145 = vdwg.mxu0
        %2146 = vmatpush.msra.mxu0 %v1939
        %2147 = vmatpush.msra.mxu0 %v1935
        %2148 = vmatpush.msra.mxu0 %v1931
        %2149 = vmatpush.msra.mxu0 %v1927
        %2150 = vmatpush.msra.mxu0 %v1923
        %2151 = vmatpush.msra.mxu0 %v1919
        %2152 = vmatpush.msra.mxu0 %v1915
        %2153 = vmatpush.msra.mxu0 %v1911
        %2154 = vmatpush.msra.mxu0 %v1907
        %2155 = vmatpush.msra.mxu0 %v1903
        %2156 = vmatpush.msra.mxu0 %v1899
        %2157 = vmatpush.msra.mxu0 %v1895
        %2158 = vmatpush.msra.mxu0 %v1891
        %2159 = vmatpush.msra.mxu0 %v1887
        %2160 = vmatpush.msra.mxu0 %v1883
        %2161 = vmatpush.msra.mxu0 %v1879
        %2162 = vmatmul.f32.gmra.mxu0 %v1752
        %v2163 = vpop.f32.mrf.mxu0
        %v2164 = vadd.f32 %v2099, %v2163
        %2165 = vmatmul.f32.gmra.mxu0 %v1756
        %v2166 = vpop.f32.mrf.mxu0
        %v2167 = vadd.f32 %v2102, %v2166
        %2168 = vmatmul.f32.gmra.mxu0 %v1760
        %v2169 = vpop.f32.mrf.mxu0
        %v2170 = vadd.f32 %v2105, %v2169
        %2171 = vmatmul.f32.gmra.mxu0 %v1764
        %v2172 = vpop.f32.mrf.mxu0
        %v2173 = vadd.f32 %v2108, %v2172
        %2174 = vmatmul.f32.gmra.mxu0 %v1768
        %v2175 = vpop.f32.mrf.mxu0
        %v2176 = vadd.f32 %v2111, %v2175
        %2177 = vmatmul.f32.gmra.mxu0 %v1772
        %v2178 = vpop.f32.mrf.mxu0
        %v2179 = vadd.f32 %v2114, %v2178
        %2180 = vmatmul.f32.gmra.mxu0 %v1776
        %v2181 = vpop.f32.mrf.mxu0
        %v2182 = vadd.f32 %v2117, %v2181
        %2183 = vmatmul.f32.gmra.mxu0 %v1780
        %v2184 = vpop.f32.mrf.mxu0
        %v2185 = vadd.f32 %v2120, %v2184
        %2186 = vmatmul.f32.gmra.mxu0 %v1784
        %v2187 = vpop.f32.mrf.mxu0
        %v2188 = vadd.f32 %v2123, %v2187
        %2189 = vmatmul.f32.gmra.mxu0 %v1788
        %v2190 = vpop.f32.mrf.mxu0
        %v2191 = vadd.f32 %v2126, %v2190
        %2192 = vmatmul.f32.gmra.mxu0 %v1792
        %v2193 = vpop.f32.mrf.mxu0
        %v2194 = vadd.f32 %v2129, %v2193
        %2195 = vmatmul.f32.gmra.mxu0 %v1796
        %v2196 = vpop.f32.mrf.mxu0
        %v2197 = vadd.f32 %v2132, %v2196
        %2198 = vmatmul.f32.gmra.mxu0 %v1800
        %v2199 = vpop.f32.mrf.mxu0
        %v2200 = vadd.f32 %v2135, %v2199
        %2201 = vmatmul.f32.gmra.mxu0 %v1804
        %v2202 = vpop.f32.mrf.mxu0
        %v2203 = vadd.f32 %v2138, %v2202
        %2204 = vmatmul.f32.gmra.mxu0 %v1808
        %v2205 = vpop.f32.mrf.mxu0
        %v2206 = vadd.f32 %v2141, %v2205
        %2207 = vmatmul.f32.gmra.mxu0 %v1812
        %v2208 = vpop.f32.mrf.mxu0
        %v2209 = vadd.f32 %v2144, %v2208
        %2210 = vdwg.mxu0
        %2211 = vmatpush.msra.mxu0 %v2003
        %2212 = vmatpush.msra.mxu0 %v1999
        %2213 = vmatpush.msra.mxu0 %v1995
        %2214 = vmatpush.msra.mxu0 %v1991
        %2215 = vmatpush.msra.mxu0 %v1987
        %2216 = vmatpush.msra.mxu0 %v1983
        %2217 = vmatpush.msra.mxu0 %v1979
        %2218 = vmatpush.msra.mxu0 %v1975
        %2219 = vmatpush.msra.mxu0 %v1971
        %2220 = vmatpush.msra.mxu0 %v1967
        %2221 = vmatpush.msra.mxu0 %v1963
        %2222 = vmatpush.msra.mxu0 %v1959
        %2223 = vmatpush.msra.mxu0 %v1955
        %2224 = vmatpush.msra.mxu0 %v1951
        %2225 = vmatpush.msra.mxu0 %v1947
        %2226 = vmatpush.msra.mxu0 %v1943
        %2227 = vmatmul.f32.gmra.mxu0 %v1753
        %v2228 = vpop.f32.mrf.mxu0
        %v2229 = vadd.f32 %v2164, %v2228
        %2230 = vmatmul.f32.gmra.mxu0 %v1757
        %v2231 = vpop.f32.mrf.mxu0
        %v2232 = vadd.f32 %v2167, %v2231
        %2233 = vmatmul.f32.gmra.mxu0 %v1761
        %v2234 = vpop.f32.mrf.mxu0
        %v2235 = vadd.f32 %v2170, %v2234
        %2236 = vmatmul.f32.gmra.mxu0 %v1765
        %v2237 = vpop.f32.mrf.mxu0
        %v2238 = vadd.f32 %v2173, %v2237
        %2239 = vmatmul.f32.gmra.mxu0 %v1769
        %v2240 = vpop.f32.mrf.mxu0
        %v2241 = vadd.f32 %v2176, %v2240
        %2242 = vmatmul.f32.gmra.mxu0 %v1773
        %v2243 = vpop.f32.mrf.mxu0
        %v2244 = vadd.f32 %v2179, %v2243
        %2245 = vmatmul.f32.gmra.mxu0 %v1777
        %v2246 = vpop.f32.mrf.mxu0
        %v2247 = vadd.f32 %v2182, %v2246
        %2248 = vmatmul.f32.gmra.mxu0 %v1781
        %v2249 = vpop.f32.mrf.mxu0
        %v2250 = vadd.f32 %v2185, %v2249
        %2251 = vmatmul.f32.gmra.mxu0 %v1785
        %v2252 = vpop.f32.mrf.mxu0
        %v2253 = vadd.f32 %v2188, %v2252
        %2254 = vmatmul.f32.gmra.mxu0 %v1789
        %v2255 = vpop.f32.mrf.mxu0
        %v2256 = vadd.f32 %v2191, %v2255
        %2257 = vmatmul.f32.gmra.mxu0 %v1793
        %v2258 = vpop.f32.mrf.mxu0
        %v2259 = vadd.f32 %v2194, %v2258
        %2260 = vmatmul.f32.gmra.mxu0 %v1797
        %v2261 = vpop.f32.mrf.mxu0
        %v2262 = vadd.f32 %v2197, %v2261
        %2263 = vmatmul.f32.gmra.mxu0 %v1801
        %v2264 = vpop.f32.mrf.mxu0
        %v2265 = vadd.f32 %v2200, %v2264
        %2266 = vmatmul.f32.gmra.mxu0 %v1805
        %v2267 = vpop.f32.mrf.mxu0
        %v2268 = vadd.f32 %v2203, %v2267
        %2269 = vmatmul.f32.gmra.mxu0 %v1809
        %v2270 = vpop.f32.mrf.mxu0
        %v2271 = vadd.f32 %v2206, %v2270
        %2272 = vmatmul.f32.gmra.mxu0 %v1813
        %v2273 = vpop.f32.mrf.mxu0
        %v2274 = vadd.f32 %v2209, %v2273
        %2275 = vdwg.mxu0
        %2276 = vmatpush.msra.mxu0 %v2067
        %2277 = vmatpush.msra.mxu0 %v2063
        %2278 = vmatpush.msra.mxu0 %v2059
        %2279 = vmatpush.msra.mxu0 %v2055
        %2280 = vmatpush.msra.mxu0 %v2051
        %2281 = vmatpush.msra.mxu0 %v2047
        %2282 = vmatpush.msra.mxu0 %v2043
        %2283 = vmatpush.msra.mxu0 %v2039
        %2284 = vmatpush.msra.mxu0 %v2035
        %2285 = vmatpush.msra.mxu0 %v2031
        %2286 = vmatpush.msra.mxu0 %v2027
        %2287 = vmatpush.msra.mxu0 %v2023
        %2288 = vmatpush.msra.mxu0 %v2019
        %2289 = vmatpush.msra.mxu0 %v2015
        %2290 = vmatpush.msra.mxu0 %v2011
        %2291 = vmatpush.msra.mxu0 %v2007
        %2292 = vmatmul.f32.gmra.mxu0 %v1754
        %v2293 = vpop.f32.mrf.mxu0
        %v2294 = vadd.f32 %v2229, %v2293
        %2295 = vmatmul.f32.gmra.mxu0 %v1758
        %v2296 = vpop.f32.mrf.mxu0
        %v2297 = vadd.f32 %v2232, %v2296
        %2298 = vmatmul.f32.gmra.mxu0 %v1762
        %v2299 = vpop.f32.mrf.mxu0
        %v2300 = vadd.f32 %v2235, %v2299
        %2301 = vmatmul.f32.gmra.mxu0 %v1766
        %v2302 = vpop.f32.mrf.mxu0
        %v2303 = vadd.f32 %v2238, %v2302
        %2304 = vmatmul.f32.gmra.mxu0 %v1770
        %v2305 = vpop.f32.mrf.mxu0
        %v2306 = vadd.f32 %v2241, %v2305
        %2307 = vmatmul.f32.gmra.mxu0 %v1774
        %v2308 = vpop.f32.mrf.mxu0
        %v2309 = vadd.f32 %v2244, %v2308
        %2310 = vmatmul.f32.gmra.mxu0 %v1778
        %v2311 = vpop.f32.mrf.mxu0
        %v2312 = vadd.f32 %v2247, %v2311
        %2313 = vmatmul.f32.gmra.mxu0 %v1782
        %v2314 = vpop.f32.mrf.mxu0
        %v2315 = vadd.f32 %v2250, %v2314
        %2316 = vmatmul.f32.gmra.mxu0 %v1786
        %v2317 = vpop.f32.mrf.mxu0
        %v2318 = vadd.f32 %v2253, %v2317
        %2319 = vmatmul.f32.gmra.mxu0 %v1790
        %v2320 = vpop.f32.mrf.mxu0
        %v2321 = vadd.f32 %v2256, %v2320
        %2322 = vmatmul.f32.gmra.mxu0 %v1794
        %v2323 = vpop.f32.mrf.mxu0
        %v2324 = vadd.f32 %v2259, %v2323
        %2325 = vmatmul.f32.gmra.mxu0 %v1798
        %v2326 = vpop.f32.mrf.mxu0
        %v2327 = vadd.f32 %v2262, %v2326
        %2328 = vmatmul.f32.gmra.mxu0 %v1802
        %v2329 = vpop.f32.mrf.mxu0
        %v2330 = vadd.f32 %v2265, %v2329
        %2331 = vmatmul.f32.gmra.mxu0 %v1806
        %v2332 = vpop.f32.mrf.mxu0
        %v2333 = vadd.f32 %v2268, %v2332
        %2334 = vmatmul.f32.gmra.mxu0 %v1810
        %v2335 = vpop.f32.mrf.mxu0
        %v2336 = vadd.f32 %v2271, %v2335
        %2337 = vmatmul.f32.gmra.mxu0 %v1814
        %v2338 = vpop.f32.mrf.mxu0
        %v2339 = vadd.f32 %v2274, %v2338
        %2340 = vdwg.mxu0
        %2341 = vmatpush.msra.mxu0 %v1876
        %2342 = vmatpush.msra.mxu0 %v1872
        %2343 = vmatpush.msra.mxu0 %v1868
        %2344 = vmatpush.msra.mxu0 %v1864
        %2345 = vmatpush.msra.mxu0 %v1860
        %2346 = vmatpush.msra.mxu0 %v1856
        %2347 = vmatpush.msra.mxu0 %v1852
        %2348 = vmatpush.msra.mxu0 %v1848
        %2349 = vmatpush.msra.mxu0 %v1844
        %2350 = vmatpush.msra.mxu0 %v1840
        %2351 = vmatpush.msra.mxu0 %v1836
        %2352 = vmatpush.msra.mxu0 %v1832
        %2353 = vmatpush.msra.mxu0 %v1828
        %2354 = vmatpush.msra.mxu0 %v1824
        %2355 = vmatpush.msra.mxu0 %v1820
        %2356 = vmatpush.msra.mxu0 %v1816
        %2357 = vmatmul.f32.gmra.mxu0 %v1751
        %v2358 = vpop.f32.mrf.mxu0
        %v2359 = vadd.f32 %v2074, %v2358
        %2360 = vmatmul.f32.gmra.mxu0 %v1755
        %v2361 = vpop.f32.mrf.mxu0
        %v2362 = vadd.f32 %v2074, %v2361
        %2363 = vmatmul.f32.gmra.mxu0 %v1759
        %v2364 = vpop.f32.mrf.mxu0
        %v2365 = vadd.f32 %v2074, %v2364
        %2366 = vmatmul.f32.gmra.mxu0 %v1763
        %v2367 = vpop.f32.mrf.mxu0
        %v2368 = vadd.f32 %v2074, %v2367
        %2369 = vmatmul.f32.gmra.mxu0 %v1767
        %v2370 = vpop.f32.mrf.mxu0
        %v2371 = vadd.f32 %v2074, %v2370
        %2372 = vmatmul.f32.gmra.mxu0 %v1771
        %v2373 = vpop.f32.mrf.mxu0
        %v2374 = vadd.f32 %v2074, %v2373
        %2375 = vmatmul.f32.gmra.mxu0 %v1775
        %v2376 = vpop.f32.mrf.mxu0
        %v2377 = vadd.f32 %v2074, %v2376
        %2378 = vmatmul.f32.gmra.mxu0 %v1779
        %v2379 = vpop.f32.mrf.mxu0
        %v2380 = vadd.f32 %v2074, %v2379
        %2381 = vmatmul.f32.gmra.mxu0 %v1783
        %v2382 = vpop.f32.mrf.mxu0
        %v2383 = vadd.f32 %v2074, %v2382
        %2384 = vmatmul.f32.gmra.mxu0 %v1787
        %v2385 = vpop.f32.mrf.mxu0
        %v2386 = vadd.f32 %v2074, %v2385
        %2387 = vmatmul.f32.gmra.mxu0 %v1791
        %v2388 = vpop.f32.mrf.mxu0
        %v2389 = vadd.f32 %v2074, %v2388
        %2390 = vmatmul.f32.gmra.mxu0 %v1795
        %v2391 = vpop.f32.mrf.mxu0
        %v2392 = vadd.f32 %v2074, %v2391
        %2393 = vmatmul.f32.gmra.mxu0 %v1799
        %v2394 = vpop.f32.mrf.mxu0
        %v2395 = vadd.f32 %v2074, %v2394
        %2396 = vmatmul.f32.gmra.mxu0 %v1803
        %v2397 = vpop.f32.mrf.mxu0
        %v2398 = vadd.f32 %v2074, %v2397
        %2399 = vmatmul.f32.gmra.mxu0 %v1807
        %v2400 = vpop.f32.mrf.mxu0
        %v2401 = vadd.f32 %v2074, %v2400
        %2402 = vmatmul.f32.gmra.mxu0 %v1811
        %v2403 = vpop.f32.mrf.mxu0
        %v2404 = vadd.f32 %v2074, %v2403
        %2405 = vdwg.mxu0
        %2406 = vmatpush.msra.mxu0 %v1940
        %2407 = vmatpush.msra.mxu0 %v1936
        %2408 = vmatpush.msra.mxu0 %v1932
        %2409 = vmatpush.msra.mxu0 %v1928
        %2410 = vmatpush.msra.mxu0 %v1924
        %2411 = vmatpush.msra.mxu0 %v1920
        %2412 = vmatpush.msra.mxu0 %v1916
        %2413 = vmatpush.msra.mxu0 %v1912
        %2414 = vmatpush.msra.mxu0 %v1908
        %2415 = vmatpush.msra.mxu0 %v1904
        %2416 = vmatpush.msra.mxu0 %v1900
        %2417 = vmatpush.msra.mxu0 %v1896
        %2418 = vmatpush.msra.mxu0 %v1892
        %2419 = vmatpush.msra.mxu0 %v1888
        %2420 = vmatpush.msra.mxu0 %v1884
        %2421 = vmatpush.msra.mxu0 %v1880
        %2422 = vmatmul.f32.gmra.mxu0 %v1752
        %v2423 = vpop.f32.mrf.mxu0
        %v2424 = vadd.f32 %v2359, %v2423
        %2425 = vmatmul.f32.gmra.mxu0 %v1756
        %v2426 = vpop.f32.mrf.mxu0
        %v2427 = vadd.f32 %v2362, %v2426
        %2428 = vmatmul.f32.gmra.mxu0 %v1760
        %v2429 = vpop.f32.mrf.mxu0
        %v2430 = vadd.f32 %v2365, %v2429
        %2431 = vmatmul.f32.gmra.mxu0 %v1764
        %v2432 = vpop.f32.mrf.mxu0
        %v2433 = vadd.f32 %v2368, %v2432
        %2434 = vmatmul.f32.gmra.mxu0 %v1768
        %v2435 = vpop.f32.mrf.mxu0
        %v2436 = vadd.f32 %v2371, %v2435
        %2437 = vmatmul.f32.gmra.mxu0 %v1772
        %v2438 = vpop.f32.mrf.mxu0
        %v2439 = vadd.f32 %v2374, %v2438
        %2440 = vmatmul.f32.gmra.mxu0 %v1776
        %v2441 = vpop.f32.mrf.mxu0
        %v2442 = vadd.f32 %v2377, %v2441
        %2443 = vmatmul.f32.gmra.mxu0 %v1780
        %v2444 = vpop.f32.mrf.mxu0
        %v2445 = vadd.f32 %v2380, %v2444
        %2446 = vmatmul.f32.gmra.mxu0 %v1784
        %v2447 = vpop.f32.mrf.mxu0
        %v2448 = vadd.f32 %v2383, %v2447
        %2449 = vmatmul.f32.gmra.mxu0 %v1788
        %v2450 = vpop.f32.mrf.mxu0
        %v2451 = vadd.f32 %v2386, %v2450
        %2452 = vmatmul.f32.gmra.mxu0 %v1792
        %v2453 = vpop.f32.mrf.mxu0
        %v2454 = vadd.f32 %v2389, %v2453
        %2455 = vmatmul.f32.gmra.mxu0 %v1796
        %v2456 = vpop.f32.mrf.mxu0
        %v2457 = vadd.f32 %v2392, %v2456
        %2458 = vmatmul.f32.gmra.mxu0 %v1800
        %v2459 = vpop.f32.mrf.mxu0
        %v2460 = vadd.f32 %v2395, %v2459
        %2461 = vmatmul.f32.gmra.mxu0 %v1804
        %v2462 = vpop.f32.mrf.mxu0
        %v2463 = vadd.f32 %v2398, %v2462
        %2464 = vmatmul.f32.gmra.mxu0 %v1808
        %v2465 = vpop.f32.mrf.mxu0
        %v2466 = vadd.f32 %v2401, %v2465
        %2467 = vmatmul.f32.gmra.mxu0 %v1812
        %v2468 = vpop.f32.mrf.mxu0
        %v2469 = vadd.f32 %v2404, %v2468
        %2470 = vdwg.mxu0
        %2471 = vmatpush.msra.mxu0 %v2004
        %2472 = vmatpush.msra.mxu0 %v2000
        %2473 = vmatpush.msra.mxu0 %v1996
        %2474 = vmatpush.msra.mxu0 %v1992
        %2475 = vmatpush.msra.mxu0 %v1988
        %2476 = vmatpush.msra.mxu0 %v1984
        %2477 = vmatpush.msra.mxu0 %v1980
        %2478 = vmatpush.msra.mxu0 %v1976
        %2479 = vmatpush.msra.mxu0 %v1972
        %2480 = vmatpush.msra.mxu0 %v1968
        %2481 = vmatpush.msra.mxu0 %v1964
        %2482 = vmatpush.msra.mxu0 %v1960
        %2483 = vmatpush.msra.mxu0 %v1956
        %2484 = vmatpush.msra.mxu0 %v1952
        %2485 = vmatpush.msra.mxu0 %v1948
        %2486 = vmatpush.msra.mxu0 %v1944
        %2487 = vmatmul.f32.gmra.mxu0 %v1753
        %v2488 = vpop.f32.mrf.mxu0
        %v2489 = vadd.f32 %v2424, %v2488
        %2490 = vmatmul.f32.gmra.mxu0 %v1757
        %v2491 = vpop.f32.mrf.mxu0
        %v2492 = vadd.f32 %v2427, %v2491
        %2493 = vmatmul.f32.gmra.mxu0 %v1761
        %v2494 = vpop.f32.mrf.mxu0
        %v2495 = vadd.f32 %v2430, %v2494
        %2496 = vmatmul.f32.gmra.mxu0 %v1765
        %v2497 = vpop.f32.mrf.mxu0
        %v2498 = vadd.f32 %v2433, %v2497
        %2499 = vmatmul.f32.gmra.mxu0 %v1769
        %v2500 = vpop.f32.mrf.mxu0
        %v2501 = vadd.f32 %v2436, %v2500
        %2502 = vmatmul.f32.gmra.mxu0 %v1773
        %v2503 = vpop.f32.mrf.mxu0
        %v2504 = vadd.f32 %v2439, %v2503
        %2505 = vmatmul.f32.gmra.mxu0 %v1777
        %v2506 = vpop.f32.mrf.mxu0
        %v2507 = vadd.f32 %v2442, %v2506
        %2508 = vmatmul.f32.gmra.mxu0 %v1781
        %v2509 = vpop.f32.mrf.mxu0
        %v2510 = vadd.f32 %v2445, %v2509
        %2511 = vmatmul.f32.gmra.mxu0 %v1785
        %v2512 = vpop.f32.mrf.mxu0
        %v2513 = vadd.f32 %v2448, %v2512
        %2514 = vmatmul.f32.gmra.mxu0 %v1789
        %v2515 = vpop.f32.mrf.mxu0
        %v2516 = vadd.f32 %v2451, %v2515
        %2517 = vmatmul.f32.gmra.mxu0 %v1793
        %v2518 = vpop.f32.mrf.mxu0
        %v2519 = vadd.f32 %v2454, %v2518
        %2520 = vmatmul.f32.gmra.mxu0 %v1797
        %v2521 = vpop.f32.mrf.mxu0
        %v2522 = vadd.f32 %v2457, %v2521
        %2523 = vmatmul.f32.gmra.mxu0 %v1801
        %v2524 = vpop.f32.mrf.mxu0
        %v2525 = vadd.f32 %v2460, %v2524
        %2526 = vmatmul.f32.gmra.mxu0 %v1805
        %v2527 = vpop.f32.mrf.mxu0
        %v2528 = vadd.f32 %v2463, %v2527
        %2529 = vmatmul.f32.gmra.mxu0 %v1809
        %v2530 = vpop.f32.mrf.mxu0
        %v2531 = vadd.f32 %v2466, %v2530
        %2532 = vmatmul.f32.gmra.mxu0 %v1813
        %v2533 = vpop.f32.mrf.mxu0
        %v2534 = vadd.f32 %v2469, %v2533
        %2535 = vdwg.mxu0
        %2536 = vmatpush.msra.mxu0 %v2068
        %2537 = vmatpush.msra.mxu0 %v2064
        %2538 = vmatpush.msra.mxu0 %v2060
        %2539 = vmatpush.msra.mxu0 %v2056
        %2540 = vmatpush.msra.mxu0 %v2052
        %2541 = vmatpush.msra.mxu0 %v2048
        %2542 = vmatpush.msra.mxu0 %v2044
        %2543 = vmatpush.msra.mxu0 %v2040
        %2544 = vmatpush.msra.mxu0 %v2036
        %2545 = vmatpush.msra.mxu0 %v2032
        %2546 = vmatpush.msra.mxu0 %v2028
        %2547 = vmatpush.msra.mxu0 %v2024
        %2548 = vmatpush.msra.mxu0 %v2020
        %2549 = vmatpush.msra.mxu0 %v2016
        %2550 = vmatpush.msra.mxu0 %v2012
        %2551 = vmatpush.msra.mxu0 %v2008
        %2552 = vmatmul.f32.gmra.mxu0 %v1754
        %v2553 = vpop.f32.mrf.mxu0
        %v2554 = vadd.f32 %v2489, %v2553
        %2555 = vmatmul.f32.gmra.mxu0 %v1758
        %v2556 = vpop.f32.mrf.mxu0
        %v2557 = vadd.f32 %v2492, %v2556
        %2558 = vmatmul.f32.gmra.mxu0 %v1762
        %v2559 = vpop.f32.mrf.mxu0
        %v2560 = vadd.f32 %v2495, %v2559
        %2561 = vmatmul.f32.gmra.mxu0 %v1766
        %v2562 = vpop.f32.mrf.mxu0
        %v2563 = vadd.f32 %v2498, %v2562
        %2564 = vmatmul.f32.gmra.mxu0 %v1770
        %v2565 = vpop.f32.mrf.mxu0
        %v2566 = vadd.f32 %v2501, %v2565
        %2567 = vmatmul.f32.gmra.mxu0 %v1774
        %v2568 = vpop.f32.mrf.mxu0
        %v2569 = vadd.f32 %v2504, %v2568
        %2570 = vmatmul.f32.gmra.mxu0 %v1778
        %v2571 = vpop.f32.mrf.mxu0
        %v2572 = vadd.f32 %v2507, %v2571
        %2573 = vmatmul.f32.gmra.mxu0 %v1782
        %v2574 = vpop.f32.mrf.mxu0
        %v2575 = vadd.f32 %v2510, %v2574
        %2576 = vmatmul.f32.gmra.mxu0 %v1786
        %v2577 = vpop.f32.mrf.mxu0
        %v2578 = vadd.f32 %v2513, %v2577
        %2579 = vmatmul.f32.gmra.mxu0 %v1790
        %v2580 = vpop.f32.mrf.mxu0
        %v2581 = vadd.f32 %v2516, %v2580
        %2582 = vmatmul.f32.gmra.mxu0 %v1794
        %v2583 = vpop.f32.mrf.mxu0
        %v2584 = vadd.f32 %v2519, %v2583
        %2585 = vmatmul.f32.gmra.mxu0 %v1798
        %v2586 = vpop.f32.mrf.mxu0
        %v2587 = vadd.f32 %v2522, %v2586
        %2588 = vmatmul.f32.gmra.mxu0 %v1802
        %v2589 = vpop.f32.mrf.mxu0
        %v2590 = vadd.f32 %v2525, %v2589
        %2591 = vmatmul.f32.gmra.mxu0 %v1806
        %v2592 = vpop.f32.mrf.mxu0
        %v2593 = vadd.f32 %v2528, %v2592
        %2594 = vmatmul.f32.gmra.mxu0 %v1810
        %v2595 = vpop.f32.mrf.mxu0
        %v2596 = vadd.f32 %v2531, %v2595
        %2597 = vmatmul.f32.gmra.mxu0 %v1814
        %v2598 = vpop.f32.mrf.mxu0
        %v2599 = vadd.f32 %v2534, %v2598
        %2600 = vdwg.mxu0
        %2601 = vmatpush.msra.mxu0 %v1877
        %2602 = vmatpush.msra.mxu0 %v1873
        %2603 = vmatpush.msra.mxu0 %v1869
        %2604 = vmatpush.msra.mxu0 %v1865
        %2605 = vmatpush.msra.mxu0 %v1861
        %2606 = vmatpush.msra.mxu0 %v1857
        %2607 = vmatpush.msra.mxu0 %v1853
        %2608 = vmatpush.msra.mxu0 %v1849
        %2609 = vmatpush.msra.mxu0 %v1845
        %2610 = vmatpush.msra.mxu0 %v1841
        %2611 = vmatpush.msra.mxu0 %v1837
        %2612 = vmatpush.msra.mxu0 %v1833
        %2613 = vmatpush.msra.mxu0 %v1829
        %2614 = vmatpush.msra.mxu0 %v1825
        %2615 = vmatpush.msra.mxu0 %v1821
        %2616 = vmatpush.msra.mxu0 %v1817
        %2617 = vmatmul.f32.gmra.mxu0 %v1751
        %v2618 = vpop.f32.mrf.mxu0
        %v2619 = vadd.f32 %v2075, %v2618
        %2620 = vmatmul.f32.gmra.mxu0 %v1755
        %v2621 = vpop.f32.mrf.mxu0
        %v2622 = vadd.f32 %v2075, %v2621
        %2623 = vmatmul.f32.gmra.mxu0 %v1759
        %v2624 = vpop.f32.mrf.mxu0
        %v2625 = vadd.f32 %v2075, %v2624
        %2626 = vmatmul.f32.gmra.mxu0 %v1763
        %v2627 = vpop.f32.mrf.mxu0
        %v2628 = vadd.f32 %v2075, %v2627
        %2629 = vmatmul.f32.gmra.mxu0 %v1767
        %v2630 = vpop.f32.mrf.mxu0
        %v2631 = vadd.f32 %v2075, %v2630
        %2632 = vmatmul.f32.gmra.mxu0 %v1771
        %v2633 = vpop.f32.mrf.mxu0
        %v2634 = vadd.f32 %v2075, %v2633
        %2635 = vmatmul.f32.gmra.mxu0 %v1775
        %v2636 = vpop.f32.mrf.mxu0
        %v2637 = vadd.f32 %v2075, %v2636
        %2638 = vmatmul.f32.gmra.mxu0 %v1779
        %v2639 = vpop.f32.mrf.mxu0
        %v2640 = vadd.f32 %v2075, %v2639
        %2641 = vmatmul.f32.gmra.mxu0 %v1783
        %v2642 = vpop.f32.mrf.mxu0
        %v2643 = vadd.f32 %v2075, %v2642
        %2644 = vmatmul.f32.gmra.mxu0 %v1787
        %v2645 = vpop.f32.mrf.mxu0
        %v2646 = vadd.f32 %v2075, %v2645
        %2647 = vmatmul.f32.gmra.mxu0 %v1791
        %v2648 = vpop.f32.mrf.mxu0
        %v2649 = vadd.f32 %v2075, %v2648
        %2650 = vmatmul.f32.gmra.mxu0 %v1795
        %v2651 = vpop.f32.mrf.mxu0
        %v2652 = vadd.f32 %v2075, %v2651
        %2653 = vmatmul.f32.gmra.mxu0 %v1799
        %v2654 = vpop.f32.mrf.mxu0
        %v2655 = vadd.f32 %v2075, %v2654
        %2656 = vmatmul.f32.gmra.mxu0 %v1803
        %v2657 = vpop.f32.mrf.mxu0
        %v2658 = vadd.f32 %v2075, %v2657
        %2659 = vmatmul.f32.gmra.mxu0 %v1807
        %v2660 = vpop.f32.mrf.mxu0
        %v2661 = vadd.f32 %v2075, %v2660
        %2662 = vmatmul.f32.gmra.mxu0 %v1811
        %v2663 = vpop.f32.mrf.mxu0
        %v2664 = vadd.f32 %v2075, %v2663
        %2665 = vdwg.mxu0
        %2666 = vmatpush.msra.mxu0 %v1941
        %2667 = vmatpush.msra.mxu0 %v1937
        %2668 = vmatpush.msra.mxu0 %v1933
        %2669 = vmatpush.msra.mxu0 %v1929
        %2670 = vmatpush.msra.mxu0 %v1925
        %2671 = vmatpush.msra.mxu0 %v1921
        %2672 = vmatpush.msra.mxu0 %v1917
        %2673 = vmatpush.msra.mxu0 %v1913
        %2674 = vmatpush.msra.mxu0 %v1909
        %2675 = vmatpush.msra.mxu0 %v1905
        %2676 = vmatpush.msra.mxu0 %v1901
        %2677 = vmatpush.msra.mxu0 %v1897
        %2678 = vmatpush.msra.mxu0 %v1893
        %2679 = vmatpush.msra.mxu0 %v1889
        %2680 = vmatpush.msra.mxu0 %v1885
        %2681 = vmatpush.msra.mxu0 %v1881
        %2682 = vmatmul.f32.gmra.mxu0 %v1752
        %v2683 = vpop.f32.mrf.mxu0
        %v2684 = vadd.f32 %v2619, %v2683
        %2685 = vmatmul.f32.gmra.mxu0 %v1756
        %v2686 = vpop.f32.mrf.mxu0
        %v2687 = vadd.f32 %v2622, %v2686
        %2688 = vmatmul.f32.gmra.mxu0 %v1760
        %v2689 = vpop.f32.mrf.mxu0
        %v2690 = vadd.f32 %v2625, %v2689
        %2691 = vmatmul.f32.gmra.mxu0 %v1764
        %v2692 = vpop.f32.mrf.mxu0
        %v2693 = vadd.f32 %v2628, %v2692
        %2694 = vmatmul.f32.gmra.mxu0 %v1768
        %v2695 = vpop.f32.mrf.mxu0
        %v2696 = vadd.f32 %v2631, %v2695
        %2697 = vmatmul.f32.gmra.mxu0 %v1772
        %v2698 = vpop.f32.mrf.mxu0
        %v2699 = vadd.f32 %v2634, %v2698
        %2700 = vmatmul.f32.gmra.mxu0 %v1776
        %v2701 = vpop.f32.mrf.mxu0
        %v2702 = vadd.f32 %v2637, %v2701
        %2703 = vmatmul.f32.gmra.mxu0 %v1780
        %v2704 = vpop.f32.mrf.mxu0
        %v2705 = vadd.f32 %v2640, %v2704
        %2706 = vmatmul.f32.gmra.mxu0 %v1784
        %v2707 = vpop.f32.mrf.mxu0
        %v2708 = vadd.f32 %v2643, %v2707
        %2709 = vmatmul.f32.gmra.mxu0 %v1788
        %v2710 = vpop.f32.mrf.mxu0
        %v2711 = vadd.f32 %v2646, %v2710
        %2712 = vmatmul.f32.gmra.mxu0 %v1792
        %v2713 = vpop.f32.mrf.mxu0
        %v2714 = vadd.f32 %v2649, %v2713
        %2715 = vmatmul.f32.gmra.mxu0 %v1796
        %v2716 = vpop.f32.mrf.mxu0
        %v2717 = vadd.f32 %v2652, %v2716
        %2718 = vmatmul.f32.gmra.mxu0 %v1800
        %v2719 = vpop.f32.mrf.mxu0
        %v2720 = vadd.f32 %v2655, %v2719
        %2721 = vmatmul.f32.gmra.mxu0 %v1804
        %v2722 = vpop.f32.mrf.mxu0
        %v2723 = vadd.f32 %v2658, %v2722
        %2724 = vmatmul.f32.gmra.mxu0 %v1808
        %v2725 = vpop.f32.mrf.mxu0
        %v2726 = vadd.f32 %v2661, %v2725
        %2727 = vmatmul.f32.gmra.mxu0 %v1812
        %v2728 = vpop.f32.mrf.mxu0
        %v2729 = vadd.f32 %v2664, %v2728
        %2730 = vdwg.mxu0
        %2731 = vmatpush.msra.mxu0 %v2005
        %2732 = vmatpush.msra.mxu0 %v2001
        %2733 = vmatpush.msra.mxu0 %v1997
        %2734 = vmatpush.msra.mxu0 %v1993
        %2735 = vmatpush.msra.mxu0 %v1989
        %2736 = vmatpush.msra.mxu0 %v1985
        %2737 = vmatpush.msra.mxu0 %v1981
        %2738 = vmatpush.msra.mxu0 %v1977
        %2739 = vmatpush.msra.mxu0 %v1973
        %2740 = vmatpush.msra.mxu0 %v1969
        %2741 = vmatpush.msra.mxu0 %v1965
        %2742 = vmatpush.msra.mxu0 %v1961
        %2743 = vmatpush.msra.mxu0 %v1957
        %2744 = vmatpush.msra.mxu0 %v1953
        %2745 = vmatpush.msra.mxu0 %v1949
        %2746 = vmatpush.msra.mxu0 %v1945
        %2747 = vmatmul.f32.gmra.mxu0 %v1753
        %v2748 = vpop.f32.mrf.mxu0
        %v2749 = vadd.f32 %v2684, %v2748
        %2750 = vmatmul.f32.gmra.mxu0 %v1757
        %v2751 = vpop.f32.mrf.mxu0
        %v2752 = vadd.f32 %v2687, %v2751
        %2753 = vmatmul.f32.gmra.mxu0 %v1761
        %v2754 = vpop.f32.mrf.mxu0
        %v2755 = vadd.f32 %v2690, %v2754
        %2756 = vmatmul.f32.gmra.mxu0 %v1765
        %v2757 = vpop.f32.mrf.mxu0
        %v2758 = vadd.f32 %v2693, %v2757
        %2759 = vmatmul.f32.gmra.mxu0 %v1769
        %v2760 = vpop.f32.mrf.mxu0
        %v2761 = vadd.f32 %v2696, %v2760
        %2762 = vmatmul.f32.gmra.mxu0 %v1773
        %v2763 = vpop.f32.mrf.mxu0
        %v2764 = vadd.f32 %v2699, %v2763
        %2765 = vmatmul.f32.gmra.mxu0 %v1777
        %v2766 = vpop.f32.mrf.mxu0
        %v2767 = vadd.f32 %v2702, %v2766
        %2768 = vmatmul.f32.gmra.mxu0 %v1781
        %v2769 = vpop.f32.mrf.mxu0
        %v2770 = vadd.f32 %v2705, %v2769
        %2771 = vmatmul.f32.gmra.mxu0 %v1785
        %v2772 = vpop.f32.mrf.mxu0
        %v2773 = vadd.f32 %v2708, %v2772
        %2774 = vmatmul.f32.gmra.mxu0 %v1789
        %v2775 = vpop.f32.mrf.mxu0
        %v2776 = vadd.f32 %v2711, %v2775
        %2777 = vmatmul.f32.gmra.mxu0 %v1793
        %v2778 = vpop.f32.mrf.mxu0
        %v2779 = vadd.f32 %v2714, %v2778
        %2780 = vmatmul.f32.gmra.mxu0 %v1797
        %v2781 = vpop.f32.mrf.mxu0
        %v2782 = vadd.f32 %v2717, %v2781
        %2783 = vmatmul.f32.gmra.mxu0 %v1801
        %v2784 = vpop.f32.mrf.mxu0
        %v2785 = vadd.f32 %v2720, %v2784
        %2786 = vmatmul.f32.gmra.mxu0 %v1805
        %v2787 = vpop.f32.mrf.mxu0
        %v2788 = vadd.f32 %v2723, %v2787
        %2789 = vmatmul.f32.gmra.mxu0 %v1809
        %v2790 = vpop.f32.mrf.mxu0
        %v2791 = vadd.f32 %v2726, %v2790
        %2792 = vmatmul.f32.gmra.mxu0 %v1813
        %v2793 = vpop.f32.mrf.mxu0
        %v2794 = vadd.f32 %v2729, %v2793
        %2795 = vdwg.mxu0
        %2796 = vmatpush.msra.mxu0 %v2069
        %2797 = vmatpush.msra.mxu0 %v2065
        %2798 = vmatpush.msra.mxu0 %v2061
        %2799 = vmatpush.msra.mxu0 %v2057
        %2800 = vmatpush.msra.mxu0 %v2053
        %2801 = vmatpush.msra.mxu0 %v2049
        %2802 = vmatpush.msra.mxu0 %v2045
        %2803 = vmatpush.msra.mxu0 %v2041
        %2804 = vmatpush.msra.mxu0 %v2037
        %2805 = vmatpush.msra.mxu0 %v2033
        %2806 = vmatpush.msra.mxu0 %v2029
        %2807 = vmatpush.msra.mxu0 %v2025
        %2808 = vmatpush.msra.mxu0 %v2021
        %2809 = vmatpush.msra.mxu0 %v2017
        %2810 = vmatpush.msra.mxu0 %v2013
        %2811 = vmatpush.msra.mxu0 %v2009
        %2812 = vmatmul.f32.gmra.mxu0 %v1754
        %v2813 = vpop.f32.mrf.mxu0
        %v2814 = vadd.f32 %v2749, %v2813
        %2815 = vmatmul.f32.gmra.mxu0 %v1758
        %v2816 = vpop.f32.mrf.mxu0
        %v2817 = vadd.f32 %v2752, %v2816
        %2818 = vmatmul.f32.gmra.mxu0 %v1762
        %v2819 = vpop.f32.mrf.mxu0
        %v2820 = vadd.f32 %v2755, %v2819
        %2821 = vmatmul.f32.gmra.mxu0 %v1766
        %v2822 = vpop.f32.mrf.mxu0
        %v2823 = vadd.f32 %v2758, %v2822
        %2824 = vmatmul.f32.gmra.mxu0 %v1770
        %v2825 = vpop.f32.mrf.mxu0
        %v2826 = vadd.f32 %v2761, %v2825
        %2827 = vmatmul.f32.gmra.mxu0 %v1774
        %v2828 = vpop.f32.mrf.mxu0
        %v2829 = vadd.f32 %v2764, %v2828
        %2830 = vmatmul.f32.gmra.mxu0 %v1778
        %v2831 = vpop.f32.mrf.mxu0
        %v2832 = vadd.f32 %v2767, %v2831
        %2833 = vmatmul.f32.gmra.mxu0 %v1782
        %v2834 = vpop.f32.mrf.mxu0
        %v2835 = vadd.f32 %v2770, %v2834
        %2836 = vmatmul.f32.gmra.mxu0 %v1786
        %v2837 = vpop.f32.mrf.mxu0
        %v2838 = vadd.f32 %v2773, %v2837
        %2839 = vmatmul.f32.gmra.mxu0 %v1790
        %v2840 = vpop.f32.mrf.mxu0
        %v2841 = vadd.f32 %v2776, %v2840
        %2842 = vmatmul.f32.gmra.mxu0 %v1794
        %v2843 = vpop.f32.mrf.mxu0
        %v2844 = vadd.f32 %v2779, %v2843
        %2845 = vmatmul.f32.gmra.mxu0 %v1798
        %v2846 = vpop.f32.mrf.mxu0
        %v2847 = vadd.f32 %v2782, %v2846
        %2848 = vmatmul.f32.gmra.mxu0 %v1802
        %v2849 = vpop.f32.mrf.mxu0
        %v2850 = vadd.f32 %v2785, %v2849
        %2851 = vmatmul.f32.gmra.mxu0 %v1806
        %v2852 = vpop.f32.mrf.mxu0
        %v2853 = vadd.f32 %v2788, %v2852
        %2854 = vmatmul.f32.gmra.mxu0 %v1810
        %v2855 = vpop.f32.mrf.mxu0
        %v2856 = vadd.f32 %v2791, %v2855
        %2857 = vmatmul.f32.gmra.mxu0 %v1814
        %v2858 = vpop.f32.mrf.mxu0
        %v2859 = vadd.f32 %v2794, %v2858
        %2860 = vdwg.mxu0
        %2861 = vmatpush.msra.mxu0 %v1878
        %2862 = vmatpush.msra.mxu0 %v1874
        %2863 = vmatpush.msra.mxu0 %v1870
        %2864 = vmatpush.msra.mxu0 %v1866
        %2865 = vmatpush.msra.mxu0 %v1862
        %2866 = vmatpush.msra.mxu0 %v1858
        %2867 = vmatpush.msra.mxu0 %v1854
        %2868 = vmatpush.msra.mxu0 %v1850
        %2869 = vmatpush.msra.mxu0 %v1846
        %2870 = vmatpush.msra.mxu0 %v1842
        %2871 = vmatpush.msra.mxu0 %v1838
        %2872 = vmatpush.msra.mxu0 %v1834
        %2873 = vmatpush.msra.mxu0 %v1830
        %2874 = vmatpush.msra.mxu0 %v1826
        %2875 = vmatpush.msra.mxu0 %v1822
        %2876 = vmatpush.msra.mxu0 %v1818
        %2877 = vmatmul.f32.gmra.mxu0 %v1751
        %v2878 = vpop.f32.mrf.mxu0
        %v2879 = vadd.f32 %v2076, %v2878
        %2880 = vmatmul.f32.gmra.mxu0 %v1755
        %v2881 = vpop.f32.mrf.mxu0
        %v2882 = vadd.f32 %v2076, %v2881
        %2883 = vmatmul.f32.gmra.mxu0 %v1759
        %v2884 = vpop.f32.mrf.mxu0
        %v2885 = vadd.f32 %v2076, %v2884
        %2886 = vmatmul.f32.gmra.mxu0 %v1763
        %v2887 = vpop.f32.mrf.mxu0
        %v2888 = vadd.f32 %v2076, %v2887
        %2889 = vmatmul.f32.gmra.mxu0 %v1767
        %v2890 = vpop.f32.mrf.mxu0
        %v2891 = vadd.f32 %v2076, %v2890
        %2892 = vmatmul.f32.gmra.mxu0 %v1771
        %v2893 = vpop.f32.mrf.mxu0
        %v2894 = vadd.f32 %v2076, %v2893
        %2895 = vmatmul.f32.gmra.mxu0 %v1775
        %v2896 = vpop.f32.mrf.mxu0
        %v2897 = vadd.f32 %v2076, %v2896
        %2898 = vmatmul.f32.gmra.mxu0 %v1779
        %v2899 = vpop.f32.mrf.mxu0
        %v2900 = vadd.f32 %v2076, %v2899
        %2901 = vmatmul.f32.gmra.mxu0 %v1783
        %v2902 = vpop.f32.mrf.mxu0
        %v2903 = vadd.f32 %v2076, %v2902
        %2904 = vmatmul.f32.gmra.mxu0 %v1787
        %v2905 = vpop.f32.mrf.mxu0
        %v2906 = vadd.f32 %v2076, %v2905
        %2907 = vmatmul.f32.gmra.mxu0 %v1791
        %v2908 = vpop.f32.mrf.mxu0
        %v2909 = vadd.f32 %v2076, %v2908
        %2910 = vmatmul.f32.gmra.mxu0 %v1795
        %v2911 = vpop.f32.mrf.mxu0
        %v2912 = vadd.f32 %v2076, %v2911
        %2913 = vmatmul.f32.gmra.mxu0 %v1799
        %v2914 = vpop.f32.mrf.mxu0
        %v2915 = vadd.f32 %v2076, %v2914
        %2916 = vmatmul.f32.gmra.mxu0 %v1803
        %v2917 = vpop.f32.mrf.mxu0
        %v2918 = vadd.f32 %v2076, %v2917
        %2919 = vmatmul.f32.gmra.mxu0 %v1807
        %v2920 = vpop.f32.mrf.mxu0
        %v2921 = vadd.f32 %v2076, %v2920
        %2922 = vmatmul.f32.gmra.mxu0 %v1811
        %v2923 = vpop.f32.mrf.mxu0
        %v2924 = vadd.f32 %v2076, %v2923
        %2925 = vdwg.mxu0
        %2926 = vmatpush.msra.mxu0 %v1942
        %2927 = vmatpush.msra.mxu0 %v1938
        %2928 = vmatpush.msra.mxu0 %v1934
        %2929 = vmatpush.msra.mxu0 %v1930
        %2930 = vmatpush.msra.mxu0 %v1926
        %2931 = vmatpush.msra.mxu0 %v1922
        %2932 = vmatpush.msra.mxu0 %v1918
        %2933 = vmatpush.msra.mxu0 %v1914
        %2934 = vmatpush.msra.mxu0 %v1910
        %2935 = vmatpush.msra.mxu0 %v1906
        %2936 = vmatpush.msra.mxu0 %v1902
        %2937 = vmatpush.msra.mxu0 %v1898
        %2938 = vmatpush.msra.mxu0 %v1894
        %2939 = vmatpush.msra.mxu0 %v1890
        %2940 = vmatpush.msra.mxu0 %v1886
        %2941 = vmatpush.msra.mxu0 %v1882
        %2942 = vmatmul.f32.gmra.mxu0 %v1752
        %v2943 = vpop.f32.mrf.mxu0
        %v2944 = vadd.f32 %v2879, %v2943
        %2945 = vmatmul.f32.gmra.mxu0 %v1756
        %v2946 = vpop.f32.mrf.mxu0
        %v2947 = vadd.f32 %v2882, %v2946
        %2948 = vmatmul.f32.gmra.mxu0 %v1760
        %v2949 = vpop.f32.mrf.mxu0
        %v2950 = vadd.f32 %v2885, %v2949
        %2951 = vmatmul.f32.gmra.mxu0 %v1764
        %v2952 = vpop.f32.mrf.mxu0
        %v2953 = vadd.f32 %v2888, %v2952
        %2954 = vmatmul.f32.gmra.mxu0 %v1768
        %v2955 = vpop.f32.mrf.mxu0
        %v2956 = vadd.f32 %v2891, %v2955
        %2957 = vmatmul.f32.gmra.mxu0 %v1772
        %v2958 = vpop.f32.mrf.mxu0
        %v2959 = vadd.f32 %v2894, %v2958
        %2960 = vmatmul.f32.gmra.mxu0 %v1776
        %v2961 = vpop.f32.mrf.mxu0
        %v2962 = vadd.f32 %v2897, %v2961
        %2963 = vmatmul.f32.gmra.mxu0 %v1780
        %v2964 = vpop.f32.mrf.mxu0
        %v2965 = vadd.f32 %v2900, %v2964
        %2966 = vmatmul.f32.gmra.mxu0 %v1784
        %v2967 = vpop.f32.mrf.mxu0
        %v2968 = vadd.f32 %v2903, %v2967
        %2969 = vmatmul.f32.gmra.mxu0 %v1788
        %v2970 = vpop.f32.mrf.mxu0
        %v2971 = vadd.f32 %v2906, %v2970
        %2972 = vmatmul.f32.gmra.mxu0 %v1792
        %v2973 = vpop.f32.mrf.mxu0
        %v2974 = vadd.f32 %v2909, %v2973
        %2975 = vmatmul.f32.gmra.mxu0 %v1796
        %v2976 = vpop.f32.mrf.mxu0
        %v2977 = vadd.f32 %v2912, %v2976
        %2978 = vmatmul.f32.gmra.mxu0 %v1800
        %v2979 = vpop.f32.mrf.mxu0
        %v2980 = vadd.f32 %v2915, %v2979
        %2981 = vmatmul.f32.gmra.mxu0 %v1804
        %v2982 = vpop.f32.mrf.mxu0
        %v2983 = vadd.f32 %v2918, %v2982
        %2984 = vmatmul.f32.gmra.mxu0 %v1808
        %v2985 = vpop.f32.mrf.mxu0
        %v2986 = vadd.f32 %v2921, %v2985
        %2987 = vmatmul.f32.gmra.mxu0 %v1812
        %v2988 = vpop.f32.mrf.mxu0
        %v2989 = vadd.f32 %v2924, %v2988
        %2990 = vdwg.mxu0
        %2991 = vmatpush.msra.mxu0 %v2006
        %2992 = vmatpush.msra.mxu0 %v2002
        %2993 = vmatpush.msra.mxu0 %v1998
        %2994 = vmatpush.msra.mxu0 %v1994
        %2995 = vmatpush.msra.mxu0 %v1990
        %2996 = vmatpush.msra.mxu0 %v1986
        %2997 = vmatpush.msra.mxu0 %v1982
        %2998 = vmatpush.msra.mxu0 %v1978
        %2999 = vmatpush.msra.mxu0 %v1974
        %3000 = vmatpush.msra.mxu0 %v1970
        %3001 = vmatpush.msra.mxu0 %v1966
        %3002 = vmatpush.msra.mxu0 %v1962
        %3003 = vmatpush.msra.mxu0 %v1958
        %3004 = vmatpush.msra.mxu0 %v1954
        %3005 = vmatpush.msra.mxu0 %v1950
        %3006 = vmatpush.msra.mxu0 %v1946
        %3007 = vmatmul.f32.gmra.mxu0 %v1753
        %v3008 = vpop.f32.mrf.mxu0
        %v3009 = vadd.f32 %v2944, %v3008
        %3010 = vmatmul.f32.gmra.mxu0 %v1757
        %v3011 = vpop.f32.mrf.mxu0
        %v3012 = vadd.f32 %v2947, %v3011
        %3013 = vmatmul.f32.gmra.mxu0 %v1761
        %v3014 = vpop.f32.mrf.mxu0
        %v3015 = vadd.f32 %v2950, %v3014
        %3016 = vmatmul.f32.gmra.mxu0 %v1765
        %v3017 = vpop.f32.mrf.mxu0
        %v3018 = vadd.f32 %v2953, %v3017
        %3019 = vmatmul.f32.gmra.mxu0 %v1769
        %v3020 = vpop.f32.mrf.mxu0
        %v3021 = vadd.f32 %v2956, %v3020
        %3022 = vmatmul.f32.gmra.mxu0 %v1773
        %v3023 = vpop.f32.mrf.mxu0
        %v3024 = vadd.f32 %v2959, %v3023
        %3025 = vmatmul.f32.gmra.mxu0 %v1777
        %v3026 = vpop.f32.mrf.mxu0
        %v3027 = vadd.f32 %v2962, %v3026
        %3028 = vmatmul.f32.gmra.mxu0 %v1781
        %v3029 = vpop.f32.mrf.mxu0
        %v3030 = vadd.f32 %v2965, %v3029
        %3031 = vmatmul.f32.gmra.mxu0 %v1785
        %v3032 = vpop.f32.mrf.mxu0
        %v3033 = vadd.f32 %v2968, %v3032
        %3034 = vmatmul.f32.gmra.mxu0 %v1789
        %v3035 = vpop.f32.mrf.mxu0
        %v3036 = vadd.f32 %v2971, %v3035
        %3037 = vmatmul.f32.gmra.mxu0 %v1793
        %v3038 = vpop.f32.mrf.mxu0
        %v3039 = vadd.f32 %v2974, %v3038
        %3040 = vmatmul.f32.gmra.mxu0 %v1797
        %v3041 = vpop.f32.mrf.mxu0
        %v3042 = vadd.f32 %v2977, %v3041
        %3043 = vmatmul.f32.gmra.mxu0 %v1801
        %v3044 = vpop.f32.mrf.mxu0
        %v3045 = vadd.f32 %v2980, %v3044
        %3046 = vmatmul.f32.gmra.mxu0 %v1805
        %v3047 = vpop.f32.mrf.mxu0
        %v3048 = vadd.f32 %v2983, %v3047
        %3049 = vmatmul.f32.gmra.mxu0 %v1809
        %v3050 = vpop.f32.mrf.mxu0
        %v3051 = vadd.f32 %v2986, %v3050
        %3052 = vmatmul.f32.gmra.mxu0 %v1813
        %v3053 = vpop.f32.mrf.mxu0
        %v3054 = vadd.f32 %v2989, %v3053
        %3055 = vdwg.mxu0
        %3056 = vmatpush.msra.mxu0 %v2070
        %3057 = vmatpush.msra.mxu0 %v2066
        %3058 = vmatpush.msra.mxu0 %v2062
        %3059 = vmatpush.msra.mxu0 %v2058
        %3060 = vmatpush.msra.mxu0 %v2054
        %3061 = vmatpush.msra.mxu0 %v2050
        %3062 = vmatpush.msra.mxu0 %v2046
        %3063 = vmatpush.msra.mxu0 %v2042
        %3064 = vmatpush.msra.mxu0 %v2038
        %3065 = vmatpush.msra.mxu0 %v2034
        %3066 = vmatpush.msra.mxu0 %v2030
        %3067 = vmatpush.msra.mxu0 %v2026
        %3068 = vmatpush.msra.mxu0 %v2022
        %3069 = vmatpush.msra.mxu0 %v2018
        %3070 = vmatpush.msra.mxu0 %v2014
        %3071 = vmatpush.msra.mxu0 %v2010
        %3072 = vmatmul.f32.gmra.mxu0 %v1754
        %v3073 = vpop.f32.mrf.mxu0
        %v3074 = vadd.f32 %v3009, %v3073
        %3075 = vmatmul.f32.gmra.mxu0 %v1758
        %v3076 = vpop.f32.mrf.mxu0
        %v3077 = vadd.f32 %v3012, %v3076
        %3078 = vmatmul.f32.gmra.mxu0 %v1762
        %v3079 = vpop.f32.mrf.mxu0
        %v3080 = vadd.f32 %v3015, %v3079
        %3081 = vmatmul.f32.gmra.mxu0 %v1766
        %v3082 = vpop.f32.mrf.mxu0
        %v3083 = vadd.f32 %v3018, %v3082
        %3084 = vmatmul.f32.gmra.mxu0 %v1770
        %v3085 = vpop.f32.mrf.mxu0
        %v3086 = vadd.f32 %v3021, %v3085
        %3087 = vmatmul.f32.gmra.mxu0 %v1774
        %v3088 = vpop.f32.mrf.mxu0
        %v3089 = vadd.f32 %v3024, %v3088
        %3090 = vmatmul.f32.gmra.mxu0 %v1778
        %v3091 = vpop.f32.mrf.mxu0
        %v3092 = vadd.f32 %v3027, %v3091
        %3093 = vmatmul.f32.gmra.mxu0 %v1782
        %v3094 = vpop.f32.mrf.mxu0
        %v3095 = vadd.f32 %v3030, %v3094
        %3096 = vmatmul.f32.gmra.mxu0 %v1786
        %v3097 = vpop.f32.mrf.mxu0
        %v3098 = vadd.f32 %v3033, %v3097
        %3099 = vmatmul.f32.gmra.mxu0 %v1790
        %v3100 = vpop.f32.mrf.mxu0
        %v3101 = vadd.f32 %v3036, %v3100
        %3102 = vmatmul.f32.gmra.mxu0 %v1794
        %v3103 = vpop.f32.mrf.mxu0
        %v3104 = vadd.f32 %v3039, %v3103
        %3105 = vmatmul.f32.gmra.mxu0 %v1798
        %v3106 = vpop.f32.mrf.mxu0
        %v3107 = vadd.f32 %v3042, %v3106
        %3108 = vmatmul.f32.gmra.mxu0 %v1802
        %v3109 = vpop.f32.mrf.mxu0
        %v3110 = vadd.f32 %v3045, %v3109
        %3111 = vmatmul.f32.gmra.mxu0 %v1806
        %v3112 = vpop.f32.mrf.mxu0
        %v3113 = vadd.f32 %v3048, %v3112
        %3114 = vmatmul.f32.gmra.mxu0 %v1810
        %v3115 = vpop.f32.mrf.mxu0
        %v3116 = vadd.f32 %v3051, %v3115
        %3117 = vmatmul.f32.gmra.mxu0 %v1814
        %v3118 = vpop.f32.mrf.mxu0
        %v3119 = vadd.f32 %v3054, %v3118
        %3120 = vdwg.mxu0
        %v3121 = vmax.f32 %v2294, 0.0
        %v3122 = vmax.f32 %v2554, 0.0
        %v3123 = vmax.f32 %v2814, 0.0
        %v3124 = vmax.f32 %v3074, 0.0
        %v3125 = vmax.f32 %v2297, 0.0
        %v3126 = vmax.f32 %v2557, 0.0
        %v3127 = vmax.f32 %v2817, 0.0
        %v3128 = vmax.f32 %v3077, 0.0
        %v3129 = vmax.f32 %v2300, 0.0
        %v3130 = vmax.f32 %v2560, 0.0
        %v3131 = vmax.f32 %v2820, 0.0
        %v3132 = vmax.f32 %v3080, 0.0
        %v3133 = vmax.f32 %v2303, 0.0
        %v3134 = vmax.f32 %v2563, 0.0
        %v3135 = vmax.f32 %v2823, 0.0
        %v3136 = vmax.f32 %v3083, 0.0
        %v3137 = vmax.f32 %v2306, 0.0
        %v3138 = vmax.f32 %v2566, 0.0
        %v3139 = vmax.f32 %v2826, 0.0
        %v3140 = vmax.f32 %v3086, 0.0
        %v3141 = vmax.f32 %v2309, 0.0
        %v3142 = vmax.f32 %v2569, 0.0
        %v3143 = vmax.f32 %v2829, 0.0
        %v3144 = vmax.f32 %v3089, 0.0
        %v3145 = vmax.f32 %v2312, 0.0
        %v3146 = vmax.f32 %v2572, 0.0
        %v3147 = vmax.f32 %v2832, 0.0
        %v3148 = vmax.f32 %v3092, 0.0
        %v3149 = vmax.f32 %v2315, 0.0
        %v3150 = vmax.f32 %v2575, 0.0
        %v3151 = vmax.f32 %v2835, 0.0
        %v3152 = vmax.f32 %v3095, 0.0
        %v3153 = vmax.f32 %v2318, 0.0
        %v3154 = vmax.f32 %v2578, 0.0
        %v3155 = vmax.f32 %v2838, 0.0
        %v3156 = vmax.f32 %v3098, 0.0
        %v3157 = vmax.f32 %v2321, 0.0
        %v3158 = vmax.f32 %v2581, 0.0
        %v3159 = vmax.f32 %v2841, 0.0
        %v3160 = vmax.f32 %v3101, 0.0
        %v3161 = vmax.f32 %v2324, 0.0
        %v3162 = vmax.f32 %v2584, 0.0
        %v3163 = vmax.f32 %v2844, 0.0
        %v3164 = vmax.f32 %v3104, 0.0
        %v3165 = vmax.f32 %v2327, 0.0
        %v3166 = vmax.f32 %v2587, 0.0
        %v3167 = vmax.f32 %v2847, 0.0
        %v3168 = vmax.f32 %v3107, 0.0
        %v3169 = vmax.f32 %v2330, 0.0
        %v3170 = vmax.f32 %v2590, 0.0
        %v3171 = vmax.f32 %v2850, 0.0
        %v3172 = vmax.f32 %v3110, 0.0
        %v3173 = vmax.f32 %v2333, 0.0
        %v3174 = vmax.f32 %v2593, 0.0
        %v3175 = vmax.f32 %v2853, 0.0
        %v3176 = vmax.f32 %v3113, 0.0
        %v3177 = vmax.f32 %v2336, 0.0
        %v3178 = vmax.f32 %v2596, 0.0
        %v3179 = vmax.f32 %v2856, 0.0
        %v3180 = vmax.f32 %v3116, 0.0
        %v3181 = vmax.f32 %v2339, 0.0
        %v3182 = vmax.f32 %v2599, 0.0
        %v3183 = vmax.f32 %v2859, 0.0
        %v3184 = vmax.f32 %v3119, 0.0
        %v3185 = vld [vmem:[#allocation11] sm:$0xff]
        %v3186 = vld [vmem:[#allocation11 + $0x8] sm:$0xff]
        %v3187 = vld [vmem:[#allocation11 + $0x10] sm:$0xff]
        %v3188 = vld [vmem:[#allocation11 + $0x18] sm:$0xff]
        %v3189 = vld [vmem:[#allocation11 + $0x20] sm:$0xff]
        %v3190 = vld [vmem:[#allocation11 + $0x28] sm:$0xff]
        %v3191 = vld [vmem:[#allocation11 + $0x30] sm:$0xff]
        %v3192 = vld [vmem:[#allocation11 + $0x38] sm:$0xff]
        %v3193 = vld [vmem:[#allocation11 + $0x40] sm:$0xff]
        %v3194 = vld [vmem:[#allocation11 + $0x48] sm:$0xff]
        %v3195 = vld [vmem:[#allocation11 + $0x50] sm:$0xff]
        %v3196 = vld [vmem:[#allocation11 + $0x58] sm:$0xff]
        %v3197 = vld [vmem:[#allocation11 + $0x60] sm:$0xff]
        %v3198 = vld [vmem:[#allocation11 + $0x68] sm:$0xff]
        %v3199 = vld [vmem:[#allocation11 + $0x70] sm:$0xff]
        %v3200 = vld [vmem:[#allocation11 + $0x78] sm:$0xff]
        %v3201 = vld [vmem:[#allocation11 + $0x80] sm:$0xff]
        %v3202 = vld [vmem:[#allocation11 + $0x88] sm:$0xff]
        %v3203 = vld [vmem:[#allocation11 + $0x90] sm:$0xff]
        %v3204 = vld [vmem:[#allocation11 + $0x98] sm:$0xff]
        %v3205 = vld [vmem:[#allocation11 + $0xa0] sm:$0xff]
        %v3206 = vld [vmem:[#allocation11 + $0xa8] sm:$0xff]
        %v3207 = vld [vmem:[#allocation11 + $0xb0] sm:$0xff]
        %v3208 = vld [vmem:[#allocation11 + $0xb8] sm:$0xff]
        %v3209 = vld [vmem:[#allocation11 + $0xc0] sm:$0xff]
        %v3210 = vld [vmem:[#allocation11 + $0xc8] sm:$0xff]
        %v3211 = vld [vmem:[#allocation11 + $0xd0] sm:$0xff]
        %v3212 = vld [vmem:[#allocation11 + $0xd8] sm:$0xff]
        %v3213 = vld [vmem:[#allocation11 + $0xe0] sm:$0xff]
        %v3214 = vld [vmem:[#allocation11 + $0xe8] sm:$0xff]
        %v3215 = vld [vmem:[#allocation11 + $0xf0] sm:$0xff]
        %v3216 = vld [vmem:[#allocation11 + $0xf8] sm:$0xff]
        %v3217 = vld [vmem:[#allocation11 + $0x100] sm:$0xff]
        %v3218 = vld [vmem:[#allocation11 + $0x108] sm:$0xff]
        %v3219 = vld [vmem:[#allocation11 + $0x110] sm:$0xff]
        %v3220 = vld [vmem:[#allocation11 + $0x118] sm:$0xff]
        %v3221 = vld [vmem:[#allocation11 + $0x120] sm:$0xff]
        %v3222 = vld [vmem:[#allocation11 + $0x128] sm:$0xff]
        %v3223 = vld [vmem:[#allocation11 + $0x130] sm:$0xff]
        %v3224 = vld [vmem:[#allocation11 + $0x138] sm:$0xff]
        %v3225 = vld [vmem:[#allocation11 + $0x140] sm:$0xff]
        %v3226 = vld [vmem:[#allocation11 + $0x148] sm:$0xff]
        %v3227 = vld [vmem:[#allocation11 + $0x150] sm:$0xff]
        %v3228 = vld [vmem:[#allocation11 + $0x158] sm:$0xff]
        %v3229 = vld [vmem:[#allocation11 + $0x160] sm:$0xff]
        %v3230 = vld [vmem:[#allocation11 + $0x168] sm:$0xff]
        %v3231 = vld [vmem:[#allocation11 + $0x170] sm:$0xff]
        %v3232 = vld [vmem:[#allocation11 + $0x178] sm:$0xff]
        %v3233 = vld [vmem:[#allocation11 + $0x180] sm:$0xff]
        %v3234 = vld [vmem:[#allocation11 + $0x188] sm:$0xff]
        %v3235 = vld [vmem:[#allocation11 + $0x190] sm:$0xff]
        %v3236 = vld [vmem:[#allocation11 + $0x198] sm:$0xff]
        %v3237 = vld [vmem:[#allocation11 + $0x1a0] sm:$0xff]
        %v3238 = vld [vmem:[#allocation11 + $0x1a8] sm:$0xff]
        %v3239 = vld [vmem:[#allocation11 + $0x1b0] sm:$0xff]
        %v3240 = vld [vmem:[#allocation11 + $0x1b8] sm:$0xff]
        %v3241 = vld [vmem:[#allocation11 + $0x1c0] sm:$0xff]
        %v3242 = vld [vmem:[#allocation11 + $0x1c8] sm:$0xff]
        %v3243 = vld [vmem:[#allocation11 + $0x1d0] sm:$0xff]
        %v3244 = vld [vmem:[#allocation11 + $0x1d8] sm:$0xff]
        %v3245 = vld [vmem:[#allocation11 + $0x1e0] sm:$0xff]
        %v3246 = vld [vmem:[#allocation11 + $0x1e8] sm:$0xff]
        %v3247 = vld [vmem:[#allocation11 + $0x1f0] sm:$0xff]
        %v3248 = vld [vmem:[#allocation11 + $0x1f8] sm:$0xff]
        %v3249 = vld [vmem:[%s6] sm:$0x1]
        %v3251 = vperm.slane %v3249, 0
        %3253 = vmatpush.msra.mxu0 %v3200
        %3254 = vmatpush.msra.mxu0 %v3199
        %3255 = vmatpush.msra.mxu0 %v3198
        %3256 = vmatpush.msra.mxu0 %v3197
        %3257 = vmatpush.msra.mxu0 %v3196
        %3258 = vmatpush.msra.mxu0 %v3195
        %3259 = vmatpush.msra.mxu0 %v3194
        %3260 = vmatpush.msra.mxu0 %v3193
        %3261 = vmatpush.msra.mxu0 %v3192
        %3262 = vmatpush.msra.mxu0 %v3191
        %3263 = vmatpush.msra.mxu0 %v3190
        %3264 = vmatpush.msra.mxu0 %v3189
        %3265 = vmatpush.msra.mxu0 %v3188
        %3266 = vmatpush.msra.mxu0 %v3187
        %3267 = vmatpush.msra.mxu0 %v3186
        %3268 = vmatpush.msra.mxu0 %v3185
        %3269 = vmatmul.f32.gmra.mxu0 %v3121
        %v3270 = vpop.f32.mrf.mxu0
        %v3271 = vadd.f32 %v3251, %v3270
        %3272 = vmatmul.f32.gmra.mxu0 %v3125
        %v3273 = vpop.f32.mrf.mxu0
        %v3274 = vadd.f32 %v3251, %v3273
        %3275 = vmatmul.f32.gmra.mxu0 %v3129
        %v3276 = vpop.f32.mrf.mxu0
        %v3277 = vadd.f32 %v3251, %v3276
        %3278 = vmatmul.f32.gmra.mxu0 %v3133
        %v3279 = vpop.f32.mrf.mxu0
        %v3280 = vadd.f32 %v3251, %v3279
        %3281 = vmatmul.f32.gmra.mxu0 %v3137
        %v3282 = vpop.f32.mrf.mxu0
        %v3283 = vadd.f32 %v3251, %v3282
        %3284 = vmatmul.f32.gmra.mxu0 %v3141
        %v3285 = vpop.f32.mrf.mxu0
        %v3286 = vadd.f32 %v3251, %v3285
        %3287 = vmatmul.f32.gmra.mxu0 %v3145
        %v3288 = vpop.f32.mrf.mxu0
        %v3289 = vadd.f32 %v3251, %v3288
        %3290 = vmatmul.f32.gmra.mxu0 %v3149
        %v3291 = vpop.f32.mrf.mxu0
        %v3292 = vadd.f32 %v3251, %v3291
        %3293 = vmatmul.f32.gmra.mxu0 %v3153
        %v3294 = vpop.f32.mrf.mxu0
        %v3295 = vadd.f32 %v3251, %v3294
        %3296 = vmatmul.f32.gmra.mxu0 %v3157
        %v3297 = vpop.f32.mrf.mxu0
        %v3298 = vadd.f32 %v3251, %v3297
        %3299 = vmatmul.f32.gmra.mxu0 %v3161
        %v3300 = vpop.f32.mrf.mxu0
        %v3301 = vadd.f32 %v3251, %v3300
        %3302 = vmatmul.f32.gmra.mxu0 %v3165
        %v3303 = vpop.f32.mrf.mxu0
        %v3304 = vadd.f32 %v3251, %v3303
        %3305 = vmatmul.f32.gmra.mxu0 %v3169
        %v3306 = vpop.f32.mrf.mxu0
        %v3307 = vadd.f32 %v3251, %v3306
        %3308 = vmatmul.f32.gmra.mxu0 %v3173
        %v3309 = vpop.f32.mrf.mxu0
        %v3310 = vadd.f32 %v3251, %v3309
        %3311 = vmatmul.f32.gmra.mxu0 %v3177
        %v3312 = vpop.f32.mrf.mxu0
        %v3313 = vadd.f32 %v3251, %v3312
        %3314 = vmatmul.f32.gmra.mxu0 %v3181
        %v3315 = vpop.f32.mrf.mxu0
        %v3316 = vadd.f32 %v3251, %v3315
        %3317 = vdwg.mxu0
        %3318 = vmatpush.msra.mxu0 %v3216
        %3319 = vmatpush.msra.mxu0 %v3215
        %3320 = vmatpush.msra.mxu0 %v3214
        %3321 = vmatpush.msra.mxu0 %v3213
        %3322 = vmatpush.msra.mxu0 %v3212
        %3323 = vmatpush.msra.mxu0 %v3211
        %3324 = vmatpush.msra.mxu0 %v3210
        %3325 = vmatpush.msra.mxu0 %v3209
        %3326 = vmatpush.msra.mxu0 %v3208
        %3327 = vmatpush.msra.mxu0 %v3207
        %3328 = vmatpush.msra.mxu0 %v3206
        %3329 = vmatpush.msra.mxu0 %v3205
        %3330 = vmatpush.msra.mxu0 %v3204
        %3331 = vmatpush.msra.mxu0 %v3203
        %3332 = vmatpush.msra.mxu0 %v3202
        %3333 = vmatpush.msra.mxu0 %v3201
        %3334 = vmatmul.f32.gmra.mxu0 %v3122
        %v3335 = vpop.f32.mrf.mxu0
        %v3336 = vadd.f32 %v3271, %v3335
        %3337 = vmatmul.f32.gmra.mxu0 %v3126
        %v3338 = vpop.f32.mrf.mxu0
        %v3339 = vadd.f32 %v3274, %v3338
        %3340 = vmatmul.f32.gmra.mxu0 %v3130
        %v3341 = vpop.f32.mrf.mxu0
        %v3342 = vadd.f32 %v3277, %v3341
        %3343 = vmatmul.f32.gmra.mxu0 %v3134
        %v3344 = vpop.f32.mrf.mxu0
        %v3345 = vadd.f32 %v3280, %v3344
        %3346 = vmatmul.f32.gmra.mxu0 %v3138
        %v3347 = vpop.f32.mrf.mxu0
        %v3348 = vadd.f32 %v3283, %v3347
        %3349 = vmatmul.f32.gmra.mxu0 %v3142
        %v3350 = vpop.f32.mrf.mxu0
        %v3351 = vadd.f32 %v3286, %v3350
        %3352 = vmatmul.f32.gmra.mxu0 %v3146
        %v3353 = vpop.f32.mrf.mxu0
        %v3354 = vadd.f32 %v3289, %v3353
        %3355 = vmatmul.f32.gmra.mxu0 %v3150
        %v3356 = vpop.f32.mrf.mxu0
        %v3357 = vadd.f32 %v3292, %v3356
        %3358 = vmatmul.f32.gmra.mxu0 %v3154
        %v3359 = vpop.f32.mrf.mxu0
        %v3360 = vadd.f32 %v3295, %v3359
        %3361 = vmatmul.f32.gmra.mxu0 %v3158
        %v3362 = vpop.f32.mrf.mxu0
        %v3363 = vadd.f32 %v3298, %v3362
        %3364 = vmatmul.f32.gmra.mxu0 %v3162
        %v3365 = vpop.f32.mrf.mxu0
        %v3366 = vadd.f32 %v3301, %v3365
        %3367 = vmatmul.f32.gmra.mxu0 %v3166
        %v3368 = vpop.f32.mrf.mxu0
        %v3369 = vadd.f32 %v3304, %v3368
        %3370 = vmatmul.f32.gmra.mxu0 %v3170
        %v3371 = vpop.f32.mrf.mxu0
        %v3372 = vadd.f32 %v3307, %v3371
        %3373 = vmatmul.f32.gmra.mxu0 %v3174
        %v3374 = vpop.f32.mrf.mxu0
        %v3375 = vadd.f32 %v3310, %v3374
        %3376 = vmatmul.f32.gmra.mxu0 %v3178
        %v3377 = vpop.f32.mrf.mxu0
        %v3378 = vadd.f32 %v3313, %v3377
        %3379 = vmatmul.f32.gmra.mxu0 %v3182
        %v3380 = vpop.f32.mrf.mxu0
        %v3381 = vadd.f32 %v3316, %v3380
        %3382 = vdwg.mxu0
        %3383 = vmatpush.msra.mxu0 %v3232
        %3384 = vmatpush.msra.mxu0 %v3231
        %3385 = vmatpush.msra.mxu0 %v3230
        %3386 = vmatpush.msra.mxu0 %v3229
        %3387 = vmatpush.msra.mxu0 %v3228
        %3388 = vmatpush.msra.mxu0 %v3227
        %3389 = vmatpush.msra.mxu0 %v3226
        %3390 = vmatpush.msra.mxu0 %v3225
        %3391 = vmatpush.msra.mxu0 %v3224
        %3392 = vmatpush.msra.mxu0 %v3223
        %3393 = vmatpush.msra.mxu0 %v3222
        %3394 = vmatpush.msra.mxu0 %v3221
        %3395 = vmatpush.msra.mxu0 %v3220
        %3396 = vmatpush.msra.mxu0 %v3219
        %3397 = vmatpush.msra.mxu0 %v3218
        %3398 = vmatpush.msra.mxu0 %v3217
        %3399 = vmatmul.f32.gmra.mxu0 %v3123
        %v3400 = vpop.f32.mrf.mxu0
        %v3401 = vadd.f32 %v3336, %v3400
        %3402 = vmatmul.f32.gmra.mxu0 %v3127
        %v3403 = vpop.f32.mrf.mxu0
        %v3404 = vadd.f32 %v3339, %v3403
        %3405 = vmatmul.f32.gmra.mxu0 %v3131
        %v3406 = vpop.f32.mrf.mxu0
        %v3407 = vadd.f32 %v3342, %v3406
        %3408 = vmatmul.f32.gmra.mxu0 %v3135
        %v3409 = vpop.f32.mrf.mxu0
        %v3410 = vadd.f32 %v3345, %v3409
        %3411 = vmatmul.f32.gmra.mxu0 %v3139
        %v3412 = vpop.f32.mrf.mxu0
        %v3413 = vadd.f32 %v3348, %v3412
        %3414 = vmatmul.f32.gmra.mxu0 %v3143
        %v3415 = vpop.f32.mrf.mxu0
        %v3416 = vadd.f32 %v3351, %v3415
        %3417 = vmatmul.f32.gmra.mxu0 %v3147
        %v3418 = vpop.f32.mrf.mxu0
        %v3419 = vadd.f32 %v3354, %v3418
        %3420 = vmatmul.f32.gmra.mxu0 %v3151
        %v3421 = vpop.f32.mrf.mxu0
        %v3422 = vadd.f32 %v3357, %v3421
        %3423 = vmatmul.f32.gmra.mxu0 %v3155
        %v3424 = vpop.f32.mrf.mxu0
        %v3425 = vadd.f32 %v3360, %v3424
        %3426 = vmatmul.f32.gmra.mxu0 %v3159
        %v3427 = vpop.f32.mrf.mxu0
        %v3428 = vadd.f32 %v3363, %v3427
        %3429 = vmatmul.f32.gmra.mxu0 %v3163
        %v3430 = vpop.f32.mrf.mxu0
        %v3431 = vadd.f32 %v3366, %v3430
        %3432 = vmatmul.f32.gmra.mxu0 %v3167
        %v3433 = vpop.f32.mrf.mxu0
        %v3434 = vadd.f32 %v3369, %v3433
        %3435 = vmatmul.f32.gmra.mxu0 %v3171
        %v3436 = vpop.f32.mrf.mxu0
        %v3437 = vadd.f32 %v3372, %v3436
        %3438 = vmatmul.f32.gmra.mxu0 %v3175
        %v3439 = vpop.f32.mrf.mxu0
        %v3440 = vadd.f32 %v3375, %v3439
        %3441 = vmatmul.f32.gmra.mxu0 %v3179
        %v3442 = vpop.f32.mrf.mxu0
        %v3443 = vadd.f32 %v3378, %v3442
        %3444 = vmatmul.f32.gmra.mxu0 %v3183
        %v3445 = vpop.f32.mrf.mxu0
        %v3446 = vadd.f32 %v3381, %v3445
        %3447 = vdwg.mxu0
        %3448 = vmatpush.msra.mxu0 %v3248
        %3449 = vmatpush.msra.mxu0 %v3247
        %3450 = vmatpush.msra.mxu0 %v3246
        %3451 = vmatpush.msra.mxu0 %v3245
        %3452 = vmatpush.msra.mxu0 %v3244
        %3453 = vmatpush.msra.mxu0 %v3243
        %3454 = vmatpush.msra.mxu0 %v3242
        %3455 = vmatpush.msra.mxu0 %v3241
        %3456 = vmatpush.msra.mxu0 %v3240
        %3457 = vmatpush.msra.mxu0 %v3239
        %3458 = vmatpush.msra.mxu0 %v3238
        %3459 = vmatpush.msra.mxu0 %v3237
        %3460 = vmatpush.msra.mxu0 %v3236
        %3461 = vmatpush.msra.mxu0 %v3235
        %3462 = vmatpush.msra.mxu0 %v3234
        %3463 = vmatpush.msra.mxu0 %v3233
        %3464 = vmatmul.f32.gmra.mxu0 %v3124
        %v3465 = vpop.f32.mrf.mxu0
        %v3466 = vadd.f32 %v3401, %v3465
        %3467 = vmatmul.f32.gmra.mxu0 %v3128
        %v3468 = vpop.f32.mrf.mxu0
        %v3469 = vadd.f32 %v3404, %v3468
        %3470 = vmatmul.f32.gmra.mxu0 %v3132
        %v3471 = vpop.f32.mrf.mxu0
        %v3472 = vadd.f32 %v3407, %v3471
        %3473 = vmatmul.f32.gmra.mxu0 %v3136
        %v3474 = vpop.f32.mrf.mxu0
        %v3475 = vadd.f32 %v3410, %v3474
        %3476 = vmatmul.f32.gmra.mxu0 %v3140
        %v3477 = vpop.f32.mrf.mxu0
        %v3478 = vadd.f32 %v3413, %v3477
        %3479 = vmatmul.f32.gmra.mxu0 %v3144
        %v3480 = vpop.f32.mrf.mxu0
        %v3481 = vadd.f32 %v3416, %v3480
        %3482 = vmatmul.f32.gmra.mxu0 %v3148
        %v3483 = vpop.f32.mrf.mxu0
        %v3484 = vadd.f32 %v3419, %v3483
        %3485 = vmatmul.f32.gmra.mxu0 %v3152
        %v3486 = vpop.f32.mrf.mxu0
        %v3487 = vadd.f32 %v3422, %v3486
        %3488 = vmatmul.f32.gmra.mxu0 %v3156
        %v3489 = vpop.f32.mrf.mxu0
        %v3490 = vadd.f32 %v3425, %v3489
        %3491 = vmatmul.f32.gmra.mxu0 %v3160
        %v3492 = vpop.f32.mrf.mxu0
        %v3493 = vadd.f32 %v3428, %v3492
        %3494 = vmatmul.f32.gmra.mxu0 %v3164
        %v3495 = vpop.f32.mrf.mxu0
        %v3496 = vadd.f32 %v3431, %v3495
        %3497 = vmatmul.f32.gmra.mxu0 %v3168
        %v3498 = vpop.f32.mrf.mxu0
        %v3499 = vadd.f32 %v3434, %v3498
        %3500 = vmatmul.f32.gmra.mxu0 %v3172
        %v3501 = vpop.f32.mrf.mxu0
        %v3502 = vadd.f32 %v3437, %v3501
        %3503 = vmatmul.f32.gmra.mxu0 %v3176
        %v3504 = vpop.f32.mrf.mxu0
        %v3505 = vadd.f32 %v3440, %v3504
        %3506 = vmatmul.f32.gmra.mxu0 %v3180
        %v3507 = vpop.f32.mrf.mxu0
        %v3508 = vadd.f32 %v3443, %v3507
        %3509 = vmatmul.f32.gmra.mxu0 %v3184
        %v3510 = vpop.f32.mrf.mxu0
        %v3511 = vadd.f32 %v3446, %v3510
        %3512 = vdwg.mxu0
        %3513 = vst [vmem:[%s378] sm:$0xff] %v3466
        %3514 = vst [vmem:[%s378 + $0x8] sm:$0xff] %v3469
        %3515 = vst [vmem:[%s378 + $0x10] sm:$0xff] %v3472
        %3516 = vst [vmem:[%s378 + $0x18] sm:$0xff] %v3475
        %3517 = vst [vmem:[%s378 + $0x20] sm:$0xff] %v3478
        %3518 = vst [vmem:[%s378 + $0x28] sm:$0xff] %v3481
        %3519 = vst [vmem:[%s378 + $0x30] sm:$0xff] %v3484
        %3520 = vst [vmem:[%s378 + $0x38] sm:$0xff] %v3487
        %3521 = vst [vmem:[%s378 + $0x40] sm:$0xff] %v3490
        %3522 = vst [vmem:[%s378 + $0x48] sm:$0xff] %v3493
        %3523 = vst [vmem:[%s378 + $0x50] sm:$0xff] %v3496
        %3524 = vst [vmem:[%s378 + $0x58] sm:$0xff] %v3499
        %3525 = vst [vmem:[%s378 + $0x60] sm:$0xff] %v3502
        %3526 = vst [vmem:[%s378 + $0x68] sm:$0xff] %v3505
        %3527 = vst [vmem:[%s378 + $0x70] sm:$0xff] %v3508
        %3528 = vst [vmem:[%s378 + $0x78] sm:$0xff] %v3511
        %s3529 = sand.u32 %s187, 1
        %s3530 = scalar_lea.sflag [#allocation4], %s3529
        %s3531 = sand.u32 %s187, 1
        %s3532 = smul.addr %s3531, 128
        %s3533 = scalar_lea.vmem [#allocation13], %s3532
        // Predicated region
        $region73: #{tpu_custom_call.1} parent=47 // pred_check
          %p3534 = pneg %p197
        $region74: #{tpu_custom_call.1} parent=47 // pred_check_branch
          %3536 = sbr.rel (%p3534) target = $region76
        $region75: #{tpu_custom_call.1} parent=47 // pred_region
          %s3537 = smul.u32 16, %s27
          %3539 = vsyncadd %s3530, 0
          %s3540 = smul.addr %s3537, 8
          %s3541 = scalar_lea.hbm %s7, %s3540
          %s3542 = sshll.u32 %s3533, 4
          %s3543 = int_to_ptr.vmem [resolvable:$true] %s3542
          %s3544 = sshll.u32 %s3541, 4
          %s3545 = int_to_ptr.hbm [resolvable:$true] %s3544
          %3550 = dma.vmem_to_hbm [thread:$0]  %s3543, 2048, %s3545, %s3530, 128, 128, 8
        $region76: #{tpu_custom_call.1} parent=47 // pred_fallthru
          _
      $region48: #{tpu_custom_call.1} parent=5 // pred_fallthru
        _
      %p3551 = scmp.le.s32.totalorder 2, %s22
      // Predicated region
      $region77: #{tpu_custom_call.1} parent=5 // pred_check
        %p3552 = pneg %p3551
      $region78: #{tpu_custom_call.1} parent=5 // pred_check_branch
        %3554 = sbr.rel (%p3552) target = $region80
      $region79: #{tpu_custom_call.1} parent=5 // pred_region
        %s3555 = ssub.s32 %s22, 2
        // Predicated region
        $region81: #{tpu_custom_call.1} parent=79 // pred_check
          %p3556 = pneg %p203
        $region82: #{tpu_custom_call.1} parent=79 // pred_check_branch
          %3558 = sbr.rel (%p3556) target = $region84
        $region83: #{tpu_custom_call.1} parent=79 // pred_region
          %s3559 = sand.u32 %s188, 1
          %s3560 = scalar_lea.sflag [#allocation4], %s3559
          %s3561 = sand.u32 %s188, 1
          %s3562 = smul.addr %s3561, 128
          %s3563 = scalar_lea.vmem [#allocation13], %s3562
          %3565 = dma.done %s3560, 2048
        $region84: #{tpu_custom_call.1} parent=79 // pred_fallthru
          _
      $region80: #{tpu_custom_call.1} parent=5 // pred_fallthru
        _
    $region6: #{tpu_custom_call.1} parent=1 // loop_footer
      %s26 = sadd.s32 1, %s22
    $region7: #{tpu_custom_call.1} parent=1 // loop_footer_branch
      %21 = sbr.rel target = $region3
    $region8: #{tpu_custom_call.1} parent=1 // loop_exit
      _
    %3566 = vsyncpa [#allocation3], 1
    %s3567 = scalar_lea.sflag [#allocation3], 1
    %3568 = vsyncpa %s3567, 1
    %3569 = vsyncpa [#allocation6], 1
    %3570 = vsyncpa [#allocation9], 1
    %3571 = vsyncpa [#allocation12], 1
    %3572 = vsyncpa [#allocation4], 1
    %s3573 = scalar_lea.sflag [#allocation4], 1
    %3574 = vsyncpa %s3573, 1

</llo_original>
